<compile_context>
chip_gen: v7x
topology: tpu7x:2x2x1
jax: 0.10.0
libtpu: 0.0.40
codegen_flags: <defaults>
</compile_context>

<pallas_src>
import jax
import jax.numpy as jnp
from jax import lax
from jax.experimental import pallas as pl
from jax.experimental.pallas import tpu as pltpu


# ----------------------------------------------------------------------------
# Time-parallel, row-tiled linear kernels (flattened rows = seq_pad * batch)
# ----------------------------------------------------------------------------
def _linear1_kernel(a_ref, w_ref, b_ref, o_ref):
    o_ref[...] = (jnp.dot(a_ref[...], w_ref[...], preferred_element_type=jnp.float32)
                  + b_ref[...])


def _linear2_kernel(a_ref, b_ref, wa_ref, wb_ref, bias_ref, o_ref):
    # split-concat:  cat(a, b) @ W  ==  a @ Wa + b @ Wb
    o_ref[...] = (jnp.dot(a_ref[...], wa_ref[...], preferred_element_type=jnp.float32)
                  + jnp.dot(b_ref[...], wb_ref[...], preferred_element_type=jnp.float32)
                  + bias_ref[...])


def linear_rows(a, w, b, row_tile):
    n, din = a.shape
    dout = w.shape[-1]
    return pl.pallas_call(
        _linear1_kernel,
        out_shape=jax.ShapeDtypeStruct((n, dout), jnp.float32),
        grid_spec=pltpu.PrefetchScalarGridSpec(
            num_scalar_prefetch=0,
            grid=(n // row_tile,),
            in_specs=[pl.BlockSpec((row_tile, din), lambda i: (i, 0)),
                      pl.BlockSpec((din, dout), lambda i: (0, 0)),
                      pl.BlockSpec((1, dout), lambda i: (0, 0))],
            out_specs=pl.BlockSpec((row_tile, dout), lambda i: (i, 0)),
        ),
        compiler_params=pltpu.CompilerParams(dimension_semantics=("parallel",)),
    )(a, w, b)


def linear2_rows(a, b, wa, wb, bias, row_tile):
    n, da = a.shape
    db = b.shape[-1]
    dout = wa.shape[-1]
    return pl.pallas_call(
        _linear2_kernel,
        out_shape=jax.ShapeDtypeStruct((n, dout), jnp.float32),
        grid_spec=pltpu.PrefetchScalarGridSpec(
            num_scalar_prefetch=0,
            grid=(n // row_tile,),
            in_specs=[pl.BlockSpec((row_tile, da), lambda i: (i, 0)),
                      pl.BlockSpec((row_tile, db), lambda i: (i, 0)),
                      pl.BlockSpec((da, dout), lambda i: (0, 0)),
                      pl.BlockSpec((db, dout), lambda i: (0, 0)),
                      pl.BlockSpec((1, dout), lambda i: (0, 0))],
            out_specs=pl.BlockSpec((row_tile, dout), lambda i: (i, 0)),
        ),
        compiler_params=pltpu.CompilerParams(dimension_semantics=("parallel",)),
    )(a, b, wa, wb, bias)


# ----------------------------------------------------------------------------
# Time-chunked LSTM recurrence (gates precomputed; only h @ W_hh per step)
# PyTorch gate order (i, f, g, o):  c' = f*c + i*g ; h = o*tanh(c')
# reverse=True processes time backwards (backward rnn_g) without any flips.
# Padded steps (t >= seq_len) are masked so they never perturb the carried state
# (matters for reverse, where padded steps are processed first).
# ----------------------------------------------------------------------------
def _make_lstm_kernel(t_chunk, seq_len, hidden, reverse):
    H = hidden

    def kernel(gates_ref, whh_ref, h_out_ref, h_scr, c_scr):
        c = pl.program_id(0)

        @pl.when(c == 0)
        def _():
            h_scr[...] = jnp.zeros_like(h_scr)
            c_scr[...] = jnp.zeros_like(c_scr)

        n_chunks = pl.num_programs(0)
        base = (n_chunks - 1 - c) * t_chunk if reverse else c * t_chunk

        def body(i, carry):
            li = (t_chunk - 1 - i) if reverse else i
            gates = gates_ref[li] + jnp.dot(h_scr[...], whh_ref[...],
                                            preferred_element_type=jnp.float32)
            s_if = jax.nn.sigmoid(gates[:, :2 * H])          # i and f in one EUP pass
            gate_i = s_if[:, :H]
            gate_f = s_if[:, H:]
            gate_g = jnp.tanh(gates[:, 2 * H:3 * H])
            gate_o = jax.nn.sigmoid(gates[:, 3 * H:])
            c_new = gate_f * c_scr[...] + gate_i * gate_g
            h_new = gate_o * jnp.tanh(c_new)
            if reverse:
                m = ((base + li) < seq_len).astype(jnp.float32)
                c_scr[...] = m * c_new + (1.0 - m) * c_scr[...]
                h_scr[...] = m * h_new + (1.0 - m) * h_scr[...]
            else:
                c_scr[...] = c_new
                h_scr[...] = h_new
            h_out_ref[li] = h_scr[...]
            return carry

        lax.fori_loop(0, t_chunk, body, 0)

    return kernel


def lstm_recurrence(gates, whh, *, t_chunk, seq_len, reverse):
    seq_pad, B, g4 = gates.shape
    H = whh.shape[0]
    n_chunks = seq_pad // t_chunk
    if reverse:
        io_map = lambda c: (n_chunks - 1 - c, 0, 0)
    else:
        io_map = lambda c: (c, 0, 0)
    kernel = _make_lstm_kernel(t_chunk, seq_len, H, reverse)
    return pl.pallas_call(
        kernel,
        out_shape=jax.ShapeDtypeStruct((seq_pad, B, H), jnp.float32),
        grid_spec=pltpu.PrefetchScalarGridSpec(
            num_scalar_prefetch=0,
            grid=(n_chunks,),
            in_specs=[pl.BlockSpec((t_chunk, B, g4), io_map),
                      pl.BlockSpec((H, g4), lambda c: (0, 0))],
            out_specs=pl.BlockSpec((t_chunk, B, H), io_map),
            scratch_shapes=[pltpu.VMEM((B, H), jnp.float32),
                            pltpu.VMEM((B, H), jnp.float32)],
        ),
        compiler_params=pltpu.CompilerParams(dimension_semantics=("arbitrary",)),
    )(gates, whh)


# ----------------------------------------------------------------------------
# Time-chunked inference loop: h1_pre (= g @ W1g + b1, hoisted) is given;
# per step only the z-dependent part runs:  h1 = tanh(h1_pre + z @ W1z), ...
# Padded steps trail the real ones (forward direction), so no masking needed.
# ----------------------------------------------------------------------------
def _make_inference_kernel(t_chunk):
    def kernel(h1pre_ref, eps_ref, w1z_ref, w2_ref, b2_ref,
               wm_ref, bm_ref, wv_ref, bv_ref,
               z_ref, zm_ref, zl_ref, z_scr):
        @pl.when(pl.program_id(0) == 0)
        def _():
            z_scr[...] = jnp.zeros_like(z_scr)

        def body(i, carry):
            h1 = jnp.tanh(h1pre_ref[i]
                          + jnp.dot(z_scr[...], w1z_ref[...],
                                    preferred_element_type=jnp.float32))
            h2 = jnp.tanh(jnp.dot(h1, w2_ref[...],
                                  preferred_element_type=jnp.float32) + b2_ref[...])
            mean = jnp.dot(h2, wm_ref[...], preferred_element_type=jnp.float32) + bm_ref[...]
            logvar = jnp.dot(h2, wv_ref[...], preferred_element_type=jnp.float32) + bv_ref[...]
            z_t = mean + eps_ref[i] * jnp.exp(0.5 * logvar)   # torch.addcmul(mean, eps, std)
            z_scr[...] = z_t
            zm_ref[i] = mean
            zl_ref[i] = logvar
            z_ref[i] = z_t
            return carry

        lax.fori_loop(0, t_chunk, body, 0)

    return kernel


def inference_recurrence(h1_pre, eps, w1z, w2, b2, wm, bm, wv, bv, *, t_chunk):
    seq_pad, B, dense = h1_pre.shape
    Z = wm.shape[-1]
    n_chunks = seq_pad // t_chunk
    io3 = lambda d: pl.BlockSpec((t_chunk, B, d), lambda c: (c, 0, 0))
    full2 = lambda arr: pl.BlockSpec(arr.shape, lambda c: (0, 0))
    return pl.pallas_call(
        _make_inference_kernel(t_chunk),
        out_shape=(jax.ShapeDtypeStruct((seq_pad, B, Z), jnp.float32),) * 3,
        grid_spec=pltpu.PrefetchScalarGridSpec(
            num_scalar_prefetch=0,
            grid=(n_chunks,),
            in_specs=[io3(dense), io3(Z),
                      full2(w1z), full2(w2), full2(b2),
                      full2(wm), full2(bm), full2(wv), full2(bv)],
            out_specs=[io3(Z)] * 3,
            scratch_shapes=[pltpu.VMEM((B, Z), jnp.float32)],
        ),
        compiler_params=pltpu.CompilerParams(dimension_semantics=("arbitrary",)),
    )(h1_pre, eps, w1z, w2, b2, wm, bm, wv, bv)


# ----------------------------------------------------------------------------
# Fused, time-parallel generation kernel:
#   generation_z : prior_mean / prior_logvar from cat(h, z_tm1)
#   generation_x : y = gen_logvar(mlp_hz_x(cat(h, z, labels)))   (gen_mean dropped)
# Operates on flattened (seq_pad*B, D) rows, tiled by row_tile, so h is read once.
# ----------------------------------------------------------------------------
def _generation_kernel(h_ref, ztm1_ref, z_ref, lab_ref,
                       zz_w1h_ref, zz_w1z_ref, zz_b1_ref, zz_w2_ref, zz_b2_ref,
                       pm_w_ref, pm_b_ref, pv_w_ref, pv_b_ref,
                       zx_w1h_ref, zx_w1z_ref, zx_w1l_ref, zx_b1_ref,
                       zx_w2_ref, zx_b2_ref, glv_w_ref, glv_b_ref,
                       pmean_ref, plogvar_ref, y_ref):
    h = h_ref[...]

    # ---- generation_z (prior) ----
    a1 = jnp.tanh(jnp.dot(h, zz_w1h_ref[...], preferred_element_type=jnp.float32)
                  + jnp.dot(ztm1_ref[...], zz_w1z_ref[...], preferred_element_type=jnp.float32)
                  + zz_b1_ref[...])
    a2 = jnp.tanh(jnp.dot(a1, zz_w2_ref[...], preferred_element_type=jnp.float32)
                  + zz_b2_ref[...])
    pmean_ref[...] = (jnp.dot(a2, pm_w_ref[...], preferred_element_type=jnp.float32)
                      + pm_b_ref[...])
    plogvar_ref[...] = (jnp.dot(a2, pv_w_ref[...], preferred_element_type=jnp.float32)
                        + pv_b_ref[...])

    # ---- generation_x (only logvar head used as y) ----
    # labels is a single column: labels @ W1l == broadcast multiply (R,1)*(1,dense)
    x1 = jnp.tanh(jnp.dot(h, zx_w1h_ref[...], preferred_element_type=jnp.float32)
                  + jnp.dot(z_ref[...], zx_w1z_ref[...], preferred_element_type=jnp.float32)
                  + lab_ref[...] * zx_w1l_ref[...]
                  + zx_b1_ref[...])
    x2 = jnp.tanh(jnp.dot(x1, zx_w2_ref[...], preferred_element_type=jnp.float32)
                  + zx_b2_ref[...])
    y_ref[...] = (jnp.dot(x2, glv_w_ref[...], preferred_element_type=jnp.float32)
                  + glv_b_ref[...])


def generation_fused(h_f, ztm1_f, z_f, lab_f, p, x_dim, row_tile):
    n, dh = h_f.shape
    Z = z_f.shape[-1]
    weights = [p["hzz_w1h"], p["hzz_w1z"], p["hzz_b1"], p["hzz_w2"], p["hzz_b2"],
               p["prior_mean_w"], p["prior_mean_b"], p["prior_logvar_w"], p["prior_logvar_b"],
               p["hzx_w1h"], p["hzx_w1z"], p["hzx_w1l"], p["hzx_b1"],
               p["hzx_w2"], p["hzx_b2"], p["gen_logvar_w"], p["gen_logvar_b"]]
    row = lambda d: pl.BlockSpec((row_tile, d), lambda i: (i, 0))
    full2 = lambda arr: pl.BlockSpec(arr.shape, lambda i: (0, 0))
    return pl.pallas_call(
        _generation_kernel,
        out_shape=(jax.ShapeDtypeStruct((n, Z), jnp.float32),
                   jax.ShapeDtypeStruct((n, Z), jnp.float32),
                   jax.ShapeDtypeStruct((n, x_dim), jnp.float32)),
        grid_spec=pltpu.PrefetchScalarGridSpec(
            num_scalar_prefetch=0,
            grid=(n // row_tile,),
            in_specs=[row(dh), row(Z), row(Z), row(1)] + [full2(w) for w in weights],
            out_specs=[row(Z), row(Z), row(x_dim)],
        ),
        compiler_params=pltpu.CompilerParams(dimension_semantics=("parallel",)),
    )(h_f, ztm1_f, z_f, lab_f, *weights)


# ----------------------------------------------------------------------------
# Parameter initialization (deterministic, synthetic).  Concatenated first-layer
# weights are stored already split (h-part / x-part / z-part / label-part).
# ----------------------------------------------------------------------------
def init_srnn_params(key, x_dim, z_dim=16, dim_rnn_h=128, dim_rnn_g=128, dense=128):
    scale = 0.1

    def lin(k, din, dout):
        kw, kb = jax.random.split(k)
        return (scale * jax.random.normal(kw, (din, dout), jnp.float32),
                scale * jax.random.normal(kb, (1, dout), jnp.float32))

    keys = iter(jax.random.split(key, 40))
    p = {}
    # rnn_h : LSTM(x_dim -> dim_rnn_h)  (dense_x_h=[] -> Identity MLP before it)
    p["h_wih"], bih = lin(next(keys), x_dim, 4 * dim_rnn_h)
    p["h_whh"], bhh = lin(next(keys), dim_rnn_h, 4 * dim_rnn_h)
    p["h_b"] = bih + bhh
    # rnn_g : LSTM(dim_rnn_h + x_dim -> dim_rnn_g), W_ih split (h-part, x-part)
    p["g_wih_h"], bih = lin(next(keys), dim_rnn_h, 4 * dim_rnn_g)
    p["g_wih_x"], _ = lin(next(keys), x_dim, 4 * dim_rnn_g)
    p["g_whh"], bhh = lin(next(keys), dim_rnn_g, 4 * dim_rnn_g)
    p["g_b"] = bih + bhh
    # mlp_gz_z + inf heads
    p["gz_w1g"], p["gz_b1"] = lin(next(keys), dim_rnn_g, dense)
    p["gz_w1z"], _ = lin(next(keys), z_dim, dense)
    p["gz_w2"], p["gz_b2"] = lin(next(keys), dense, dense)
    p["inf_mean_w"], p["inf_mean_b"] = lin(next(keys), dense, z_dim)
    p["inf_logvar_w"], p["inf_logvar_b"] = lin(next(keys), dense, z_dim)
    # mlp_hz_z + prior heads
    p["hzz_w1h"], p["hzz_b1"] = lin(next(keys), dim_rnn_h, dense)
    p["hzz_w1z"], _ = lin(next(keys), z_dim, dense)
    p["hzz_w2"], p["hzz_b2"] = lin(next(keys), dense, dense)
    p["prior_mean_w"], p["prior_mean_b"] = lin(next(keys), dense, z_dim)
    p["prior_logvar_w"], p["prior_logvar_b"] = lin(next(keys), dense, z_dim)
    # mlp_hz_x + gen_logvar head  (first layer split: h / z / label column)
    p["hzx_w1h"], p["hzx_b1"] = lin(next(keys), dim_rnn_h, dense)
    p["hzx_w1z"], _ = lin(next(keys), z_dim, dense)
    p["hzx_w1l"], _ = lin(next(keys), 1, dense)
    p["hzx_w2"], p["hzx_b2"] = lin(next(keys), dense, dense)
    p["gen_logvar_w"], p["gen_logvar_b"] = lin(next(keys), dense, x_dim)
    return p


def _pick_chunk(seq):
    for t in (64, 32, 16, 8):
        if seq >= t:
            return t
    return max(seq, 1)


# ----------------------------------------------------------------------------
# Forward pass (glue in plain JAX; all matmul / recurrent work in Pallas kernels)
# ----------------------------------------------------------------------------
def srnn_forward(params, x_bdt, labels_bdt, eps, beta=1.0):
    p = params
    # x: [batch, x_dim, seq] -> time-major [seq, batch, x_dim]  (= permute(-1,0,1))
    x = jnp.transpose(x_bdt, (2, 0, 1)).astype(jnp.float32)
    labels = jnp.transpose(labels_bdt, (2, 0, 1)).astype(jnp.float32)
    seq, B, x_dim = x.shape

    t_chunk = _pick_chunk(seq)
    n_chunks = -(-seq // t_chunk)
    seq_pad = n_chunks * t_chunk
    pad = seq_pad - seq
    row_tile = t_chunk * B          # divides seq_pad*B; multiple of 8 (or == full N)
    N = seq_pad * B

    x_p = jnp.pad(x, ((0, pad), (0, 0), (0, 0)))
    labels_p = jnp.pad(labels, ((0, pad), (0, 0), (0, 0)))
    eps_p = jnp.pad(eps, ((0, pad), (0, 0), (0, 0)))
    x_tm1 = jnp.pad(x_p[:-1], ((1, 0), (0, 0), (0, 0)))     # cat(x_0, x[:-1])

    flat = lambda a: a.reshape(N, a.shape[-1])               # free reshape (row-major)
    unflat = lambda a: a.reshape(seq_pad, B, a.shape[-1])

    # deterministic_h: hoisted input projection + chunked forward LSTM
    gates_h = linear_rows(flat(x_tm1), p["h_wih"], p["h_b"], row_tile)
    h = lstm_recurrence(unflat(gates_h), p["h_whh"],
                        t_chunk=t_chunk, seq_len=seq, reverse=False)

    # inference path: split-concat projection for cat(h, x), chunked backward LSTM
    gates_g = linear2_rows(flat(h), flat(x_p), p["g_wih_h"], p["g_wih_x"],
                           p["g_b"], row_tile)
    g = lstm_recurrence(unflat(gates_g), p["g_whh"],
                        t_chunk=t_chunk, seq_len=seq, reverse=True)

    # inference loop with the g @ W1g projection hoisted out
    h1_pre = linear_rows(flat(g), p["gz_w1g"], p["gz_b1"], row_tile)
    z, z_mean, z_logvar = inference_recurrence(
        unflat(h1_pre), eps_p,
        p["gz_w1z"], p["gz_w2"], p["gz_b2"],
        p["inf_mean_w"], p["inf_mean_b"], p["inf_logvar_w"], p["inf_logvar_b"],
        t_chunk=t_chunk)

    # z_tm1 = cat(z_0, z[:-1])  (on padded sequence; pad tail is discarded later)
    z_tm1 = jnp.pad(z[:-1], ((1, 0), (0, 0), (0, 0)))

    # fused generation_z + generation_x (unused gen_mean head dropped)
    z_mean_p, z_logvar_p, y = generation_fused(
        flat(h), flat(z_tm1), flat(z), flat(labels_p), p, x_dim, row_tile)

    # slice back to the real sequence length
    y = unflat(y)[:seq]
    z_mean_p = unflat(z_mean_p)[:seq]
    z_logvar_p = unflat(z_logvar_p)[:seq]
    z_mean = z_mean[:seq]
    z_logvar = z_logvar[:seq]

    # losses (same as get_loss)
    loss_recon = jnp.sum(jnp.square(x - y)) / (B * seq)
    loss_kld = -0.5 * jnp.sum(
        z_logvar - z_logvar_p
        - (jnp.exp(z_logvar) + jnp.square(z_mean - z_mean_p)) / jnp.exp(z_logvar_p))
    loss_kld = loss_kld / (B * seq)
    loss_tot = loss_recon + beta * loss_kld

    # self.y = y.permute(1, -1, 0).squeeze()
    # (torch .squeeze() removes all size-1 dims; identical here since B>1, x_dim>1)
    y_out = jnp.squeeze(jnp.transpose(y, (1, 2, 0)))
    return y_out, (loss_tot, loss_recon, loss_kld)


if __name__ == "__main__":
    batch, x_dim, seq = 2, 4, 16
    z_dim = 16

    key = jax.random.PRNGKey(0)
    k_param, k_x, k_lab, k_eps = jax.random.split(key, 4)

    params = init_srnn_params(k_param, x_dim=x_dim, z_dim=z_dim)
    x = jax.random.normal(k_x, (batch, x_dim, seq), jnp.float32)      # [B, x_dim, seq]
    labels = jax.random.bernoulli(k_lab, 0.5, (batch, 1, seq)).astype(jnp.float32)
    eps = jax.random.normal(k_eps, (seq, batch, z_dim), jnp.float32)  # replaces torch.randn_like

    fwd = jax.jit(srnn_forward)
    y, (loss_tot, loss_recon, loss_kld) = fwd(params, x, labels, eps)
    jax.block_until_ready((y, loss_tot))

    assert y.shape == (batch, x_dim, seq), y.shape
    assert bool(jnp.all(jnp.isfinite(y)))
    assert bool(jnp.isfinite(loss_tot))
    print("KERNEL_OK")
</pallas_src>

<mosaic_0001>
module attributes {stable_mosaic.version = 11 : i64} {
  func.func @_linear1_kernel(%arg0: i32, %arg1: memref<32x4xf32, #tpu.memory_space<vmem>>, %arg2: memref<4x512xf32, #tpu.memory_space<vmem>>, %arg3: memref<1x512xf32, #tpu.memory_space<vmem>>, %arg4: memref<32x512xf32, #tpu.memory_space<vmem>>) attributes {dimension_semantics = [#tpu.dimension_semantics<parallel>], iteration_bounds = array<i64: 1>, scalar_prefetch = 0 : i64, scratch_operands = 0 : i64, tpu.core_type = #tpu.core_type<tc>, window_params = [{transform_indices = @transform_0, window_bounds = array<i64: 32, 4>}, {pipeline_mode = #tpu.pipeline_mode<synchronous>, transform_indices = @transform_1, window_bounds = array<i64: 4, 512>}, {pipeline_mode = #tpu.pipeline_mode<synchronous>, transform_indices = @transform_2, window_bounds = array<i64: 1, 512>}, {transform_indices = @transform_3, window_bounds = array<i64: 32, 512>}]} {
    %c0 = arith.constant 0 : index
    %c0_0 = arith.constant 0 : index
    %0 = vector.load %arg1[%c0, %c0_0] : memref<32x4xf32, #tpu.memory_space<vmem>>, vector<32x4xf32>
    %c0_1 = arith.constant 0 : index
    %c0_2 = arith.constant 0 : index
    %1 = vector.load %arg2[%c0_1, %c0_2] : memref<4x512xf32, #tpu.memory_space<vmem>>, vector<4x512xf32>
    %cst = arith.constant dense<0.000000e+00> : vector<32x512xf32>
    %2 = tpu.matmul %0, %1, %cst {dimension_numbers = #tpu.dot_dimension_numbers<[1], [0], [0], [1], [0, 0, 1, 1], [], []>} : vector<32x4xf32>, vector<4x512xf32>, vector<32x512xf32> -> vector<32x512xf32>
    %c0_3 = arith.constant 0 : index
    %c0_4 = arith.constant 0 : index
    %3 = vector.load %arg3[%c0_3, %c0_4] : memref<1x512xf32, #tpu.memory_space<vmem>>, vector<1x512xf32>
    %4 = vector.broadcast %3 : vector<1x512xf32> to vector<32x512xf32>
    %5 = arith.addf %2, %4 : vector<32x512xf32>
    %c0_5 = arith.constant 0 : index
    %c0_6 = arith.constant 0 : index
    %6 = vector.load %arg4[%c0_5, %c0_6] : memref<32x512xf32, #tpu.memory_space<vmem>>, vector<32x512xf32>
    tpu.vector_store %arg4[%c0_5, %c0_6], %5 {strides = array<i32>} : memref<32x512xf32, #tpu.memory_space<vmem>>, vector<32x512xf32>,
    return
  }
  func.func @transform_0(%arg0: i32) -> (i32, i32) {
    %c0_i32 = arith.constant 0 : i32
    %c0_i32_0 = arith.constant 0 : i32
    return %arg0, %c0_i32 : i32, i32
  }
  func.func @transform_1(%arg0: i32) -> (i32, i32) {
    %c0_i32 = arith.constant 0 : i32
    %c0_i32_0 = arith.constant 0 : i32
    %c0_i32_1 = arith.constant 0 : i32
    return %c0_i32, %c0_i32_0 : i32, i32
  }
  func.func @transform_2(%arg0: i32) -> (i32, i32) {
    %c0_i32 = arith.constant 0 : i32
    %c0_i32_0 = arith.constant 0 : i32
    %c0_i32_1 = arith.constant 0 : i32
    return %c0_i32, %c0_i32_0 : i32, i32
  }
  func.func @transform_3(%arg0: i32) -> (i32, i32) {
    %c0_i32 = arith.constant 0 : i32
    %c0_i32_0 = arith.constant 0 : i32
    return %arg0, %c0_i32 : i32, i32
  }
}

module attributes {stable_mosaic.version = 11 : i64} {
  func.func @kernel(%arg0: i32, %arg1: memref<16x2x512xf32, #tpu.memory_space<vmem>>, %arg2: memref<128x512xf32, #tpu.memory_space<vmem>>, %arg3: memref<16x2x128xf32, #tpu.memory_space<vmem>>, %arg4: memref<2x128xf32, #tpu.memory_space<vmem>>, %arg5: memref<2x128xf32, #tpu.memory_space<vmem>>) attributes {dimension_semantics = [#tpu.dimension_semantics<arbitrary>], iteration_bounds = array<i64: 1>, scalar_prefetch = 0 : i64, scratch_operands = 2 : i64, tpu.core_type = #tpu.core_type<tc>, window_params = [{transform_indices = @transform_0, window_bounds = array<i64: 16, 2, 512>}, {pipeline_mode = #tpu.pipeline_mode<synchronous>, transform_indices = @transform_1, window_bounds = array<i64: 128, 512>}, {transform_indices = @transform_2, window_bounds = array<i64: 16, 2, 128>}]} {
    %c0_i32 = arith.constant 0 : i32
    %0 = arith.cmpi eq, %arg0, %c0_i32 : i32
    %1 = arith.extui %0 : i1 to i32
    %c0_i32_0 = arith.constant 0 : i32
    %2 = arith.cmpi ne, %1, %c0_i32_0 : i32
    scf.if %2 {
      %cst = arith.constant 0.000000e+00 : f32
      %4 = vector.broadcast %cst : f32 to vector<2x128xf32>
      %c0 = arith.constant 0 : index
      %c0_3 = arith.constant 0 : index
      %5 = vector.load %arg4[%c0, %c0_3] : memref<2x128xf32, #tpu.memory_space<vmem>>, vector<2x128xf32>
      tpu.vector_store %arg4[%c0, %c0_3], %4 {strides = array<i32>} : memref<2x128xf32, #tpu.memory_space<vmem>>, vector<2x128xf32>,
      %cst_4 = arith.constant 0.000000e+00 : f32
      %6 = vector.broadcast %cst_4 : f32 to vector<2x128xf32>
      %c0_5 = arith.constant 0 : index
      %c0_6 = arith.constant 0 : index
      %7 = vector.load %arg5[%c0_5, %c0_6] : memref<2x128xf32, #tpu.memory_space<vmem>>, vector<2x128xf32>
      tpu.vector_store %arg5[%c0_5, %c0_6], %6 {strides = array<i32>} : memref<2x128xf32, #tpu.memory_space<vmem>>, vector<2x128xf32>,
    } else {
    }
    %c0_i32_1 = arith.constant 0 : i32
    %c16_i32 = arith.constant 16 : i32
    %3 = arith.addi %c0_i32_1, %c16_i32 : i32
    %c1_i32 = arith.constant 1 : i32
    scf.for %arg6 = %c0_i32_1 to %3 step %c1_i32  : i32 {
      %4 = arith.index_cast %arg6 : i32 to index
      %c0 = arith.constant 0 : index
      %c0_3 = arith.constant 0 : index
      %5 = vector.load %arg1[%4, %c0, %c0_3] : memref<16x2x512xf32, #tpu.memory_space<vmem>>, vector<1x2x512xf32>
      %6 = vector.shape_cast %5 : vector<1x2x512xf32> to vector<2x512xf32>
      %c0_4 = arith.constant 0 : index
      %c0_5 = arith.constant 0 : index
      %7 = vector.load %arg4[%c0_4, %c0_5] : memref<2x128xf32, #tpu.memory_space<vmem>>, vector<2x128xf32>
      %c0_6 = arith.constant 0 : index
      %c0_7 = arith.constant 0 : index
      %8 = vector.load %arg2[%c0_6, %c0_7] : memref<128x512xf32, #tpu.memory_space<vmem>>, vector<128x512xf32>
      %cst = arith.constant dense<0.000000e+00> : vector<2x512xf32>
      %9 = tpu.matmul %7, %8, %cst {dimension_numbers = #tpu.dot_dimension_numbers<[1], [0], [0], [1], [0, 0, 1, 1], [], []>} : vector<2x128xf32>, vector<128x512xf32>, vector<2x512xf32> -> vector<2x512xf32>
      %10 = arith.addf %6, %9 : vector<2x512xf32>
      %11 = vector.extract_strided_slice %10 {offsets = [0, 0], sizes = [2, 256], strides = [1, 1]} : vector<2x512xf32> to vector<2x256xf32>
      %12 = arith.negf %11 : vector<2x256xf32>
      %13 = math.exp %12 : vector<2x256xf32>
      %cst_8 = arith.constant 1.000000e+00 : f32
      %14 = vector.broadcast %cst_8 : f32 to vector<2x256xf32>
      %15 = arith.addf %14, %13 : vector<2x256xf32>
      %16 = arith.divf %14, %15 : vector<2x256xf32>
      %17 = vector.extract_strided_slice %16 {offsets = [0, 0], sizes = [2, 128], strides = [1, 1]} : vector<2x256xf32> to vector<2x128xf32>
      %18 = vector.extract_strided_slice %16 {offsets = [0, 128], sizes = [2, 128], strides = [1, 1]} : vector<2x256xf32> to vector<2x128xf32>
      %19 = vector.extract_strided_slice %10 {offsets = [0, 256], sizes = [2, 128], strides = [1, 1]} : vector<2x512xf32> to vector<2x128xf32>
      %20 = math.tanh %19 : vector<2x128xf32>
      %21 = vector.extract_strided_slice %10 {offsets = [0, 384], sizes = [2, 128], strides = [1, 1]} : vector<2x512xf32> to vector<2x128xf32>
      %22 = arith.negf %21 : vector<2x128xf32>
      %23 = math.exp %22 : vector<2x128xf32>
      %cst_9 = arith.constant 1.000000e+00 : f32
      %24 = vector.broadcast %cst_9 : f32 to vector<2x128xf32>
      %25 = arith.addf %24, %23 : vector<2x128xf32>
      %26 = arith.divf %24, %25 : vector<2x128xf32>
      %c0_10 = arith.constant 0 : index
      %c0_11 = arith.constant 0 : index
      %27 = vector.load %arg5[%c0_10, %c0_11] : memref<2x128xf32, #tpu.memory_space<vmem>>, vector<2x128xf32>
      %28 = arith.mulf %18, %27 : vector<2x128xf32>
      %29 = arith.mulf %17, %20 : vector<2x128xf32>
      %30 = arith.addf %28, %29 : vector<2x128xf32>
      %31 = math.tanh %30 : vector<2x128xf32>
      %32 = arith.mulf %26, %31 : vector<2x128xf32>
      %c0_12 = arith.constant 0 : index
      %c0_13 = arith.constant 0 : index
      %33 = vector.load %arg5[%c0_12, %c0_13] : memref<2x128xf32, #tpu.memory_space<vmem>>, vector<2x128xf32>
      tpu.vector_store %arg5[%c0_12, %c0_13], %30 {strides = array<i32>} : memref<2x128xf32, #tpu.memory_space<vmem>>, vector<2x128xf32>,
      %c0_14 = arith.constant 0 : index
      %c0_15 = arith.constant 0 : index
      %34 = vector.load %arg4[%c0_14, %c0_15] : memref<2x128xf32, #tpu.memory_space<vmem>>, vector<2x128xf32>
      tpu.vector_store %arg4[%c0_14, %c0_15], %32 {strides = array<i32>} : memref<2x128xf32, #tpu.memory_space<vmem>>, vector<2x128xf32>,
      %c0_16 = arith.constant 0 : index
      %c0_17 = arith.constant 0 : index
      %35 = vector.load %arg4[%c0_16, %c0_17] : memref<2x128xf32, #tpu.memory_space<vmem>>, vector<2x128xf32>
      %36 = arith.index_cast %arg6 : i32 to index
      %c0_18 = arith.constant 0 : index
      %c0_19 = arith.constant 0 : index
      %37 = vector.load %arg3[%36, %c0_18, %c0_19] : memref<16x2x128xf32, #tpu.memory_space<vmem>>, vector<1x2x128xf32>
      %38 = vector.shape_cast %37 : vector<1x2x128xf32> to vector<2x128xf32>
      %39 = vector.shape_cast %35 : vector<2x128xf32> to vector<1x2x128xf32>
      tpu.vector_store %arg3[%36, %c0_18, %c0_19], %39 {strides = array<i32>} : memref<16x2x128xf32, #tpu.memory_space<vmem>>, vector<1x2x128xf32>,
    }
    %c16_i32_2 = arith.constant 16 : i32
    return
  }
  func.func @transform_0(%arg0: i32) -> (i32, i32, i32) {
    %c0_i32 = arith.constant 0 : i32
    %c0_i32_0 = arith.constant 0 : i32
    %c0_i32_1 = arith.constant 0 : i32
    return %arg0, %c0_i32, %c0_i32_0 : i32, i32, i32
  }
  func.func @transform_1(%arg0: i32) -> (i32, i32) {
    %c0_i32 = arith.constant 0 : i32
    %c0_i32_0 = arith.constant 0 : i32
    %c0_i32_1 = arith.constant 0 : i32
    return %c0_i32, %c0_i32_0 : i32, i32
  }
  func.func @transform_2(%arg0: i32) -> (i32, i32, i32) {
    %c0_i32 = arith.constant 0 : i32
    %c0_i32_0 = arith.constant 0 : i32
    %c0_i32_1 = arith.constant 0 : i32
    return %arg0, %c0_i32, %c0_i32_0 : i32, i32, i32
  }
}

module attributes {stable_mosaic.version = 11 : i64} {
  func.func @_linear2_kernel(%arg0: i32, %arg1: memref<32x128xf32, #tpu.memory_space<vmem>>, %arg2: memref<32x4xf32, #tpu.memory_space<vmem>>, %arg3: memref<128x512xf32, #tpu.memory_space<vmem>>, %arg4: memref<4x512xf32, #tpu.memory_space<vmem>>, %arg5: memref<1x512xf32, #tpu.memory_space<vmem>>, %arg6: memref<32x512xf32, #tpu.memory_space<vmem>>) attributes {dimension_semantics = [#tpu.dimension_semantics<parallel>], iteration_bounds = array<i64: 1>, scalar_prefetch = 0 : i64, scratch_operands = 0 : i64, tpu.core_type = #tpu.core_type<tc>, window_params = [{transform_indices = @transform_0, window_bounds = array<i64: 32, 128>}, {transform_indices = @transform_1, window_bounds = array<i64: 32, 4>}, {pipeline_mode = #tpu.pipeline_mode<synchronous>, transform_indices = @transform_2, window_bounds = array<i64: 128, 512>}, {pipeline_mode = #tpu.pipeline_mode<synchronous>, transform_indices = @transform_3, window_bounds = array<i64: 4, 512>}, {pipeline_mode = #tpu.pipeline_mode<synchronous>, transform_indices = @transform_4, window_bounds = array<i64: 1, 512>}, {transform_indices = @transform_5, window_bounds = array<i64: 32, 512>}]} {
    %c0 = arith.constant 0 : index
    %c0_0 = arith.constant 0 : index
    %0 = vector.load %arg1[%c0, %c0_0] : memref<32x128xf32, #tpu.memory_space<vmem>>, vector<32x128xf32>
    %c0_1 = arith.constant 0 : index
    %c0_2 = arith.constant 0 : index
    %1 = vector.load %arg3[%c0_1, %c0_2] : memref<128x512xf32, #tpu.memory_space<vmem>>, vector<128x512xf32>
    %cst = arith.constant dense<0.000000e+00> : vector<32x512xf32>
    %2 = tpu.matmul %0, %1, %cst {dimension_numbers = #tpu.dot_dimension_numbers<[1], [0], [0], [1], [0, 0, 1, 1], [], []>} : vector<32x128xf32>, vector<128x512xf32>, vector<32x512xf32> -> vector<32x512xf32>
    %c0_3 = arith.constant 0 : index
    %c0_4 = arith.constant 0 : index
    %3 = vector.load %arg2[%c0_3, %c0_4] : memref<32x4xf32, #tpu.memory_space<vmem>>, vector<32x4xf32>
    %c0_5 = arith.constant 0 : index
    %c0_6 = arith.constant 0 : index
    %4 = vector.load %arg4[%c0_5, %c0_6] : memref<4x512xf32, #tpu.memory_space<vmem>>, vector<4x512xf32>
    %cst_7 = arith.constant dense<0.000000e+00> : vector<32x512xf32>
    %5 = tpu.matmul %3, %4, %cst_7 {dimension_numbers = #tpu.dot_dimension_numbers<[1], [0], [0], [1], [0, 0, 1, 1], [], []>} : vector<32x4xf32>, vector<4x512xf32>, vector<32x512xf32> -> vector<32x512xf32>
    %6 = arith.addf %2, %5 : vector<32x512xf32>
    %c0_8 = arith.constant 0 : index
    %c0_9 = arith.constant 0 : index
    %7 = vector.load %arg5[%c0_8, %c0_9] : memref<1x512xf32, #tpu.memory_space<vmem>>, vector<1x512xf32>
    %8 = vector.broadcast %7 : vector<1x512xf32> to vector<32x512xf32>
    %9 = arith.addf %6, %8 : vector<32x512xf32>
    %c0_10 = arith.constant 0 : index
    %c0_11 = arith.constant 0 : index
    %10 = vector.load %arg6[%c0_10, %c0_11] : memref<32x512xf32, #tpu.memory_space<vmem>>, vector<32x512xf32>
    tpu.vector_store %arg6[%c0_10, %c0_11], %9 {strides = array<i32>} : memref<32x512xf32, #tpu.memory_space<vmem>>, vector<32x512xf32>,
    return
  }
  func.func @transform_0(%arg0: i32) -> (i32, i32) {
    %c0_i32 = arith.constant 0 : i32
    %c0_i32_0 = arith.constant 0 : i32
    return %arg0, %c0_i32 : i32, i32
  }
  func.func @transform_1(%arg0: i32) -> (i32, i32) {
    %c0_i32 = arith.constant 0 : i32
    %c0_i32_0 = arith.constant 0 : i32
    return %arg0, %c0_i32 : i32, i32
  }
  func.func @transform_2(%arg0: i32) -> (i32, i32) {
    %c0_i32 = arith.constant 0 : i32
    %c0_i32_0 = arith.constant 0 : i32
    %c0_i32_1 = arith.constant 0 : i32
    return %c0_i32, %c0_i32_0 : i32, i32
  }
  func.func @transform_3(%arg0: i32) -> (i32, i32) {
    %c0_i32 = arith.constant 0 : i32
    %c0_i32_0 = arith.constant 0 : i32
    %c0_i32_1 = arith.constant 0 : i32
    return %c0_i32, %c0_i32_0 : i32, i32
  }
  func.func @transform_4(%arg0: i32) -> (i32, i32) {
    %c0_i32 = arith.constant 0 : i32
    %c0_i32_0 = arith.constant 0 : i32
    %c0_i32_1 = arith.constant 0 : i32
    return %c0_i32, %c0_i32_0 : i32, i32
  }
  func.func @transform_5(%arg0: i32) -> (i32, i32) {
    %c0_i32 = arith.constant 0 : i32
    %c0_i32_0 = arith.constant 0 : i32
    return %arg0, %c0_i32 : i32, i32
  }
}

module attributes {stable_mosaic.version = 11 : i64} {
  func.func @kernel(%arg0: i32, %arg1: memref<16x2x512xf32, #tpu.memory_space<vmem>>, %arg2: memref<128x512xf32, #tpu.memory_space<vmem>>, %arg3: memref<16x2x128xf32, #tpu.memory_space<vmem>>, %arg4: memref<2x128xf32, #tpu.memory_space<vmem>>, %arg5: memref<2x128xf32, #tpu.memory_space<vmem>>) attributes {dimension_semantics = [#tpu.dimension_semantics<arbitrary>], iteration_bounds = array<i64: 1>, scalar_prefetch = 0 : i64, scratch_operands = 2 : i64, tpu.core_type = #tpu.core_type<tc>, window_params = [{transform_indices = @transform_0, window_bounds = array<i64: 16, 2, 512>}, {pipeline_mode = #tpu.pipeline_mode<synchronous>, transform_indices = @transform_1, window_bounds = array<i64: 128, 512>}, {transform_indices = @transform_2, window_bounds = array<i64: 16, 2, 128>}]} {
    %c0_i32 = arith.constant 0 : i32
    %0 = arith.cmpi eq, %arg0, %c0_i32 : i32
    %1 = arith.extui %0 : i1 to i32
    %c0_i32_0 = arith.constant 0 : i32
    %2 = arith.cmpi ne, %1, %c0_i32_0 : i32
    scf.if %2 {
      %cst = arith.constant 0.000000e+00 : f32
      %6 = vector.broadcast %cst : f32 to vector<2x128xf32>
      %c0 = arith.constant 0 : index
      %c0_5 = arith.constant 0 : index
      %7 = vector.load %arg4[%c0, %c0_5] : memref<2x128xf32, #tpu.memory_space<vmem>>, vector<2x128xf32>
      tpu.vector_store %arg4[%c0, %c0_5], %6 {strides = array<i32>} : memref<2x128xf32, #tpu.memory_space<vmem>>, vector<2x128xf32>,
      %cst_6 = arith.constant 0.000000e+00 : f32
      %8 = vector.broadcast %cst_6 : f32 to vector<2x128xf32>
      %c0_7 = arith.constant 0 : index
      %c0_8 = arith.constant 0 : index
      %9 = vector.load %arg5[%c0_7, %c0_8] : memref<2x128xf32, #tpu.memory_space<vmem>>, vector<2x128xf32>
      tpu.vector_store %arg5[%c0_7, %c0_8], %8 {strides = array<i32>} : memref<2x128xf32, #tpu.memory_space<vmem>>, vector<2x128xf32>,
    } else {
    }
    %c0_i32_1 = arith.constant 0 : i32
    %3 = arith.subi %c0_i32_1, %arg0 : i32
    %c16_i32 = arith.constant 16 : i32
    %4 = arith.muli %3, %c16_i32 : i32
    %c0_i32_2 = arith.constant 0 : i32
    %c16_i32_3 = arith.constant 16 : i32
    %5 = arith.addi %c0_i32_2, %c16_i32_3 : i32
    %c1_i32 = arith.constant 1 : i32
    scf.for %arg6 = %c0_i32_2 to %5 step %c1_i32  : i32 {
      %c15_i32 = arith.constant 15 : i32
      %6 = arith.subi %c15_i32, %arg6 : i32
      %7 = arith.index_cast %6 : i32 to index
      %c0 = arith.constant 0 : index
      %c0_5 = arith.constant 0 : index
      %8 = vector.load %arg1[%7, %c0, %c0_5] : memref<16x2x512xf32, #tpu.memory_space<vmem>>, vector<1x2x512xf32>
      %9 = vector.shape_cast %8 : vector<1x2x512xf32> to vector<2x512xf32>
      %c0_6 = arith.constant 0 : index
      %c0_7 = arith.constant 0 : index
      %10 = vector.load %arg4[%c0_6, %c0_7] : memref<2x128xf32, #tpu.memory_space<vmem>>, vector<2x128xf32>
      %c0_8 = arith.constant 0 : index
      %c0_9 = arith.constant 0 : index
      %11 = vector.load %arg2[%c0_8, %c0_9] : memref<128x512xf32, #tpu.memory_space<vmem>>, vector<128x512xf32>
      %cst = arith.constant dense<0.000000e+00> : vector<2x512xf32>
      %12 = tpu.matmul %10, %11, %cst {dimension_numbers = #tpu.dot_dimension_numbers<[1], [0], [0], [1], [0, 0, 1, 1], [], []>} : vector<2x128xf32>, vector<128x512xf32>, vector<2x512xf32> -> vector<2x512xf32>
      %13 = arith.addf %9, %12 : vector<2x512xf32>
      %14 = vector.extract_strided_slice %13 {offsets = [0, 0], sizes = [2, 256], strides = [1, 1]} : vector<2x512xf32> to vector<2x256xf32>
      %15 = arith.negf %14 : vector<2x256xf32>
      %16 = math.exp %15 : vector<2x256xf32>
      %cst_10 = arith.constant 1.000000e+00 : f32
      %17 = vector.broadcast %cst_10 : f32 to vector<2x256xf32>
      %18 = arith.addf %17, %16 : vector<2x256xf32>
      %19 = arith.divf %17, %18 : vector<2x256xf32>
      %20 = vector.extract_strided_slice %19 {offsets = [0, 0], sizes = [2, 128], strides = [1, 1]} : vector<2x256xf32> to vector<2x128xf32>
      %21 = vector.extract_strided_slice %19 {offsets = [0, 128], sizes = [2, 128], strides = [1, 1]} : vector<2x256xf32> to vector<2x128xf32>
      %22 = vector.extract_strided_slice %13 {offsets = [0, 256], sizes = [2, 128], strides = [1, 1]} : vector<2x512xf32> to vector<2x128xf32>
      %23 = math.tanh %22 : vector<2x128xf32>
      %24 = vector.extract_strided_slice %13 {offsets = [0, 384], sizes = [2, 128], strides = [1, 1]} : vector<2x512xf32> to vector<2x128xf32>
      %25 = arith.negf %24 : vector<2x128xf32>
      %26 = math.exp %25 : vector<2x128xf32>
      %cst_11 = arith.constant 1.000000e+00 : f32
      %27 = vector.broadcast %cst_11 : f32 to vector<2x128xf32>
      %28 = arith.addf %27, %26 : vector<2x128xf32>
      %29 = arith.divf %27, %28 : vector<2x128xf32>
      %c0_12 = arith.constant 0 : index
      %c0_13 = arith.constant 0 : index
      %30 = vector.load %arg5[%c0_12, %c0_13] : memref<2x128xf32, #tpu.memory_space<vmem>>, vector<2x128xf32>
      %31 = arith.mulf %21, %30 : vector<2x128xf32>
      %32 = arith.mulf %20, %23 : vector<2x128xf32>
      %33 = arith.addf %31, %32 : vector<2x128xf32>
      %34 = math.tanh %33 : vector<2x128xf32>
      %35 = arith.mulf %29, %34 : vector<2x128xf32>
      %36 = arith.addi %4, %6 : i32
      %c16_i32_14 = arith.constant 16 : i32
      %37 = arith.cmpi slt, %36, %c16_i32_14 : i32
      %38 = arith.extui %37 : i1 to i32
      %39 = arith.sitofp %38 : i32 to f32
      %40 = vector.broadcast %39 : f32 to vector<2x128xf32>
      %41 = arith.mulf %40, %33 : vector<2x128xf32>
      %cst_15 = arith.constant 1.000000e+00 : f32
      %42 = arith.subf %cst_15, %39 : f32
      %c0_16 = arith.constant 0 : index
      %c0_17 = arith.constant 0 : index
      %43 = vector.load %arg5[%c0_16, %c0_17] : memref<2x128xf32, #tpu.memory_space<vmem>>, vector<2x128xf32>
      %44 = vector.broadcast %42 : f32 to vector<2x128xf32>
      %45 = arith.mulf %44, %43 : vector<2x128xf32>
      %46 = arith.addf %41, %45 : vector<2x128xf32>
      %c0_18 = arith.constant 0 : index
      %c0_19 = arith.constant 0 : index
      %47 = vector.load %arg5[%c0_18, %c0_19] : memref<2x128xf32, #tpu.memory_space<vmem>>, vector<2x128xf32>
      tpu.vector_store %arg5[%c0_18, %c0_19], %46 {strides = array<i32>} : memref<2x128xf32, #tpu.memory_space<vmem>>, vector<2x128xf32>,
      %48 = vector.broadcast %39 : f32 to vector<2x128xf32>
      %49 = arith.mulf %48, %35 : vector<2x128xf32>
      %cst_20 = arith.constant 1.000000e+00 : f32
      %50 = arith.subf %cst_20, %39 : f32
      %c0_21 = arith.constant 0 : index
      %c0_22 = arith.constant 0 : index
      %51 = vector.load %arg4[%c0_21, %c0_22] : memref<2x128xf32, #tpu.memory_space<vmem>>, vector<2x128xf32>
      %52 = vector.broadcast %50 : f32 to vector<2x128xf32>
      %53 = arith.mulf %52, %51 : vector<2x128xf32>
      %54 = arith.addf %49, %53 : vector<2x128xf32>
      %c0_23 = arith.constant 0 : index
      %c0_24 = arith.constant 0 : index
      %55 = vector.load %arg4[%c0_23, %c0_24] : memref<2x128xf32, #tpu.memory_space<vmem>>, vector<2x128xf32>
      tpu.vector_store %arg4[%c0_23, %c0_24], %54 {strides = array<i32>} : memref<2x128xf32, #tpu.memory_space<vmem>>, vector<2x128xf32>,
      %c0_25 = arith.constant 0 : index
      %c0_26 = arith.constant 0 : index
      %56 = vector.load %arg4[%c0_25, %c0_26] : memref<2x128xf32, #tpu.memory_space<vmem>>, vector<2x128xf32>
      %57 = arith.index_cast %6 : i32 to index
      %c0_27 = arith.constant 0 : index
      %c0_28 = arith.constant 0 : index
      %58 = vector.load %arg3[%57, %c0_27, %c0_28] : memref<16x2x128xf32, #tpu.memory_space<vmem>>, vector<1x2x128xf32>
      %59 = vector.shape_cast %58 : vector<1x2x128xf32> to vector<2x128xf32>
      %60 = vector.shape_cast %56 : vector<2x128xf32> to vector<1x2x128xf32>
      tpu.vector_store %arg3[%57, %c0_27, %c0_28], %60 {strides = array<i32>} : memref<16x2x128xf32, #tpu.memory_space<vmem>>, vector<1x2x128xf32>,
    }
    %c16_i32_4 = arith.constant 16 : i32
    return
  }
  func.func @transform_0(%arg0: i32) -> (i32, i32, i32) {
    %c0_i32 = arith.constant 0 : i32
    %0 = arith.subi %c0_i32, %arg0 : i32
    %c0_i32_0 = arith.constant 0 : i32
    %c0_i32_1 = arith.constant 0 : i32
    %c0_i32_2 = arith.constant 0 : i32
    return %0, %c0_i32_0, %c0_i32_1 : i32, i32, i32
  }
  func.func @transform_1(%arg0: i32) -> (i32, i32) {
    %c0_i32 = arith.constant 0 : i32
    %c0_i32_0 = arith.constant 0 : i32
    %c0_i32_1 = arith.constant 0 : i32
    return %c0_i32, %c0_i32_0 : i32, i32
  }
  func.func @transform_2(%arg0: i32) -> (i32, i32, i32) {
    %c0_i32 = arith.constant 0 : i32
    %0 = arith.subi %c0_i32, %arg0 : i32
    %c0_i32_0 = arith.constant 0 : i32
    %c0_i32_1 = arith.constant 0 : i32
    %c0_i32_2 = arith.constant 0 : i32
    return %0, %c0_i32_0, %c0_i32_1 : i32, i32, i32
  }
}

module attributes {stable_mosaic.version = 11 : i64} {
  func.func @_linear1_kernel(%arg0: i32, %arg1: memref<32x128xf32, #tpu.memory_space<vmem>>, %arg2: memref<128x128xf32, #tpu.memory_space<vmem>>, %arg3: memref<1x128xf32, #tpu.memory_space<vmem>>, %arg4: memref<32x128xf32, #tpu.memory_space<vmem>>) attributes {dimension_semantics = [#tpu.dimension_semantics<parallel>], iteration_bounds = array<i64: 1>, scalar_prefetch = 0 : i64, scratch_operands = 0 : i64, tpu.core_type = #tpu.core_type<tc>, window_params = [{transform_indices = @transform_0, window_bounds = array<i64: 32, 128>}, {pipeline_mode = #tpu.pipeline_mode<synchronous>, transform_indices = @transform_1, window_bounds = array<i64: 128, 128>}, {pipeline_mode = #tpu.pipeline_mode<synchronous>, transform_indices = @transform_2, window_bounds = array<i64: 1, 128>}, {transform_indices = @transform_3, window_bounds = array<i64: 32, 128>}]} {
    %c0 = arith.constant 0 : index
    %c0_0 = arith.constant 0 : index
    %0 = vector.load %arg1[%c0, %c0_0] : memref<32x128xf32, #tpu.memory_space<vmem>>, vector<32x128xf32>
    %c0_1 = arith.constant 0 : index
    %c0_2 = arith.constant 0 : index
    %1 = vector.load %arg2[%c0_1, %c0_2] : memref<128x128xf32, #tpu.memory_space<vmem>>, vector<128x128xf32>
    %cst = arith.constant dense<0.000000e+00> : vector<32x128xf32>
    %2 = tpu.matmul %0, %1, %cst {dimension_numbers = #tpu.dot_dimension_numbers<[1], [0], [0], [1], [0, 0, 1, 1], [], []>} : vector<32x128xf32>, vector<128x128xf32>, vector<32x128xf32> -> vector<32x128xf32>
    %c0_3 = arith.constant 0 : index
    %c0_4 = arith.constant 0 : index
    %3 = vector.load %arg3[%c0_3, %c0_4] : memref<1x128xf32, #tpu.memory_space<vmem>>, vector<1x128xf32>
    %4 = vector.broadcast %3 : vector<1x128xf32> to vector<32x128xf32>
    %5 = arith.addf %2, %4 : vector<32x128xf32>
    %c0_5 = arith.constant 0 : index
    %c0_6 = arith.constant 0 : index
    %6 = vector.load %arg4[%c0_5, %c0_6] : memref<32x128xf32, #tpu.memory_space<vmem>>, vector<32x128xf32>
    tpu.vector_store %arg4[%c0_5, %c0_6], %5 {strides = array<i32>} : memref<32x128xf32, #tpu.memory_space<vmem>>, vector<32x128xf32>,
    return
  }
  func.func @transform_0(%arg0: i32) -> (i32, i32) {
    %c0_i32 = arith.constant 0 : i32
    %c0_i32_0 = arith.constant 0 : i32
    return %arg0, %c0_i32 : i32, i32
  }
  func.func @transform_1(%arg0: i32) -> (i32, i32) {
    %c0_i32 = arith.constant 0 : i32
    %c0_i32_0 = arith.constant 0 : i32
    %c0_i32_1 = arith.constant 0 : i32
    return %c0_i32, %c0_i32_0 : i32, i32
  }
  func.func @transform_2(%arg0: i32) -> (i32, i32) {
    %c0_i32 = arith.constant 0 : i32
    %c0_i32_0 = arith.constant 0 : i32
    %c0_i32_1 = arith.constant 0 : i32
    return %c0_i32, %c0_i32_0 : i32, i32
  }
  func.func @transform_3(%arg0: i32) -> (i32, i32) {
    %c0_i32 = arith.constant 0 : i32
    %c0_i32_0 = arith.constant 0 : i32
    return %arg0, %c0_i32 : i32, i32
  }
}

module attributes {stable_mosaic.version = 11 : i64} {
  func.func @kernel(%arg0: i32, %arg1: memref<16x2x128xf32, #tpu.memory_space<vmem>>, %arg2: memref<16x2x16xf32, #tpu.memory_space<vmem>>, %arg3: memref<16x128xf32, #tpu.memory_space<vmem>>, %arg4: memref<128x128xf32, #tpu.memory_space<vmem>>, %arg5: memref<1x128xf32, #tpu.memory_space<vmem>>, %arg6: memref<128x16xf32, #tpu.memory_space<vmem>>, %arg7: memref<1x16xf32, #tpu.memory_space<vmem>>, %arg8: memref<128x16xf32, #tpu.memory_space<vmem>>, %arg9: memref<1x16xf32, #tpu.memory_space<vmem>>, %arg10: memref<16x2x16xf32, #tpu.memory_space<vmem>>, %arg11: memref<16x2x16xf32, #tpu.memory_space<vmem>>, %arg12: memref<16x2x16xf32, #tpu.memory_space<vmem>>, %arg13: memref<2x16xf32, #tpu.memory_space<vmem>>) attributes {dimension_semantics = [#tpu.dimension_semantics<arbitrary>], iteration_bounds = array<i64: 1>, scalar_prefetch = 0 : i64, scratch_operands = 1 : i64, tpu.core_type = #tpu.core_type<tc>, window_params = [{transform_indices = @transform_0, window_bounds = array<i64: 16, 2, 128>}, {transform_indices = @transform_1, window_bounds = array<i64: 16, 2, 16>}, {pipeline_mode = #tpu.pipeline_mode<synchronous>, transform_indices = @transform_2, window_bounds = array<i64: 16, 128>}, {pipeline_mode = #tpu.pipeline_mode<synchronous>, transform_indices = @transform_3, window_bounds = array<i64: 128, 128>}, {pipeline_mode = #tpu.pipeline_mode<synchronous>, transform_indices = @transform_4, window_bounds = array<i64: 1, 128>}, {pipeline_mode = #tpu.pipeline_mode<synchronous>, transform_indices = @transform_5, window_bounds = array<i64: 128, 16>}, {pipeline_mode = #tpu.pipeline_mode<synchronous>, transform_indices = @transform_6, window_bounds = array<i64: 1, 16>}, {pipeline_mode = #tpu.pipeline_mode<synchronous>, transform_indices = @transform_7, window_bounds = array<i64: 128, 16>}, {pipeline_mode = #tpu.pipeline_mode<synchronous>, transform_indices = @transform_8, window_bounds = array<i64: 1, 16>}, {transform_indices = @transform_9, window_bounds = array<i64: 16, 2, 16>}, {transform_indices = @transform_10, window_bounds = array<i64: 16, 2, 16>}, {transform_indices = @transform_11, window_bounds = array<i64: 16, 2, 16>}]} {
    %c0_i32 = arith.constant 0 : i32
    %0 = arith.cmpi eq, %arg0, %c0_i32 : i32
    %1 = arith.extui %0 : i1 to i32
    %c0_i32_0 = arith.constant 0 : i32
    %2 = arith.cmpi ne, %1, %c0_i32_0 : i32
    scf.if %2 {
      %cst = arith.constant 0.000000e+00 : f32
      %4 = vector.broadcast %cst : f32 to vector<2x16xf32>
      %c0 = arith.constant 0 : index
      %c0_3 = arith.constant 0 : index
      %5 = vector.load %arg13[%c0, %c0_3] : memref<2x16xf32, #tpu.memory_space<vmem>>, vector<2x16xf32>
      tpu.vector_store %arg13[%c0, %c0_3], %4 {strides = array<i32>} : memref<2x16xf32, #tpu.memory_space<vmem>>, vector<2x16xf32>,
    } else {
    }
    %c0_i32_1 = arith.constant 0 : i32
    %c16_i32 = arith.constant 16 : i32
    %3 = arith.addi %c0_i32_1, %c16_i32 : i32
    %c1_i32 = arith.constant 1 : i32
    scf.for %arg14 = %c0_i32_1 to %3 step %c1_i32  : i32 {
      %4 = arith.index_cast %arg14 : i32 to index
      %c0 = arith.constant 0 : index
      %c0_3 = arith.constant 0 : index
      %5 = vector.load %arg1[%4, %c0, %c0_3] : memref<16x2x128xf32, #tpu.memory_space<vmem>>, vector<1x2x128xf32>
      %6 = vector.shape_cast %5 : vector<1x2x128xf32> to vector<2x128xf32>
      %c0_4 = arith.constant 0 : index
      %c0_5 = arith.constant 0 : index
      %7 = vector.load %arg13[%c0_4, %c0_5] : memref<2x16xf32, #tpu.memory_space<vmem>>, vector<2x16xf32>
      %c0_6 = arith.constant 0 : index
      %c0_7 = arith.constant 0 : index
      %8 = vector.load %arg3[%c0_6, %c0_7] : memref<16x128xf32, #tpu.memory_space<vmem>>, vector<16x128xf32>
      %cst = arith.constant dense<0.000000e+00> : vector<2x128xf32>
      %9 = tpu.matmul %7, %8, %cst {dimension_numbers = #tpu.dot_dimension_numbers<[1], [0], [0], [1], [0, 0, 1, 1], [], []>} : vector<2x16xf32>, vector<16x128xf32>, vector<2x128xf32> -> vector<2x128xf32>
      %10 = arith.addf %6, %9 : vector<2x128xf32>
      %11 = math.tanh %10 : vector<2x128xf32>
      %c0_8 = arith.constant 0 : index
      %c0_9 = arith.constant 0 : index
      %12 = vector.load %arg4[%c0_8, %c0_9] : memref<128x128xf32, #tpu.memory_space<vmem>>, vector<128x128xf32>
      %cst_10 = arith.constant dense<0.000000e+00> : vector<2x128xf32>
      %13 = tpu.matmul %11, %12, %cst_10 {dimension_numbers = #tpu.dot_dimension_numbers<[1], [0], [0], [1], [0, 0, 1, 1], [], []>} : vector<2x128xf32>, vector<128x128xf32>, vector<2x128xf32> -> vector<2x128xf32>
      %c0_11 = arith.constant 0 : index
      %c0_12 = arith.constant 0 : index
      %14 = vector.load %arg5[%c0_11, %c0_12] : memref<1x128xf32, #tpu.memory_space<vmem>>, vector<1x128xf32>
      %15 = vector.broadcast %14 : vector<1x128xf32> to vector<2x128xf32>
      %16 = arith.addf %13, %15 : vector<2x128xf32>
      %17 = math.tanh %16 : vector<2x128xf32>
      %c0_13 = arith.constant 0 : index
      %c0_14 = arith.constant 0 : index
      %18 = vector.load %arg6[%c0_13, %c0_14] : memref<128x16xf32, #tpu.memory_space<vmem>>, vector<128x16xf32>
      %cst_15 = arith.constant dense<0.000000e+00> : vector<2x16xf32>
      %19 = tpu.matmul %17, %18, %cst_15 {dimension_numbers = #tpu.dot_dimension_numbers<[1], [0], [0], [1], [0, 0, 1, 1], [], []>} : vector<2x128xf32>, vector<128x16xf32>, vector<2x16xf32> -> vector<2x16xf32>
      %c0_16 = arith.constant 0 : index
      %c0_17 = arith.constant 0 : index
      %20 = vector.load %arg7[%c0_16, %c0_17] : memref<1x16xf32, #tpu.memory_space<vmem>>, vector<1x16xf32>
      %21 = vector.broadcast %20 : vector<1x16xf32> to vector<2x16xf32>
      %22 = arith.addf %19, %21 : vector<2x16xf32>
      %c0_18 = arith.constant 0 : index
      %c0_19 = arith.constant 0 : index
      %23 = vector.load %arg8[%c0_18, %c0_19] : memref<128x16xf32, #tpu.memory_space<vmem>>, vector<128x16xf32>
      %cst_20 = arith.constant dense<0.000000e+00> : vector<2x16xf32>
      %24 = tpu.matmul %17, %23, %cst_20 {dimension_numbers = #tpu.dot_dimension_numbers<[1], [0], [0], [1], [0, 0, 1, 1], [], []>} : vector<2x128xf32>, vector<128x16xf32>, vector<2x16xf32> -> vector<2x16xf32>
      %c0_21 = arith.constant 0 : index
      %c0_22 = arith.constant 0 : index
      %25 = vector.load %arg9[%c0_21, %c0_22] : memref<1x16xf32, #tpu.memory_space<vmem>>, vector<1x16xf32>
      %26 = vector.broadcast %25 : vector<1x16xf32> to vector<2x16xf32>
      %27 = arith.addf %24, %26 : vector<2x16xf32>
      %28 = arith.index_cast %arg14 : i32 to index
      %c0_23 = arith.constant 0 : index
      %c0_24 = arith.constant 0 : index
      %29 = vector.load %arg2[%28, %c0_23, %c0_24] : memref<16x2x16xf32, #tpu.memory_space<vmem>>, vector<1x2x16xf32>
      %30 = vector.shape_cast %29 : vector<1x2x16xf32> to vector<2x16xf32>
      %cst_25 = arith.constant 5.000000e-01 : f32
      %31 = vector.broadcast %cst_25 : f32 to vector<2x16xf32>
      %32 = arith.mulf %31, %27 : vector<2x16xf32>
      %33 = math.exp %32 : vector<2x16xf32>
      %34 = arith.mulf %30, %33 : vector<2x16xf32>
      %35 = arith.addf %22, %34 : vector<2x16xf32>
      %c0_26 = arith.constant 0 : index
      %c0_27 = arith.constant 0 : index
      %36 = vector.load %arg13[%c0_26, %c0_27] : memref<2x16xf32, #tpu.memory_space<vmem>>, vector<2x16xf32>
      tpu.vector_store %arg13[%c0_26, %c0_27], %35 {strides = array<i32>} : memref<2x16xf32, #tpu.memory_space<vmem>>, vector<2x16xf32>,
      %37 = arith.index_cast %arg14 : i32 to index
      %c0_28 = arith.constant 0 : index
      %c0_29 = arith.constant 0 : index
      %38 = vector.load %arg11[%37, %c0_28, %c0_29] : memref<16x2x16xf32, #tpu.memory_space<vmem>>, vector<1x2x16xf32>
      %39 = vector.shape_cast %38 : vector<1x2x16xf32> to vector<2x16xf32>
      %40 = vector.shape_cast %22 : vector<2x16xf32> to vector<1x2x16xf32>
      tpu.vector_store %arg11[%37, %c0_28, %c0_29], %40 {strides = array<i32>} : memref<16x2x16xf32, #tpu.memory_space<vmem>>, vector<1x2x16xf32>,
      %41 = arith.index_cast %arg14 : i32 to index
      %c0_30 = arith.constant 0 : index
      %c0_31 = arith.constant 0 : index
      %42 = vector.load %arg12[%41, %c0_30, %c0_31] : memref<16x2x16xf32, #tpu.memory_space<vmem>>, vector<1x2x16xf32>
      %43 = vector.shape_cast %42 : vector<1x2x16xf32> to vector<2x16xf32>
      %44 = vector.shape_cast %27 : vector<2x16xf32> to vector<1x2x16xf32>
      tpu.vector_store %arg12[%41, %c0_30, %c0_31], %44 {strides = array<i32>} : memref<16x2x16xf32, #tpu.memory_space<vmem>>, vector<1x2x16xf32>,
      %45 = arith.index_cast %arg14 : i32 to index
      %c0_32 = arith.constant 0 : index
      %c0_33 = arith.constant 0 : index
      %46 = vector.load %arg10[%45, %c0_32, %c0_33] : memref<16x2x16xf32, #tpu.memory_space<vmem>>, vector<1x2x16xf32>
      %47 = vector.shape_cast %46 : vector<1x2x16xf32> to vector<2x16xf32>
      %48 = vector.shape_cast %35 : vector<2x16xf32> to vector<1x2x16xf32>
      tpu.vector_store %arg10[%45, %c0_32, %c0_33], %48 {strides = array<i32>} : memref<16x2x16xf32, #tpu.memory_space<vmem>>, vector<1x2x16xf32>,
    }
    %c16_i32_2 = arith.constant 16 : i32
    return
  }
  func.func @transform_0(%arg0: i32) -> (i32, i32, i32) {
    %c0_i32 = arith.constant 0 : i32
    %c0_i32_0 = arith.constant 0 : i32
    %c0_i32_1 = arith.constant 0 : i32
    return %arg0, %c0_i32, %c0_i32_0 : i32, i32, i32
  }
  func.func @transform_1(%arg0: i32) -> (i32, i32, i32) {
    %c0_i32 = arith.constant 0 : i32
    %c0_i32_0 = arith.constant 0 : i32
    %c0_i32_1 = arith.constant 0 : i32
    return %arg0, %c0_i32, %c0_i32_0 : i32, i32, i32
  }
  func.func @transform_2(%arg0: i32) -> (i32, i32) {
    %c0_i32 = arith.constant 0 : i32
    %c0_i32_0 = arith.constant 0 : i32
    %c0_i32_1 = arith.constant 0 : i32
    return %c0_i32, %c0_i32_0 : i32, i32
  }
  func.func @transform_3(%arg0: i32) -> (i32, i32) {
    %c0_i32 = arith.constant 0 : i32
    %c0_i32_0 = arith.constant 0 : i32
    %c0_i32_1 = arith.constant 0 : i32
    return %c0_i32, %c0_i32_0 : i32, i32
  }
  func.func @transform_4(%arg0: i32) -> (i32, i32) {
    %c0_i32 = arith.constant 0 : i32
    %c0_i32_0 = arith.constant 0 : i32
    %c0_i32_1 = arith.constant 0 : i32
    return %c0_i32, %c0_i32_0 : i32, i32
  }
  func.func @transform_5(%arg0: i32) -> (i32, i32) {
    %c0_i32 = arith.constant 0 : i32
    %c0_i32_0 = arith.constant 0 : i32
    %c0_i32_1 = arith.constant 0 : i32
    return %c0_i32, %c0_i32_0 : i32, i32
  }
  func.func @transform_6(%arg0: i32) -> (i32, i32) {
    %c0_i32 = arith.constant 0 : i32
    %c0_i32_0 = arith.constant 0 : i32
    %c0_i32_1 = arith.constant 0 : i32
    return %c0_i32, %c0_i32_0 : i32, i32
  }
  func.func @transform_7(%arg0: i32) -> (i32, i32) {
    %c0_i32 = arith.constant 0 : i32
    %c0_i32_0 = arith.constant 0 : i32
    %c0_i32_1 = arith.constant 0 : i32
    return %c0_i32, %c0_i32_0 : i32, i32
  }
  func.func @transform_8(%arg0: i32) -> (i32, i32) {
    %c0_i32 = arith.constant 0 : i32
    %c0_i32_0 = arith.constant 0 : i32
    %c0_i32_1 = arith.constant 0 : i32
    return %c0_i32, %c0_i32_0 : i32, i32
  }
  func.func @transform_9(%arg0: i32) -> (i32, i32, i32) {
    %c0_i32 = arith.constant 0 : i32
    %c0_i32_0 = arith.constant 0 : i32
    %c0_i32_1 = arith.constant 0 : i32
    return %arg0, %c0_i32, %c0_i32_0 : i32, i32, i32
  }
  func.func @transform_10(%arg0: i32) -> (i32, i32, i32) {
    %c0_i32 = arith.constant 0 : i32
    %c0_i32_0 = arith.constant 0 : i32
    %c0_i32_1 = arith.constant 0 : i32
    return %arg0, %c0_i32, %c0_i32_0 : i32, i32, i32
  }
  func.func @transform_11(%arg0: i32) -> (i32, i32, i32) {
    %c0_i32 = arith.constant 0 : i32
    %c0_i32_0 = arith.constant 0 : i32
    %c0_i32_1 = arith.constant 0 : i32
    return %arg0, %c0_i32, %c0_i32_0 : i32, i32, i32
  }
}

module attributes {stable_mosaic.version = 11 : i64} {
  func.func @_generation_kernel(%arg0: i32, %arg1: memref<32x128xf32, #tpu.memory_space<vmem>>, %arg2: memref<32x16xf32, #tpu.memory_space<vmem>>, %arg3: memref<32x16xf32, #tpu.memory_space<vmem>>, %arg4: memref<32x1xf32, #tpu.memory_space<vmem>>, %arg5: memref<128x128xf32, #tpu.memory_space<vmem>>, %arg6: memref<16x128xf32, #tpu.memory_space<vmem>>, %arg7: memref<1x128xf32, #tpu.memory_space<vmem>>, %arg8: memref<128x128xf32, #tpu.memory_space<vmem>>, %arg9: memref<1x128xf32, #tpu.memory_space<vmem>>, %arg10: memref<128x16xf32, #tpu.memory_space<vmem>>, %arg11: memref<1x16xf32, #tpu.memory_space<vmem>>, %arg12: memref<128x16xf32, #tpu.memory_space<vmem>>, %arg13: memref<1x16xf32, #tpu.memory_space<vmem>>, %arg14: memref<128x128xf32, #tpu.memory_space<vmem>>, %arg15: memref<16x128xf32, #tpu.memory_space<vmem>>, %arg16: memref<1x128xf32, #tpu.memory_space<vmem>>, %arg17: memref<1x128xf32, #tpu.memory_space<vmem>>, %arg18: memref<128x128xf32, #tpu.memory_space<vmem>>, %arg19: memref<1x128xf32, #tpu.memory_space<vmem>>, %arg20: memref<128x4xf32, #tpu.memory_space<vmem>>, %arg21: memref<1x4xf32, #tpu.memory_space<vmem>>, %arg22: memref<32x16xf32, #tpu.memory_space<vmem>>, %arg23: memref<32x16xf32, #tpu.memory_space<vmem>>, %arg24: memref<32x4xf32, #tpu.memory_space<vmem>>) attributes {dimension_semantics = [#tpu.dimension_semantics<parallel>], iteration_bounds = array<i64: 1>, scalar_prefetch = 0 : i64, scratch_operands = 0 : i64, tpu.core_type = #tpu.core_type<tc>, window_params = [{transform_indices = @transform_0, window_bounds = array<i64: 32, 128>}, {transform_indices = @transform_1, window_bounds = array<i64: 32, 16>}, {transform_indices = @transform_2, window_bounds = array<i64: 32, 16>}, {transform_indices = @transform_3, window_bounds = array<i64: 32, 1>}, {pipeline_mode = #tpu.pipeline_mode<synchronous>, transform_indices = @transform_4, window_bounds = array<i64: 128, 128>}, {pipeline_mode = #tpu.pipeline_mode<synchronous>, transform_indices = @transform_5, window_bounds = array<i64: 16, 128>}, {pipeline_mode = #tpu.pipeline_mode<synchronous>, transform_indices = @transform_6, window_bounds = array<i64: 1, 128>}, {pipeline_mode = #tpu.pipeline_mode<synchronous>, transform_indices = @transform_7, window_bounds = array<i64: 128, 128>}, {pipeline_mode = #tpu.pipeline_mode<synchronous>, transform_indices = @transform_8, window_bounds = array<i64: 1, 128>}, {pipeline_mode = #tpu.pipeline_mode<synchronous>, transform_indices = @transform_9, window_bounds = array<i64: 128, 16>}, {pipeline_mode = #tpu.pipeline_mode<synchronous>, transform_indices = @transform_10, window_bounds = array<i64: 1, 16>}, {pipeline_mode = #tpu.pipeline_mode<synchronous>, transform_indices = @transform_11, window_bounds = array<i64: 128, 16>}, {pipeline_mode = #tpu.pipeline_mode<synchronous>, transform_indices = @transform_12, window_bounds = array<i64: 1, 16>}, {pipeline_mode = #tpu.pipeline_mode<synchronous>, transform_indices = @transform_13, window_bounds = array<i64: 128, 128>}, {pipeline_mode = #tpu.pipeline_mode<synchronous>, transform_indices = @transform_14, window_bounds = array<i64: 16, 128>}, {pipeline_mode = #tpu.pipeline_mode<synchronous>, transform_indices = @transform_15, window_bounds = array<i64: 1, 128>}, {pipeline_mode = #tpu.pipeline_mode<synchronous>, transform_indices = @transform_16, window_bounds = array<i64: 1, 128>}, {pipeline_mode = #tpu.pipeline_mode<synchronous>, transform_indices = @transform_17, window_bounds = array<i64: 128, 128>}, {pipeline_mode = #tpu.pipeline_mode<synchronous>, transform_indices = @transform_18, window_bounds = array<i64: 1, 128>}, {pipeline_mode = #tpu.pipeline_mode<synchronous>, transform_indices = @transform_19, window_bounds = array<i64: 128, 4>}, {pipeline_mode = #tpu.pipeline_mode<synchronous>, transform_indices = @transform_20, window_bounds = array<i64: 1, 4>}, {transform_indices = @transform_21, window_bounds = array<i64: 32, 16>}, {transform_indices = @transform_22, window_bounds = array<i64: 32, 16>}, {transform_indices = @transform_23, window_bounds = array<i64: 32, 4>}]} {
    %c0 = arith.constant 0 : index
    %c0_0 = arith.constant 0 : index
    %0 = vector.load %arg1[%c0, %c0_0] : memref<32x128xf32, #tpu.memory_space<vmem>>, vector<32x128xf32>
    %c0_1 = arith.constant 0 : index
    %c0_2 = arith.constant 0 : index
    %1 = vector.load %arg5[%c0_1, %c0_2] : memref<128x128xf32, #tpu.memory_space<vmem>>, vector<128x128xf32>
    %cst = arith.constant dense<0.000000e+00> : vector<32x128xf32>
    %2 = tpu.matmul %0, %1, %cst {dimension_numbers = #tpu.dot_dimension_numbers<[1], [0], [0], [1], [0, 0, 1, 1], [], []>} : vector<32x128xf32>, vector<128x128xf32>, vector<32x128xf32> -> vector<32x128xf32>
    %c0_3 = arith.constant 0 : index
    %c0_4 = arith.constant 0 : index
    %3 = vector.load %arg2[%c0_3, %c0_4] : memref<32x16xf32, #tpu.memory_space<vmem>>, vector<32x16xf32>
    %c0_5 = arith.constant 0 : index
    %c0_6 = arith.constant 0 : index
    %4 = vector.load %arg6[%c0_5, %c0_6] : memref<16x128xf32, #tpu.memory_space<vmem>>, vector<16x128xf32>
    %cst_7 = arith.constant dense<0.000000e+00> : vector<32x128xf32>
    %5 = tpu.matmul %3, %4, %cst_7 {dimension_numbers = #tpu.dot_dimension_numbers<[1], [0], [0], [1], [0, 0, 1, 1], [], []>} : vector<32x16xf32>, vector<16x128xf32>, vector<32x128xf32> -> vector<32x128xf32>
    %6 = arith.addf %2, %5 : vector<32x128xf32>
    %c0_8 = arith.constant 0 : index
    %c0_9 = arith.constant 0 : index
    %7 = vector.load %arg7[%c0_8, %c0_9] : memref<1x128xf32, #tpu.memory_space<vmem>>, vector<1x128xf32>
    %8 = vector.broadcast %7 : vector<1x128xf32> to vector<32x128xf32>
    %9 = arith.addf %6, %8 : vector<32x128xf32>
    %10 = math.tanh %9 : vector<32x128xf32>
    %c0_10 = arith.constant 0 : index
    %c0_11 = arith.constant 0 : index
    %11 = vector.load %arg8[%c0_10, %c0_11] : memref<128x128xf32, #tpu.memory_space<vmem>>, vector<128x128xf32>
    %cst_12 = arith.constant dense<0.000000e+00> : vector<32x128xf32>
    %12 = tpu.matmul %10, %11, %cst_12 {dimension_numbers = #tpu.dot_dimension_numbers<[1], [0], [0], [1], [0, 0, 1, 1], [], []>} : vector<32x128xf32>, vector<128x128xf32>, vector<32x128xf32> -> vector<32x128xf32>
    %c0_13 = arith.constant 0 : index
    %c0_14 = arith.constant 0 : index
    %13 = vector.load %arg9[%c0_13, %c0_14] : memref<1x128xf32, #tpu.memory_space<vmem>>, vector<1x128xf32>
    %14 = vector.broadcast %13 : vector<1x128xf32> to vector<32x128xf32>
    %15 = arith.addf %12, %14 : vector<32x128xf32>
    %16 = math.tanh %15 : vector<32x128xf32>
    %c0_15 = arith.constant 0 : index
    %c0_16 = arith.constant 0 : index
    %17 = vector.load %arg10[%c0_15, %c0_16] : memref<128x16xf32, #tpu.memory_space<vmem>>, vector<128x16xf32>
    %cst_17 = arith.constant dense<0.000000e+00> : vector<32x16xf32>
    %18 = tpu.matmul %16, %17, %cst_17 {dimension_numbers = #tpu.dot_dimension_numbers<[1], [0], [0], [1], [0, 0, 1, 1], [], []>} : vector<32x128xf32>, vector<128x16xf32>, vector<32x16xf32> -> vector<32x16xf32>
    %c0_18 = arith.constant 0 : index
    %c0_19 = arith.constant 0 : index
    %19 = vector.load %arg11[%c0_18, %c0_19] : memref<1x16xf32, #tpu.memory_space<vmem>>, vector<1x16xf32>
    %20 = vector.broadcast %19 : vector<1x16xf32> to vector<32x16xf32>
    %21 = arith.addf %18, %20 : vector<32x16xf32>
    %c0_20 = arith.constant 0 : index
    %c0_21 = arith.constant 0 : index
    %22 = vector.load %arg22[%c0_20, %c0_21] : memref<32x16xf32, #tpu.memory_space<vmem>>, vector<32x16xf32>
    tpu.vector_store %arg22[%c0_20, %c0_21], %21 {strides = array<i32>} : memref<32x16xf32, #tpu.memory_space<vmem>>, vector<32x16xf32>,
    %c0_22 = arith.constant 0 : index
    %c0_23 = arith.constant 0 : index
    %23 = vector.load %arg12[%c0_22, %c0_23] : memref<128x16xf32, #tpu.memory_space<vmem>>, vector<128x16xf32>
    %cst_24 = arith.constant dense<0.000000e+00> : vector<32x16xf32>
    %24 = tpu.matmul %16, %23, %cst_24 {dimension_numbers = #tpu.dot_dimension_numbers<[1], [0], [0], [1], [0, 0, 1, 1], [], []>} : vector<32x128xf32>, vector<128x16xf32>, vector<32x16xf32> -> vector<32x16xf32>
    %c0_25 = arith.constant 0 : index
    %c0_26 = arith.constant 0 : index
    %25 = vector.load %arg13[%c0_25, %c0_26] : memref<1x16xf32, #tpu.memory_space<vmem>>, vector<1x16xf32>
    %26 = vector.broadcast %25 : vector<1x16xf32> to vector<32x16xf32>
    %27 = arith.addf %24, %26 : vector<32x16xf32>
    %c0_27 = arith.constant 0 : index
    %c0_28 = arith.constant 0 : index
    %28 = vector.load %arg23[%c0_27, %c0_28] : memref<32x16xf32, #tpu.memory_space<vmem>>, vector<32x16xf32>
    tpu.vector_store %arg23[%c0_27, %c0_28], %27 {strides = array<i32>} : memref<32x16xf32, #tpu.memory_space<vmem>>, vector<32x16xf32>,
    %c0_29 = arith.constant 0 : index
    %c0_30 = arith.constant 0 : index
    %29 = vector.load %arg14[%c0_29, %c0_30] : memref<128x128xf32, #tpu.memory_space<vmem>>, vector<128x128xf32>
    %cst_31 = arith.constant dense<0.000000e+00> : vector<32x128xf32>
    %30 = tpu.matmul %0, %29, %cst_31 {dimension_numbers = #tpu.dot_dimension_numbers<[1], [0], [0], [1], [0, 0, 1, 1], [], []>} : vector<32x128xf32>, vector<128x128xf32>, vector<32x128xf32> -> vector<32x128xf32>
    %c0_32 = arith.constant 0 : index
    %c0_33 = arith.constant 0 : index
    %31 = vector.load %arg3[%c0_32, %c0_33] : memref<32x16xf32, #tpu.memory_space<vmem>>, vector<32x16xf32>
    %c0_34 = arith.constant 0 : index
    %c0_35 = arith.constant 0 : index
    %32 = vector.load %arg15[%c0_34, %c0_35] : memref<16x128xf32, #tpu.memory_space<vmem>>, vector<16x128xf32>
    %cst_36 = arith.constant dense<0.000000e+00> : vector<32x128xf32>
    %33 = tpu.matmul %31, %32, %cst_36 {dimension_numbers = #tpu.dot_dimension_numbers<[1], [0], [0], [1], [0, 0, 1, 1], [], []>} : vector<32x16xf32>, vector<16x128xf32>, vector<32x128xf32> -> vector<32x128xf32>
    %34 = arith.addf %30, %33 : vector<32x128xf32>
    %c0_37 = arith.constant 0 : index
    %c0_38 = arith.constant 0 : index
    %35 = vector.load %arg4[%c0_37, %c0_38] : memref<32x1xf32, #tpu.memory_space<vmem>>, vector<32x1xf32>
    %c0_39 = arith.constant 0 : index
    %c0_40 = arith.constant 0 : index
    %36 = vector.load %arg16[%c0_39, %c0_40] : memref<1x128xf32, #tpu.memory_space<vmem>>, vector<1x128xf32>
    %37 = vector.broadcast %35 : vector<32x1xf32> to vector<32x128xf32>
    %38 = vector.broadcast %36 : vector<1x128xf32> to vector<32x128xf32>
    %39 = arith.mulf %37, %38 : vector<32x128xf32>
    %40 = arith.addf %34, %39 : vector<32x128xf32>
    %c0_41 = arith.constant 0 : index
    %c0_42 = arith.constant 0 : index
    %41 = vector.load %arg17[%c0_41, %c0_42] : memref<1x128xf32, #tpu.memory_space<vmem>>, vector<1x128xf32>
    %42 = vector.broadcast %41 : vector<1x128xf32> to vector<32x128xf32>
    %43 = arith.addf %40, %42 : vector<32x128xf32>
    %44 = math.tanh %43 : vector<32x128xf32>
    %c0_43 = arith.constant 0 : index
    %c0_44 = arith.constant 0 : index
    %45 = vector.load %arg18[%c0_43, %c0_44] : memref<128x128xf32, #tpu.memory_space<vmem>>, vector<128x128xf32>
    %cst_45 = arith.constant dense<0.000000e+00> : vector<32x128xf32>
    %46 = tpu.matmul %44, %45, %cst_45 {dimension_numbers = #tpu.dot_dimension_numbers<[1], [0], [0], [1], [0, 0, 1, 1], [], []>} : vector<32x128xf32>, vector<128x128xf32>, vector<32x128xf32> -> vector<32x128xf32>
    %c0_46 = arith.constant 0 : index
    %c0_47 = arith.constant 0 : index
    %47 = vector.load %arg19[%c0_46, %c0_47] : memref<1x128xf32, #tpu.memory_space<vmem>>, vector<1x128xf32>
    %48 = vector.broadcast %47 : vector<1x128xf32> to vector<32x128xf32>
    %49 = arith.addf %46, %48 : vector<32x128xf32>
    %50 = math.tanh %49 : vector<32x128xf32>
    %c0_48 = arith.constant 0 : index
    %c0_49 = arith.constant 0 : index
    %51 = vector.load %arg20[%c0_48, %c0_49] : memref<128x4xf32, #tpu.memory_space<vmem>>, vector<128x4xf32>
    %cst_50 = arith.constant dense<0.000000e+00> : vector<32x4xf32>
    %52 = tpu.matmul %50, %51, %cst_50 {dimension_numbers = #tpu.dot_dimension_numbers<[1], [0], [0], [1], [0, 0, 1, 1], [], []>} : vector<32x128xf32>, vector<128x4xf32>, vector<32x4xf32> -> vector<32x4xf32>
    %c0_51 = arith.constant 0 : index
    %c0_52 = arith.constant 0 : index
    %53 = vector.load %arg21[%c0_51, %c0_52] : memref<1x4xf32, #tpu.memory_space<vmem>>, vector<1x4xf32>
    %54 = vector.broadcast %53 : vector<1x4xf32> to vector<32x4xf32>
    %55 = arith.addf %52, %54 : vector<32x4xf32>
    %c0_53 = arith.constant 0 : index
    %c0_54 = arith.constant 0 : index
    %56 = vector.load %arg24[%c0_53, %c0_54] : memref<32x4xf32, #tpu.memory_space<vmem>>, vector<32x4xf32>
    tpu.vector_store %arg24[%c0_53, %c0_54], %55 {strides = array<i32>} : memref<32x4xf32, #tpu.memory_space<vmem>>, vector<32x4xf32>,
    return
  }
  func.func @transform_0(%arg0: i32) -> (i32, i32) {
    %c0_i32 = arith.constant 0 : i32
    %c0_i32_0 = arith.constant 0 : i32
    return %arg0, %c0_i32 : i32, i32
  }
  func.func @transform_1(%arg0: i32) -> (i32, i32) {
    %c0_i32 = arith.constant 0 : i32
    %c0_i32_0 = arith.constant 0 : i32
    return %arg0, %c0_i32 : i32, i32
  }
  func.func @transform_2(%arg0: i32) -> (i32, i32) {
    %c0_i32 = arith.constant 0 : i32
    %c0_i32_0 = arith.constant 0 : i32
    return %arg0, %c0_i32 : i32, i32
  }
  func.func @transform_3(%arg0: i32) -> (i32, i32) {
    %c0_i32 = arith.constant 0 : i32
    %c0_i32_0 = arith.constant 0 : i32
    return %arg0, %c0_i32 : i32, i32
  }
  func.func @transform_4(%arg0: i32) -> (i32, i32) {
    %c0_i32 = arith.constant 0 : i32
    %c0_i32_0 = arith.constant 0 : i32
    %c0_i32_1 = arith.constant 0 : i32
    return %c0_i32, %c0_i32_0 : i32, i32
  }
  func.func @transform_5(%arg0: i32) -> (i32, i32) {
    %c0_i32 = arith.constant 0 : i32
    %c0_i32_0 = arith.constant 0 : i32
    %c0_i32_1 = arith.constant 0 : i32
    return %c0_i32, %c0_i32_0 : i32, i32
  }
  func.func @transform_6(%arg0: i32) -> (i32, i32) {
    %c0_i32 = arith.constant 0 : i32
    %c0_i32_0 = arith.constant 0 : i32
    %c0_i32_1 = arith.constant 0 : i32
    return %c0_i32, %c0_i32_0 : i32, i32
  }
  func.func @transform_7(%arg0: i32) -> (i32, i32) {
    %c0_i32 = arith.constant 0 : i32
    %c0_i32_0 = arith.constant 0 : i32
    %c0_i32_1 = arith.constant 0 : i32
    return %c0_i32, %c0_i32_0 : i32, i32
  }
  func.func @transform_8(%arg0: i32) -> (i32, i32) {
    %c0_i32 = arith.constant 0 : i32
    %c0_i32_0 = arith.constant 0 : i32
    %c0_i32_1 = arith.constant 0 : i32
    return %c0_i32, %c0_i32_0 : i32, i32
  }
  func.func @transform_9(%arg0: i32) -> (i32, i32) {
    %c0_i32 = arith.constant 0 : i32
    %c0_i32_0 = arith.constant 0 : i32
    %c0_i32_1 = arith.constant 0 : i32
    return %c0_i32, %c0_i32_0 : i32, i32
  }
  func.func @transform_10(%arg0: i32) -> (i32, i32) {
    %c0_i32 = arith.constant 0 : i32
    %c0_i32_0 = arith.constant 0 : i32
    %c0_i32_1 = arith.constant 0 : i32
    return %c0_i32, %c0_i32_0 : i32, i32
  }
  func.func @transform_11(%arg0: i32) -> (i32, i32) {
    %c0_i32 = arith.constant 0 : i32
    %c0_i32_0 = arith.constant 0 : i32
    %c0_i32_1 = arith.constant 0 : i32
    return %c0_i32, %c0_i32_0 : i32, i32
  }
  func.func @transform_12(%arg0: i32) -> (i32, i32) {
    %c0_i32 = arith.constant 0 : i32
    %c0_i32_0 = arith.constant 0 : i32
    %c0_i32_1 = arith.constant 0 : i32
    return %c0_i32, %c0_i32_0 : i32, i32
  }
  func.func @transform_13(%arg0: i32) -> (i32, i32) {
    %c0_i32 = arith.constant 0 : i32
    %c0_i32_0 = arith.constant 0 : i32
    %c0_i32_1 = arith.constant 0 : i32
    return %c0_i32, %c0_i32_0 : i32, i32
  }
  func.func @transform_14(%arg0: i32) -> (i32, i32) {
    %c0_i32 = arith.constant 0 : i32
    %c0_i32_0 = arith.constant 0 : i32
    %c0_i32_1 = arith.constant 0 : i32
    return %c0_i32, %c0_i32_0 : i32, i32
  }
  func.func @transform_15(%arg0: i32) -> (i32, i32) {
    %c0_i32 = arith.constant 0 : i32
    %c0_i32_0 = arith.constant 0 : i32
    %c0_i32_1 = arith.constant 0 : i32
    return %c0_i32, %c0_i32_0 : i32, i32
  }
  func.func @transform_16(%arg0: i32) -> (i32, i32) {
    %c0_i32 = arith.constant 0 : i32
    %c0_i32_0 = arith.constant 0 : i32
    %c0_i32_1 = arith.constant 0 : i32
    return %c0_i32, %c0_i32_0 : i32, i32
  }
  func.func @transform_17(%arg0: i32) -> (i32, i32) {
    %c0_i32 = arith.constant 0 : i32
    %c0_i32_0 = arith.constant 0 : i32
    %c0_i32_1 = arith.constant 0 : i32
    return %c0_i32, %c0_i32_0 : i32, i32
  }
  func.func @transform_18(%arg0: i32) -> (i32, i32) {
    %c0_i32 = arith.constant 0 : i32
    %c0_i32_0 = arith.constant 0 : i32
    %c0_i32_1 = arith.constant 0 : i32
    return %c0_i32, %c0_i32_0 : i32, i32
  }
  func.func @transform_19(%arg0: i32) -> (i32, i32) {
    %c0_i32 = arith.constant 0 : i32
    %c0_i32_0 = arith.constant 0 : i32
    %c0_i32_1 = arith.constant 0 : i32
    return %c0_i32, %c0_i32_0 : i32, i32
  }
  func.func @transform_20(%arg0: i32) -> (i32, i32) {
    %c0_i32 = arith.constant 0 : i32
    %c0_i32_0 = arith.constant 0 : i32
    %c0_i32_1 = arith.constant 0 : i32
    return %c0_i32, %c0_i32_0 : i32, i32
  }
  func.func @transform_21(%arg0: i32) -> (i32, i32) {
    %c0_i32 = arith.constant 0 : i32
    %c0_i32_0 = arith.constant 0 : i32
    return %arg0, %c0_i32 : i32, i32
  }
  func.func @transform_22(%arg0: i32) -> (i32, i32) {
    %c0_i32 = arith.constant 0 : i32
    %c0_i32_0 = arith.constant 0 : i32
    return %arg0, %c0_i32 : i32, i32
  }
  func.func @transform_23(%arg0: i32) -> (i32, i32) {
    %c0_i32 = arith.constant 0 : i32
    %c0_i32_0 = arith.constant 0 : i32
    return %arg0, %c0_i32 : i32, i32
  }
}

</mosaic_0001>

<llo_original>
// kernel: srnn_forward.7
$region0: #{srnn_forward.7}
  #allocation0 [shape = 'u32[]', space=smem, size = 0x4, offset = 0x4, fixed_abs, tag = 'smem constant byte address 0x4 - core index']
  #allocation1 [shape = 'u32[144,128]{1,0:T(1,128)}', space=vmem, size = 0x12000, scoped, tag = 'internal scratch']
  %s0 = inlined_call_operand.vmem [shape: f32[32,4], index: 0, kind: input, shape index: {}]
  %s1 = inlined_call_operand.vmem [shape: f32[4,512], index: 1, kind: input, shape index: {}]
  %s2 = inlined_call_operand.hbm [shape: f32[1,512], index: 2, kind: input, shape index: {}]
  %s3 = inlined_call_operand.vmem [shape: f32[32,512], index: 3, kind: output, shape index: {}]
  %s4 = sld [smem:[#allocation0]]
  $region26: #{srnn_forward.7} parent=0
    _
  %s6 = ssub.s32 1, %s4
  %s7 = scalar_select 0, %s6, %s4
  $region1: #{srnn_forward.7} parent=0
    #allocation2 [shape = 'u8[2048]{0}', space=vmem, size = 0x800, scoped, tag = 'input window, operand 2, single buffered']
    #allocation3 [shape = 's32[1]{0}', space=sflag, size = 0x4, scoped, tag = 'scoped memory for srnn_forward.7']
    %8 = vsyncpa [#allocation3], 0
    // Predicated region
    $region2: #{srnn_forward.7} parent=1 // pred_check
      _
    $region3: #{srnn_forward.7} parent=1 // pred_check_branch
      %10 = sbr.rel (0) target = $region5
    $region4: #{srnn_forward.7} parent=1 // pred_region
      _
    $region5: #{srnn_forward.7} parent=1 // pred_fallthru
      _
    // Predicated region
    $region6: #{srnn_forward.7} parent=1 // pred_check
      _
    $region7: #{srnn_forward.7} parent=1 // pred_check_branch
      %12 = sbr.rel (0) target = $region9
    $region8: #{srnn_forward.7} parent=1 // pred_region
      _
    $region9: #{srnn_forward.7} parent=1 // pred_fallthru
      _
    // Predicated region
    $region10: #{srnn_forward.7} parent=1 // pred_check
      _
    $region11: #{srnn_forward.7} parent=1 // pred_check_branch
      %14 = sbr.rel (0) target = $region13
    $region12: #{srnn_forward.7} parent=1 // pred_region
      %s16 = ssub.s32 64, 64
      %17 = vsyncadd [#allocation3], %s16
      %s19 = sshll.u32 [#allocation2], 4
      %s20 = int_to_ptr.vmem [resolvable:$true] %s19
      %22 = dma.hbm_to_vmem [thread:$0]  %s2, 64, %s20, [#allocation3]
    $region13: #{srnn_forward.7} parent=1 // pred_fallthru
      _
    // Predicated region
    $region14: #{srnn_forward.7} parent=1 // pred_check
      _
    $region15: #{srnn_forward.7} parent=1 // pred_check_branch
      %24 = sbr.rel (0) target = $region17
    $region16: #{srnn_forward.7} parent=1 // pred_region
      %25 = dma.done [#allocation3], 64
    $region17: #{srnn_forward.7} parent=1 // pred_fallthru
      _
    %v26 = vld [vmem:[%s0] sm:$0xff]
    %v27 = vld [vmem:[%s0 + $0x8] sm:$0xff]
    %v28 = vld [vmem:[%s0 + $0x10] sm:$0xff]
    %v29 = vld [vmem:[%s0 + $0x18] sm:$0xff]
    %v30 = vld [vmem:[%s1] sm:$0xff]
    %v31 = vld [vmem:[%s1 + $0x8] sm:$0xff]
    %v32 = vld [vmem:[#allocation2] sm:$0xf]
    %v34 = vlaneseq
    %v35 = vshrl.u32 %v34, 7
    %v36 = vsub.s32 0, %v35
    %v37 = vrot.slane %v32, %v36
    %v38 = vlaneseq
    %v39 = vshrl.u32 %v38, 7
    %v40 = vsub.s32 1, %v39
    %v41 = vrot.slane %v32, %v40
    %v42 = vlaneseq
    %v43 = vshrl.u32 %v42, 7
    %v44 = vsub.s32 2, %v43
    %v45 = vrot.slane %v32, %v44
    %v46 = vlaneseq
    %v47 = vshrl.u32 %v46, 7
    %v48 = vsub.s32 3, %v47
    %v49 = vrot.slane %v32, %v48
    %v56 = vcombine.high %v30, %v30
    %v57 = vcombine.high %v31, %v31
    %vm58 = vcmask 31744
    %v60 = vsel %vm58, %v26, 0
    %v63 = vsel %vm58, %v27, 0
    %v66 = vsel %vm58, %v28, 0
    %v69 = vsel %vm58, %v29, 0
    %vm71 = vcmask 1043456
    %v72 = vsel %vm71, %v30, 0
    %v74 = vsel %vm71, %v56, 0
    %v76 = vsel %vm71, %v31, 0
    %v78 = vsel %vm71, %v57, 0
    %80 = vmatprep.subr.mxu0 %v74
    %81 = vmatpush1.msra.mxu0 %v72
    %82 = vmatprep.subr.mxu0 0.0
    %83 = vmatpush1.msra.mxu0 0.0
    %84 = vmatprep.subr.mxu0 0.0
    %85 = vmatpush1.msra.mxu0 0.0
    %86 = vmatprep.subr.mxu0 0.0
    %87 = vmatpush1.msra.mxu0 0.0
    %88 = vmatprep.subr.mxu0 0.0
    %89 = vmatpush1.msra.mxu0 0.0
    %90 = vmatprep.subr.mxu0 0.0
    %91 = vmatpush1.msra.mxu0 0.0
    %92 = vmatprep.subr.mxu0 0.0
    %93 = vmatpush1.msra.mxu0 0.0
    %94 = vmatprep.subr.mxu0 0.0
    %95 = vmatpush1.msra.mxu0 0.0
    %96 = vmatprep.subr.mxu0 0.0
    %97 = vmatpush1.msra.mxu0 0.0
    %98 = vmatprep.subr.mxu0 0.0
    %99 = vmatpush1.msra.mxu0 0.0
    %100 = vmatprep.subr.mxu0 0.0
    %101 = vmatpush1.msra.mxu0 0.0
    %102 = vmatprep.subr.mxu0 0.0
    %103 = vmatpush1.msra.mxu0 0.0
    %104 = vmatprep.subr.mxu0 0.0
    %105 = vmatpush1.msra.mxu0 0.0
    %106 = vmatprep.subr.mxu0 0.0
    %107 = vmatpush1.msra.mxu0 0.0
    %108 = vmatprep.subr.mxu0 0.0
    %109 = vmatpush1.msra.mxu0 0.0
    %110 = vmatprep.subr.mxu0 0.0
    %111 = vmatpush1.msra.mxu0 0.0
    %112 = vmatprep.subr.mxu0 0.0
    %113 = vmatpush1.msra.mxu0 0.0
    %114 = vmatprep.subr.mxu0 0.0
    %115 = vmatpush1.msra.mxu0 0.0
    %116 = vmatprep.subr.mxu0 0.0
    %117 = vmatpush1.msra.mxu0 0.0
    %118 = vmatprep.subr.mxu0 0.0
    %119 = vmatpush1.msra.mxu0 0.0
    %120 = vmatprep.subr.mxu0 0.0
    %121 = vmatpush1.msra.mxu0 0.0
    %122 = vmatprep.subr.mxu0 0.0
    %123 = vmatpush1.msra.mxu0 0.0
    %124 = vmatprep.subr.mxu0 0.0
    %125 = vmatpush1.msra.mxu0 0.0
    %126 = vmatprep.subr.mxu0 0.0
    %127 = vmatpush1.msra.mxu0 0.0
    %128 = vmatprep.subr.mxu0 0.0
    %129 = vmatpush1.msra.mxu0 0.0
    %130 = vmatprep.subr.mxu0 0.0
    %131 = vmatpush1.msra.mxu0 0.0
    %132 = vmatprep.subr.mxu0 0.0
    %133 = vmatpush1.msra.mxu0 0.0
    %134 = vmatprep.subr.mxu0 0.0
    %135 = vmatpush1.msra.mxu0 0.0
    %136 = vmatprep.subr.mxu0 0.0
    %137 = vmatpush1.msra.mxu0 0.0
    %138 = vmatprep.subr.mxu0 0.0
    %139 = vmatpush1.msra.mxu0 0.0
    %140 = vmatprep.subr.mxu0 0.0
    %141 = vmatpush1.msra.mxu0 0.0
    %142 = vmatprep.subr.mxu0 0.0
    %143 = vmatpush1.msra.mxu0 0.0
    %144 = vmatprep.mubr.f32.mxu0 0.0
    %145 = vmatmul.mubr.f32.gmra.mrb[0].mxu0 %v60
    %v146 = vpop.f32.mrb[0].mxu0
    %v147 = vadd.f32 %v37, %v146
    %v148 = vpop.f32.mrb[0].mxu0
    %v149 = vadd.f32 %v41, %v148
    %150 = vmatprep.mubr.f32.mxu0 0.0
    %151 = vmatmul.mubr.f32.gmra.mrb[0].mxu0 %v63
    %v152 = vpop.f32.mrb[0].mxu0
    %v153 = vadd.f32 %v37, %v152
    %v154 = vpop.f32.mrb[0].mxu0
    %v155 = vadd.f32 %v41, %v154
    %156 = vmatprep.mubr.f32.mxu0 0.0
    %157 = vmatmul.mubr.f32.gmra.mrb[0].mxu0 %v66
    %v158 = vpop.f32.mrb[0].mxu0
    %v159 = vadd.f32 %v37, %v158
    %v160 = vpop.f32.mrb[0].mxu0
    %v161 = vadd.f32 %v41, %v160
    %162 = vmatprep.mubr.f32.mxu0 0.0
    %163 = vmatmul.mubr.f32.gmra.mrb[0].mxu0 %v69
    %v164 = vpop.f32.mrb[0].mxu0
    %v165 = vadd.f32 %v37, %v164
    %v166 = vpop.f32.mrb[0].mxu0
    %v167 = vadd.f32 %v41, %v166
    %168 = vdwg.mxu0
    %169 = vmatprep.subr.mxu0 %v78
    %170 = vmatpush1.msra.mxu0 %v76
    %171 = vmatprep.subr.mxu0 0.0
    %172 = vmatpush1.msra.mxu0 0.0
    %173 = vmatprep.subr.mxu0 0.0
    %174 = vmatpush1.msra.mxu0 0.0
    %175 = vmatprep.subr.mxu0 0.0
    %176 = vmatpush1.msra.mxu0 0.0
    %177 = vmatprep.subr.mxu0 0.0
    %178 = vmatpush1.msra.mxu0 0.0
    %179 = vmatprep.subr.mxu0 0.0
    %180 = vmatpush1.msra.mxu0 0.0
    %181 = vmatprep.subr.mxu0 0.0
    %182 = vmatpush1.msra.mxu0 0.0
    %183 = vmatprep.subr.mxu0 0.0
    %184 = vmatpush1.msra.mxu0 0.0
    %185 = vmatprep.subr.mxu0 0.0
    %186 = vmatpush1.msra.mxu0 0.0
    %187 = vmatprep.subr.mxu0 0.0
    %188 = vmatpush1.msra.mxu0 0.0
    %189 = vmatprep.subr.mxu0 0.0
    %190 = vmatpush1.msra.mxu0 0.0
    %191 = vmatprep.subr.mxu0 0.0
    %192 = vmatpush1.msra.mxu0 0.0
    %193 = vmatprep.subr.mxu0 0.0
    %194 = vmatpush1.msra.mxu0 0.0
    %195 = vmatprep.subr.mxu0 0.0
    %196 = vmatpush1.msra.mxu0 0.0
    %197 = vmatprep.subr.mxu0 0.0
    %198 = vmatpush1.msra.mxu0 0.0
    %199 = vmatprep.subr.mxu0 0.0
    %200 = vmatpush1.msra.mxu0 0.0
    %201 = vmatprep.subr.mxu0 0.0
    %202 = vmatpush1.msra.mxu0 0.0
    %203 = vmatprep.subr.mxu0 0.0
    %204 = vmatpush1.msra.mxu0 0.0
    %205 = vmatprep.subr.mxu0 0.0
    %206 = vmatpush1.msra.mxu0 0.0
    %207 = vmatprep.subr.mxu0 0.0
    %208 = vmatpush1.msra.mxu0 0.0
    %209 = vmatprep.subr.mxu0 0.0
    %210 = vmatpush1.msra.mxu0 0.0
    %211 = vmatprep.subr.mxu0 0.0
    %212 = vmatpush1.msra.mxu0 0.0
    %213 = vmatprep.subr.mxu0 0.0
    %214 = vmatpush1.msra.mxu0 0.0
    %215 = vmatprep.subr.mxu0 0.0
    %216 = vmatpush1.msra.mxu0 0.0
    %217 = vmatprep.subr.mxu0 0.0
    %218 = vmatpush1.msra.mxu0 0.0
    %219 = vmatprep.subr.mxu0 0.0
    %220 = vmatpush1.msra.mxu0 0.0
    %221 = vmatprep.subr.mxu0 0.0
    %222 = vmatpush1.msra.mxu0 0.0
    %223 = vmatprep.subr.mxu0 0.0
    %224 = vmatpush1.msra.mxu0 0.0
    %225 = vmatprep.subr.mxu0 0.0
    %226 = vmatpush1.msra.mxu0 0.0
    %227 = vmatprep.subr.mxu0 0.0
    %228 = vmatpush1.msra.mxu0 0.0
    %229 = vmatprep.subr.mxu0 0.0
    %230 = vmatpush1.msra.mxu0 0.0
    %231 = vmatprep.subr.mxu0 0.0
    %232 = vmatpush1.msra.mxu0 0.0
    %233 = vmatprep.mubr.f32.mxu0 0.0
    %234 = vmatmul.mubr.f32.gmra.mrb[0].mxu0 %v60
    %v235 = vpop.f32.mrb[0].mxu0
    %v236 = vadd.f32 %v45, %v235
    %v237 = vpop.f32.mrb[0].mxu0
    %v238 = vadd.f32 %v49, %v237
    %239 = vmatprep.mubr.f32.mxu0 0.0
    %240 = vmatmul.mubr.f32.gmra.mrb[0].mxu0 %v63
    %v241 = vpop.f32.mrb[0].mxu0
    %v242 = vadd.f32 %v45, %v241
    %v243 = vpop.f32.mrb[0].mxu0
    %v244 = vadd.f32 %v49, %v243
    %245 = vmatprep.mubr.f32.mxu0 0.0
    %246 = vmatmul.mubr.f32.gmra.mrb[0].mxu0 %v66
    %v247 = vpop.f32.mrb[0].mxu0
    %v248 = vadd.f32 %v45, %v247
    %v249 = vpop.f32.mrb[0].mxu0
    %v250 = vadd.f32 %v49, %v249
    %251 = vmatprep.mubr.f32.mxu0 0.0
    %252 = vmatmul.mubr.f32.gmra.mrb[0].mxu0 %v69
    %v253 = vpop.f32.mrb[0].mxu0
    %v254 = vadd.f32 %v45, %v253
    %v255 = vpop.f32.mrb[0].mxu0
    %v256 = vadd.f32 %v49, %v255
    %257 = vdwg.mxu0
    %258 = vst [vmem:[%s3] sm:$0xff] %v147
    %259 = vst [vmem:[%s3 + $0x8] sm:$0xff] %v149
    %260 = vst [vmem:[%s3 + $0x10] sm:$0xff] %v236
    %261 = vst [vmem:[%s3 + $0x18] sm:$0xff] %v238
    %262 = vst [vmem:[%s3 + $0x20] sm:$0xff] %v153
    %263 = vst [vmem:[%s3 + $0x28] sm:$0xff] %v155
    %264 = vst [vmem:[%s3 + $0x30] sm:$0xff] %v242
    %265 = vst [vmem:[%s3 + $0x38] sm:$0xff] %v244
    %266 = vst [vmem:[%s3 + $0x40] sm:$0xff] %v159
    %267 = vst [vmem:[%s3 + $0x48] sm:$0xff] %v161
    %268 = vst [vmem:[%s3 + $0x50] sm:$0xff] %v248
    %269 = vst [vmem:[%s3 + $0x58] sm:$0xff] %v250
    %270 = vst [vmem:[%s3 + $0x60] sm:$0xff] %v165
    %271 = vst [vmem:[%s3 + $0x68] sm:$0xff] %v167
    %272 = vst [vmem:[%s3 + $0x70] sm:$0xff] %v254
    %273 = vst [vmem:[%s3 + $0x78] sm:$0xff] %v256
    // Predicated region
    $region18: #{srnn_forward.7} parent=1 // pred_check
      _
    $region19: #{srnn_forward.7} parent=1 // pred_check_branch
      %275 = sbr.rel (0) target = $region21
    $region20: #{srnn_forward.7} parent=1 // pred_region
      _
    $region21: #{srnn_forward.7} parent=1 // pred_fallthru
      _
    // Predicated region
    $region22: #{srnn_forward.7} parent=1 // pred_check
      _
    $region23: #{srnn_forward.7} parent=1 // pred_check_branch
      %277 = sbr.rel (0) target = $region25
    $region24: #{srnn_forward.7} parent=1 // pred_region
      _
    $region25: #{srnn_forward.7} parent=1 // pred_fallthru
      _
    %278 = vsyncpa [#allocation3], 1

// kernel: srnn_forward.9
$region0: #{srnn_forward.9}
  #allocation0 [shape = 'u32[]', space=smem, size = 0x4, offset = 0x4, fixed_abs, tag = 'smem constant byte address 0x4 - core index']
  #allocation1 [shape = 'u32[144,128]{1,0:T(1,128)}', space=vmem, size = 0x12000, scoped, tag = 'internal scratch']
  %s0 = inlined_call_operand.vmem [shape: f32[32,128], index: 0, kind: input, shape index: {}]
  %s1 = inlined_call_operand.vmem [shape: f32[32,4], index: 1, kind: input, shape index: {}]
  %s2 = inlined_call_operand.vmem [shape: f32[128,512], index: 2, kind: input, shape index: {}]
  %s3 = inlined_call_operand.vmem [shape: f32[4,512], index: 3, kind: input, shape index: {}]
  %s4 = inlined_call_operand.vmem [shape: f32[1,512], index: 4, kind: input, shape index: {}]
  %s5 = inlined_call_operand.vmem [shape: f32[32,512], index: 5, kind: output, shape index: {}]
  %s6 = sld [smem:[#allocation0]]
  $region30: #{srnn_forward.9} parent=0
    _
  %s8 = ssub.s32 1, %s6
  %s9 = scalar_select 0, %s8, %s6
  // Predicated region
  $region2: #{srnn_forward.9} parent=0 // pred_check
    _
  $region3: #{srnn_forward.9} parent=0 // pred_check_branch
    %11 = sbr.rel (0) target = $region5
  $region4: #{srnn_forward.9} parent=0 // pred_region
    _
  $region5: #{srnn_forward.9} parent=0 // pred_fallthru
    _
  // Predicated region
  $region6: #{srnn_forward.9} parent=0 // pred_check
    _
  $region7: #{srnn_forward.9} parent=0 // pred_check_branch
    %13 = sbr.rel (0) target = $region9
  $region8: #{srnn_forward.9} parent=0 // pred_region
    _
  $region9: #{srnn_forward.9} parent=0 // pred_fallthru
    _
  // Predicated region
  $region10: #{srnn_forward.9} parent=0 // pred_check
    _
  $region11: #{srnn_forward.9} parent=0 // pred_check_branch
    %15 = sbr.rel (0) target = $region13
  $region12: #{srnn_forward.9} parent=0 // pred_region
    _
  $region13: #{srnn_forward.9} parent=0 // pred_fallthru
    _
  // Predicated region
  $region14: #{srnn_forward.9} parent=0 // pred_check
    _
  $region15: #{srnn_forward.9} parent=0 // pred_check_branch
    %17 = sbr.rel (0) target = $region17
  $region16: #{srnn_forward.9} parent=0 // pred_region
    _
  $region17: #{srnn_forward.9} parent=0 // pred_fallthru
    _
  // Predicated region
  $region18: #{srnn_forward.9} parent=0 // pred_check
    _
  $region19: #{srnn_forward.9} parent=0 // pred_check_branch
    %19 = sbr.rel (0) target = $region21
  $region20: #{srnn_forward.9} parent=0 // pred_region
    _
  $region21: #{srnn_forward.9} parent=0 // pred_fallthru
    _
  %v20 = vld [vmem:[%s0] sm:$0xff]
  %v21 = vld [vmem:[%s0 + $0x8] sm:$0xff]
  %v22 = vld [vmem:[%s0 + $0x10] sm:$0xff]
  %v23 = vld [vmem:[%s0 + $0x18] sm:$0xff]
  %v24 = vld [vmem:[%s2] sm:$0xff]
  %v25 = vld [vmem:[%s2 + $0x8] sm:$0xff]
  %v26 = vld [vmem:[%s2 + $0x10] sm:$0xff]
  %v27 = vld [vmem:[%s2 + $0x18] sm:$0xff]
  %v28 = vld [vmem:[%s2 + $0x20] sm:$0xff]
  %v29 = vld [vmem:[%s2 + $0x28] sm:$0xff]
  %v30 = vld [vmem:[%s2 + $0x30] sm:$0xff]
  %v31 = vld [vmem:[%s2 + $0x38] sm:$0xff]
  %v32 = vld [vmem:[%s2 + $0x40] sm:$0xff]
  %v33 = vld [vmem:[%s2 + $0x48] sm:$0xff]
  %v34 = vld [vmem:[%s2 + $0x50] sm:$0xff]
  %v35 = vld [vmem:[%s2 + $0x58] sm:$0xff]
  %v36 = vld [vmem:[%s2 + $0x60] sm:$0xff]
  %v37 = vld [vmem:[%s2 + $0x68] sm:$0xff]
  %v38 = vld [vmem:[%s2 + $0x70] sm:$0xff]
  %v39 = vld [vmem:[%s2 + $0x78] sm:$0xff]
  %v40 = vld [vmem:[%s2 + $0x80] sm:$0xff]
  %v41 = vld [vmem:[%s2 + $0x88] sm:$0xff]
  %v42 = vld [vmem:[%s2 + $0x90] sm:$0xff]
  %v43 = vld [vmem:[%s2 + $0x98] sm:$0xff]
  %v44 = vld [vmem:[%s2 + $0xa0] sm:$0xff]
  %v45 = vld [vmem:[%s2 + $0xa8] sm:$0xff]
  %v46 = vld [vmem:[%s2 + $0xb0] sm:$0xff]
  %v47 = vld [vmem:[%s2 + $0xb8] sm:$0xff]
  %v48 = vld [vmem:[%s2 + $0xc0] sm:$0xff]
  %v49 = vld [vmem:[%s2 + $0xc8] sm:$0xff]
  %v50 = vld [vmem:[%s2 + $0xd0] sm:$0xff]
  %v51 = vld [vmem:[%s2 + $0xd8] sm:$0xff]
  %v52 = vld [vmem:[%s2 + $0xe0] sm:$0xff]
  %v53 = vld [vmem:[%s2 + $0xe8] sm:$0xff]
  %v54 = vld [vmem:[%s2 + $0xf0] sm:$0xff]
  %v55 = vld [vmem:[%s2 + $0xf8] sm:$0xff]
  %v56 = vld [vmem:[%s2 + $0x100] sm:$0xff]
  %v57 = vld [vmem:[%s2 + $0x108] sm:$0xff]
  %v58 = vld [vmem:[%s2 + $0x110] sm:$0xff]
  %v59 = vld [vmem:[%s2 + $0x118] sm:$0xff]
  %v60 = vld [vmem:[%s2 + $0x120] sm:$0xff]
  %v61 = vld [vmem:[%s2 + $0x128] sm:$0xff]
  %v62 = vld [vmem:[%s2 + $0x130] sm:$0xff]
  %v63 = vld [vmem:[%s2 + $0x138] sm:$0xff]
  %v64 = vld [vmem:[%s2 + $0x140] sm:$0xff]
  %v65 = vld [vmem:[%s2 + $0x148] sm:$0xff]
  %v66 = vld [vmem:[%s2 + $0x150] sm:$0xff]
  %v67 = vld [vmem:[%s2 + $0x158] sm:$0xff]
  %v68 = vld [vmem:[%s2 + $0x160] sm:$0xff]
  %v69 = vld [vmem:[%s2 + $0x168] sm:$0xff]
  %v70 = vld [vmem:[%s2 + $0x170] sm:$0xff]
  %v71 = vld [vmem:[%s2 + $0x178] sm:$0xff]
  %v72 = vld [vmem:[%s2 + $0x180] sm:$0xff]
  %v73 = vld [vmem:[%s2 + $0x188] sm:$0xff]
  %v74 = vld [vmem:[%s2 + $0x190] sm:$0xff]
  %v75 = vld [vmem:[%s2 + $0x198] sm:$0xff]
  %v76 = vld [vmem:[%s2 + $0x1a0] sm:$0xff]
  %v77 = vld [vmem:[%s2 + $0x1a8] sm:$0xff]
  %v78 = vld [vmem:[%s2 + $0x1b0] sm:$0xff]
  %v79 = vld [vmem:[%s2 + $0x1b8] sm:$0xff]
  %v80 = vld [vmem:[%s2 + $0x1c0] sm:$0xff]
  %v81 = vld [vmem:[%s2 + $0x1c8] sm:$0xff]
  %v82 = vld [vmem:[%s2 + $0x1d0] sm:$0xff]
  %v83 = vld [vmem:[%s2 + $0x1d8] sm:$0xff]
  %v84 = vld [vmem:[%s2 + $0x1e0] sm:$0xff]
  %v85 = vld [vmem:[%s2 + $0x1e8] sm:$0xff]
  %v86 = vld [vmem:[%s2 + $0x1f0] sm:$0xff]
  %v87 = vld [vmem:[%s2 + $0x1f8] sm:$0xff]
  %v88 = vld [vmem:[%s1] sm:$0xff]
  %v89 = vld [vmem:[%s1 + $0x8] sm:$0xff]
  %v90 = vld [vmem:[%s1 + $0x10] sm:$0xff]
  %v91 = vld [vmem:[%s1 + $0x18] sm:$0xff]
  %v92 = vld [vmem:[%s3] sm:$0xff]
  %v93 = vld [vmem:[%s3 + $0x8] sm:$0xff]
  %v96 = vcombine.high %v92, %v92
  %v97 = vcombine.high %v93, %v93
  %vm98 = vcmask 31744
  %v100 = vsel %vm98, %v88, 0
  %v103 = vsel %vm98, %v89, 0
  %v106 = vsel %vm98, %v90, 0
  %v109 = vsel %vm98, %v91, 0
  %vm111 = vcmask 1043456
  %v112 = vsel %vm111, %v92, 0
  %v114 = vsel %vm111, %v96, 0
  %v116 = vsel %vm111, %v93, 0
  %v118 = vsel %vm111, %v97, 0
  %120 = vmatprep.subr.mxu0 %v114
  %121 = vmatpush1.msra.mxu0 %v112
  %122 = vmatprep.subr.mxu0 0.0
  %123 = vmatpush1.msra.mxu0 0.0
  %124 = vmatprep.subr.mxu0 0.0
  %125 = vmatpush1.msra.mxu0 0.0
  %126 = vmatprep.subr.mxu0 0.0
  %127 = vmatpush1.msra.mxu0 0.0
  %128 = vmatprep.subr.mxu0 0.0
  %129 = vmatpush1.msra.mxu0 0.0
  %130 = vmatprep.subr.mxu0 0.0
  %131 = vmatpush1.msra.mxu0 0.0
  %132 = vmatprep.subr.mxu0 0.0
  %133 = vmatpush1.msra.mxu0 0.0
  %134 = vmatprep.subr.mxu0 0.0
  %135 = vmatpush1.msra.mxu0 0.0
  %136 = vmatprep.subr.mxu0 0.0
  %137 = vmatpush1.msra.mxu0 0.0
  %138 = vmatprep.subr.mxu0 0.0
  %139 = vmatpush1.msra.mxu0 0.0
  %140 = vmatprep.subr.mxu0 0.0
  %141 = vmatpush1.msra.mxu0 0.0
  %142 = vmatprep.subr.mxu0 0.0
  %143 = vmatpush1.msra.mxu0 0.0
  %144 = vmatprep.subr.mxu0 0.0
  %145 = vmatpush1.msra.mxu0 0.0
  %146 = vmatprep.subr.mxu0 0.0
  %147 = vmatpush1.msra.mxu0 0.0
  %148 = vmatprep.subr.mxu0 0.0
  %149 = vmatpush1.msra.mxu0 0.0
  %150 = vmatprep.subr.mxu0 0.0
  %151 = vmatpush1.msra.mxu0 0.0
  %152 = vmatprep.subr.mxu0 0.0
  %153 = vmatpush1.msra.mxu0 0.0
  %154 = vmatprep.subr.mxu0 0.0
  %155 = vmatpush1.msra.mxu0 0.0
  %156 = vmatprep.subr.mxu0 0.0
  %157 = vmatpush1.msra.mxu0 0.0
  %158 = vmatprep.subr.mxu0 0.0
  %159 = vmatpush1.msra.mxu0 0.0
  %160 = vmatprep.subr.mxu0 0.0
  %161 = vmatpush1.msra.mxu0 0.0
  %162 = vmatprep.subr.mxu0 0.0
  %163 = vmatpush1.msra.mxu0 0.0
  %164 = vmatprep.subr.mxu0 0.0
  %165 = vmatpush1.msra.mxu0 0.0
  %166 = vmatprep.subr.mxu0 0.0
  %167 = vmatpush1.msra.mxu0 0.0
  %168 = vmatprep.subr.mxu0 0.0
  %169 = vmatpush1.msra.mxu0 0.0
  %170 = vmatprep.subr.mxu0 0.0
  %171 = vmatpush1.msra.mxu0 0.0
  %172 = vmatprep.subr.mxu0 0.0
  %173 = vmatpush1.msra.mxu0 0.0
  %174 = vmatprep.subr.mxu0 0.0
  %175 = vmatpush1.msra.mxu0 0.0
  %176 = vmatprep.subr.mxu0 0.0
  %177 = vmatpush1.msra.mxu0 0.0
  %178 = vmatprep.subr.mxu0 0.0
  %179 = vmatpush1.msra.mxu0 0.0
  %180 = vmatprep.subr.mxu0 0.0
  %181 = vmatpush1.msra.mxu0 0.0
  %182 = vmatprep.subr.mxu0 0.0
  %183 = vmatpush1.msra.mxu0 0.0
  %184 = vmatprep.mubr.f32.mxu0 0.0
  %185 = vmatmul.mubr.f32.gmra.mrb[0].mxu0 %v100
  %v186 = vpop.f32.mrb[0].mxu0
  %v187 = vadd.f32 0.0, %v186
  %v188 = vpop.f32.mrb[0].mxu0
  %v189 = vadd.f32 0.0, %v188
  %190 = vmatprep.mubr.f32.mxu0 0.0
  %191 = vmatmul.mubr.f32.gmra.mrb[0].mxu0 %v103
  %v192 = vpop.f32.mrb[0].mxu0
  %v193 = vadd.f32 0.0, %v192
  %v194 = vpop.f32.mrb[0].mxu0
  %v195 = vadd.f32 0.0, %v194
  %196 = vmatprep.mubr.f32.mxu0 0.0
  %197 = vmatmul.mubr.f32.gmra.mrb[0].mxu0 %v106
  %v198 = vpop.f32.mrb[0].mxu0
  %v199 = vadd.f32 0.0, %v198
  %v200 = vpop.f32.mrb[0].mxu0
  %v201 = vadd.f32 0.0, %v200
  %202 = vmatprep.mubr.f32.mxu0 0.0
  %203 = vmatmul.mubr.f32.gmra.mrb[0].mxu0 %v109
  %v204 = vpop.f32.mrb[0].mxu0
  %v205 = vadd.f32 0.0, %v204
  %v206 = vpop.f32.mrb[0].mxu0
  %v207 = vadd.f32 0.0, %v206
  %208 = vdwg.mxu0
  %209 = vmatprep.subr.mxu0 %v118
  %210 = vmatpush1.msra.mxu0 %v116
  %211 = vmatprep.subr.mxu0 0.0
  %212 = vmatpush1.msra.mxu0 0.0
  %213 = vmatprep.subr.mxu0 0.0
  %214 = vmatpush1.msra.mxu0 0.0
  %215 = vmatprep.subr.mxu0 0.0
  %216 = vmatpush1.msra.mxu0 0.0
  %217 = vmatprep.subr.mxu0 0.0
  %218 = vmatpush1.msra.mxu0 0.0
  %219 = vmatprep.subr.mxu0 0.0
  %220 = vmatpush1.msra.mxu0 0.0
  %221 = vmatprep.subr.mxu0 0.0
  %222 = vmatpush1.msra.mxu0 0.0
  %223 = vmatprep.subr.mxu0 0.0
  %224 = vmatpush1.msra.mxu0 0.0
  %225 = vmatprep.subr.mxu0 0.0
  %226 = vmatpush1.msra.mxu0 0.0
  %227 = vmatprep.subr.mxu0 0.0
  %228 = vmatpush1.msra.mxu0 0.0
  %229 = vmatprep.subr.mxu0 0.0
  %230 = vmatpush1.msra.mxu0 0.0
  %231 = vmatprep.subr.mxu0 0.0
  %232 = vmatpush1.msra.mxu0 0.0
  %233 = vmatprep.subr.mxu0 0.0
  %234 = vmatpush1.msra.mxu0 0.0
  %235 = vmatprep.subr.mxu0 0.0
  %236 = vmatpush1.msra.mxu0 0.0
  %237 = vmatprep.subr.mxu0 0.0
  %238 = vmatpush1.msra.mxu0 0.0
  %239 = vmatprep.subr.mxu0 0.0
  %240 = vmatpush1.msra.mxu0 0.0
  %241 = vmatprep.subr.mxu0 0.0
  %242 = vmatpush1.msra.mxu0 0.0
  %243 = vmatprep.subr.mxu0 0.0
  %244 = vmatpush1.msra.mxu0 0.0
  %245 = vmatprep.subr.mxu0 0.0
  %246 = vmatpush1.msra.mxu0 0.0
  %247 = vmatprep.subr.mxu0 0.0
  %248 = vmatpush1.msra.mxu0 0.0
  %249 = vmatprep.subr.mxu0 0.0
  %250 = vmatpush1.msra.mxu0 0.0
  %251 = vmatprep.subr.mxu0 0.0
  %252 = vmatpush1.msra.mxu0 0.0
  %253 = vmatprep.subr.mxu0 0.0
  %254 = vmatpush1.msra.mxu0 0.0
  %255 = vmatprep.subr.mxu0 0.0
  %256 = vmatpush1.msra.mxu0 0.0
  %257 = vmatprep.subr.mxu0 0.0
  %258 = vmatpush1.msra.mxu0 0.0
  %259 = vmatprep.subr.mxu0 0.0
  %260 = vmatpush1.msra.mxu0 0.0
  %261 = vmatprep.subr.mxu0 0.0
  %262 = vmatpush1.msra.mxu0 0.0
  %263 = vmatprep.subr.mxu0 0.0
  %264 = vmatpush1.msra.mxu0 0.0
  %265 = vmatprep.subr.mxu0 0.0
  %266 = vmatpush1.msra.mxu0 0.0
  %267 = vmatprep.subr.mxu0 0.0
  %268 = vmatpush1.msra.mxu0 0.0
  %269 = vmatprep.subr.mxu0 0.0
  %270 = vmatpush1.msra.mxu0 0.0
  %271 = vmatprep.subr.mxu0 0.0
  %272 = vmatpush1.msra.mxu0 0.0
  %273 = vmatprep.mubr.f32.mxu0 0.0
  %274 = vmatmul.mubr.f32.gmra.mrb[0].mxu0 %v100
  %v275 = vpop.f32.mrb[0].mxu0
  %v276 = vadd.f32 0.0, %v275
  %v277 = vpop.f32.mrb[0].mxu0
  %v278 = vadd.f32 0.0, %v277
  %279 = vmatprep.mubr.f32.mxu0 0.0
  %280 = vmatmul.mubr.f32.gmra.mrb[0].mxu0 %v103
  %v281 = vpop.f32.mrb[0].mxu0
  %v282 = vadd.f32 0.0, %v281
  %v283 = vpop.f32.mrb[0].mxu0
  %v284 = vadd.f32 0.0, %v283
  %285 = vmatprep.mubr.f32.mxu0 0.0
  %286 = vmatmul.mubr.f32.gmra.mrb[0].mxu0 %v106
  %v287 = vpop.f32.mrb[0].mxu0
  %v288 = vadd.f32 0.0, %v287
  %v289 = vpop.f32.mrb[0].mxu0
  %v290 = vadd.f32 0.0, %v289
  %291 = vmatprep.mubr.f32.mxu0 0.0
  %292 = vmatmul.mubr.f32.gmra.mrb[0].mxu0 %v109
  %v293 = vpop.f32.mrb[0].mxu0
  %v294 = vadd.f32 0.0, %v293
  %v295 = vpop.f32.mrb[0].mxu0
  %v296 = vadd.f32 0.0, %v295
  %297 = vdwg.mxu0
  %298 = vmatprep.subr.mxu0 %v25
  %299 = vmatpush1.msra.mxu0 %v24
  %300 = vmatprep.subr.mxu0 %v29
  %301 = vmatpush1.msra.mxu0 %v28
  %302 = vmatprep.subr.mxu0 %v33
  %303 = vmatpush1.msra.mxu0 %v32
  %304 = vmatprep.subr.mxu0 %v37
  %305 = vmatpush1.msra.mxu0 %v36
  %306 = vmatprep.subr.mxu0 %v41
  %307 = vmatpush1.msra.mxu0 %v40
  %308 = vmatprep.subr.mxu0 %v45
  %309 = vmatpush1.msra.mxu0 %v44
  %310 = vmatprep.subr.mxu0 %v49
  %311 = vmatpush1.msra.mxu0 %v48
  %312 = vmatprep.subr.mxu0 %v53
  %313 = vmatpush1.msra.mxu0 %v52
  %314 = vmatprep.subr.mxu0 %v57
  %315 = vmatpush1.msra.mxu0 %v56
  %316 = vmatprep.subr.mxu0 %v61
  %317 = vmatpush1.msra.mxu0 %v60
  %318 = vmatprep.subr.mxu0 %v65
  %319 = vmatpush1.msra.mxu0 %v64
  %320 = vmatprep.subr.mxu0 %v69
  %321 = vmatpush1.msra.mxu0 %v68
  %322 = vmatprep.subr.mxu0 %v73
  %323 = vmatpush1.msra.mxu0 %v72
  %324 = vmatprep.subr.mxu0 %v77
  %325 = vmatpush1.msra.mxu0 %v76
  %326 = vmatprep.subr.mxu0 %v81
  %327 = vmatpush1.msra.mxu0 %v80
  %328 = vmatprep.subr.mxu0 %v85
  %329 = vmatpush1.msra.mxu0 %v84
  %330 = vmatprep.subr.mxu0 0.0
  %331 = vmatpush1.msra.mxu0 0.0
  %332 = vmatprep.subr.mxu0 0.0
  %333 = vmatpush1.msra.mxu0 0.0
  %334 = vmatprep.subr.mxu0 0.0
  %335 = vmatpush1.msra.mxu0 0.0
  %336 = vmatprep.subr.mxu0 0.0
  %337 = vmatpush1.msra.mxu0 0.0
  %338 = vmatprep.subr.mxu0 0.0
  %339 = vmatpush1.msra.mxu0 0.0
  %340 = vmatprep.subr.mxu0 0.0
  %341 = vmatpush1.msra.mxu0 0.0
  %342 = vmatprep.subr.mxu0 0.0
  %343 = vmatpush1.msra.mxu0 0.0
  %344 = vmatprep.subr.mxu0 0.0
  %345 = vmatpush1.msra.mxu0 0.0
  %346 = vmatprep.subr.mxu0 0.0
  %347 = vmatpush1.msra.mxu0 0.0
  %348 = vmatprep.subr.mxu0 0.0
  %349 = vmatpush1.msra.mxu0 0.0
  %350 = vmatprep.subr.mxu0 0.0
  %351 = vmatpush1.msra.mxu0 0.0
  %352 = vmatprep.subr.mxu0 0.0
  %353 = vmatpush1.msra.mxu0 0.0
  %354 = vmatprep.subr.mxu0 0.0
  %355 = vmatpush1.msra.mxu0 0.0
  %356 = vmatprep.subr.mxu0 0.0
  %357 = vmatpush1.msra.mxu0 0.0
  %358 = vmatprep.subr.mxu0 0.0
  %359 = vmatpush1.msra.mxu0 0.0
  %360 = vmatprep.subr.mxu0 0.0
  %361 = vmatpush1.msra.mxu0 0.0
  %362 = vmatprep.mubr.f32.mxu0 0.0
  %363 = vmatmul.mubr.f32.gmra.mrb[0].mxu0 %v20
  %v364 = vpop.f32.mrb[0].mxu0
  %v365 = vadd.f32 %v187, %v364
  %v366 = vpop.f32.mrb[0].mxu0
  %v367 = vadd.f32 %v189, %v366
  %368 = vmatprep.mubr.f32.mxu0 0.0
  %369 = vmatmul.mubr.f32.gmra.mrb[0].mxu0 %v21
  %v370 = vpop.f32.mrb[0].mxu0
  %v371 = vadd.f32 %v193, %v370
  %v372 = vpop.f32.mrb[0].mxu0
  %v373 = vadd.f32 %v195, %v372
  %374 = vmatprep.mubr.f32.mxu0 0.0
  %375 = vmatmul.mubr.f32.gmra.mrb[0].mxu0 %v22
  %v376 = vpop.f32.mrb[0].mxu0
  %v377 = vadd.f32 %v199, %v376
  %v378 = vpop.f32.mrb[0].mxu0
  %v379 = vadd.f32 %v201, %v378
  %380 = vmatprep.mubr.f32.mxu0 0.0
  %381 = vmatmul.mubr.f32.gmra.mrb[0].mxu0 %v23
  %v382 = vpop.f32.mrb[0].mxu0
  %v383 = vadd.f32 %v205, %v382
  %v384 = vpop.f32.mrb[0].mxu0
  %v385 = vadd.f32 %v207, %v384
  %386 = vdwg.mxu0
  %387 = vmatprep.subr.mxu0 %v27
  %388 = vmatpush1.msra.mxu0 %v26
  %389 = vmatprep.subr.mxu0 %v31
  %390 = vmatpush1.msra.mxu0 %v30
  %391 = vmatprep.subr.mxu0 %v35
  %392 = vmatpush1.msra.mxu0 %v34
  %393 = vmatprep.subr.mxu0 %v39
  %394 = vmatpush1.msra.mxu0 %v38
  %395 = vmatprep.subr.mxu0 %v43
  %396 = vmatpush1.msra.mxu0 %v42
  %397 = vmatprep.subr.mxu0 %v47
  %398 = vmatpush1.msra.mxu0 %v46
  %399 = vmatprep.subr.mxu0 %v51
  %400 = vmatpush1.msra.mxu0 %v50
  %401 = vmatprep.subr.mxu0 %v55
  %402 = vmatpush1.msra.mxu0 %v54
  %403 = vmatprep.subr.mxu0 %v59
  %404 = vmatpush1.msra.mxu0 %v58
  %405 = vmatprep.subr.mxu0 %v63
  %406 = vmatpush1.msra.mxu0 %v62
  %407 = vmatprep.subr.mxu0 %v67
  %408 = vmatpush1.msra.mxu0 %v66
  %409 = vmatprep.subr.mxu0 %v71
  %410 = vmatpush1.msra.mxu0 %v70
  %411 = vmatprep.subr.mxu0 %v75
  %412 = vmatpush1.msra.mxu0 %v74
  %413 = vmatprep.subr.mxu0 %v79
  %414 = vmatpush1.msra.mxu0 %v78
  %415 = vmatprep.subr.mxu0 %v83
  %416 = vmatpush1.msra.mxu0 %v82
  %417 = vmatprep.subr.mxu0 %v87
  %418 = vmatpush1.msra.mxu0 %v86
  %419 = vmatprep.subr.mxu0 0.0
  %420 = vmatpush1.msra.mxu0 0.0
  %421 = vmatprep.subr.mxu0 0.0
  %422 = vmatpush1.msra.mxu0 0.0
  %423 = vmatprep.subr.mxu0 0.0
  %424 = vmatpush1.msra.mxu0 0.0
  %425 = vmatprep.subr.mxu0 0.0
  %426 = vmatpush1.msra.mxu0 0.0
  %427 = vmatprep.subr.mxu0 0.0
  %428 = vmatpush1.msra.mxu0 0.0
  %429 = vmatprep.subr.mxu0 0.0
  %430 = vmatpush1.msra.mxu0 0.0
  %431 = vmatprep.subr.mxu0 0.0
  %432 = vmatpush1.msra.mxu0 0.0
  %433 = vmatprep.subr.mxu0 0.0
  %434 = vmatpush1.msra.mxu0 0.0
  %435 = vmatprep.subr.mxu0 0.0
  %436 = vmatpush1.msra.mxu0 0.0
  %437 = vmatprep.subr.mxu0 0.0
  %438 = vmatpush1.msra.mxu0 0.0
  %439 = vmatprep.subr.mxu0 0.0
  %440 = vmatpush1.msra.mxu0 0.0
  %441 = vmatprep.subr.mxu0 0.0
  %442 = vmatpush1.msra.mxu0 0.0
  %443 = vmatprep.subr.mxu0 0.0
  %444 = vmatpush1.msra.mxu0 0.0
  %445 = vmatprep.subr.mxu0 0.0
  %446 = vmatpush1.msra.mxu0 0.0
  %447 = vmatprep.subr.mxu0 0.0
  %448 = vmatpush1.msra.mxu0 0.0
  %449 = vmatprep.subr.mxu0 0.0
  %450 = vmatpush1.msra.mxu0 0.0
  %451 = vmatprep.mubr.f32.mxu0 0.0
  %452 = vmatmul.mubr.f32.gmra.mrb[0].mxu0 %v20
  %v453 = vpop.f32.mrb[0].mxu0
  %v454 = vadd.f32 %v276, %v453
  %v455 = vpop.f32.mrb[0].mxu0
  %v456 = vadd.f32 %v278, %v455
  %457 = vmatprep.mubr.f32.mxu0 0.0
  %458 = vmatmul.mubr.f32.gmra.mrb[0].mxu0 %v21
  %v459 = vpop.f32.mrb[0].mxu0
  %v460 = vadd.f32 %v282, %v459
  %v461 = vpop.f32.mrb[0].mxu0
  %v462 = vadd.f32 %v284, %v461
  %463 = vmatprep.mubr.f32.mxu0 0.0
  %464 = vmatmul.mubr.f32.gmra.mrb[0].mxu0 %v22
  %v465 = vpop.f32.mrb[0].mxu0
  %v466 = vadd.f32 %v288, %v465
  %v467 = vpop.f32.mrb[0].mxu0
  %v468 = vadd.f32 %v290, %v467
  %469 = vmatprep.mubr.f32.mxu0 0.0
  %470 = vmatmul.mubr.f32.gmra.mrb[0].mxu0 %v23
  %v471 = vpop.f32.mrb[0].mxu0
  %v472 = vadd.f32 %v294, %v471
  %v473 = vpop.f32.mrb[0].mxu0
  %v474 = vadd.f32 %v296, %v473
  %475 = vdwg.mxu0
  %v476 = vld [vmem:[%s4] sm:$0xf]
  %v478 = vlaneseq
  %v479 = vshrl.u32 %v478, 7
  %v480 = vsub.s32 0, %v479
  %v481 = vrot.slane %v476, %v480
  %v482 = vlaneseq
  %v483 = vshrl.u32 %v482, 7
  %v484 = vsub.s32 1, %v483
  %v485 = vrot.slane %v476, %v484
  %v486 = vlaneseq
  %v487 = vshrl.u32 %v486, 7
  %v488 = vsub.s32 2, %v487
  %v489 = vrot.slane %v476, %v488
  %v490 = vlaneseq
  %v491 = vshrl.u32 %v490, 7
  %v492 = vsub.s32 3, %v491
  %v493 = vrot.slane %v476, %v492
  %v498 = vadd.f32 %v365, %v481
  %v499 = vadd.f32 %v367, %v485
  %v500 = vadd.f32 %v454, %v489
  %v501 = vadd.f32 %v456, %v493
  %v502 = vadd.f32 %v371, %v481
  %v503 = vadd.f32 %v373, %v485
  %v504 = vadd.f32 %v460, %v489
  %v505 = vadd.f32 %v462, %v493
  %v506 = vadd.f32 %v377, %v481
  %v507 = vadd.f32 %v379, %v485
  %v508 = vadd.f32 %v466, %v489
  %v509 = vadd.f32 %v468, %v493
  %v510 = vadd.f32 %v383, %v481
  %v511 = vadd.f32 %v385, %v485
  %v512 = vadd.f32 %v472, %v489
  %v513 = vadd.f32 %v474, %v493
  %514 = vst [vmem:[%s5] sm:$0xff] %v498
  %515 = vst [vmem:[%s5 + $0x8] sm:$0xff] %v499
  %516 = vst [vmem:[%s5 + $0x10] sm:$0xff] %v500
  %517 = vst [vmem:[%s5 + $0x18] sm:$0xff] %v501
  %518 = vst [vmem:[%s5 + $0x20] sm:$0xff] %v502
  %519 = vst [vmem:[%s5 + $0x28] sm:$0xff] %v503
  %520 = vst [vmem:[%s5 + $0x30] sm:$0xff] %v504
  %521 = vst [vmem:[%s5 + $0x38] sm:$0xff] %v505
  %522 = vst [vmem:[%s5 + $0x40] sm:$0xff] %v506
  %523 = vst [vmem:[%s5 + $0x48] sm:$0xff] %v507
  %524 = vst [vmem:[%s5 + $0x50] sm:$0xff] %v508
  %525 = vst [vmem:[%s5 + $0x58] sm:$0xff] %v509
  %526 = vst [vmem:[%s5 + $0x60] sm:$0xff] %v510
  %527 = vst [vmem:[%s5 + $0x68] sm:$0xff] %v511
  %528 = vst [vmem:[%s5 + $0x70] sm:$0xff] %v512
  %529 = vst [vmem:[%s5 + $0x78] sm:$0xff] %v513
  // Predicated region
  $region22: #{srnn_forward.9} parent=0 // pred_check
    _
  $region23: #{srnn_forward.9} parent=0 // pred_check_branch
    %531 = sbr.rel (0) target = $region25
  $region24: #{srnn_forward.9} parent=0 // pred_region
    _
  $region25: #{srnn_forward.9} parent=0 // pred_fallthru
    _
  // Predicated region
  $region26: #{srnn_forward.9} parent=0 // pred_check
    _
  $region27: #{srnn_forward.9} parent=0 // pred_check_branch
    %533 = sbr.rel (0) target = $region29
  $region28: #{srnn_forward.9} parent=0 // pred_region
    _
  $region29: #{srnn_forward.9} parent=0 // pred_fallthru
    _

// kernel: srnn_forward.8
$region0: #{srnn_forward.8}
  #allocation0 [shape = 'u32[]', space=smem, size = 0x4, offset = 0x4, fixed_abs, tag = 'smem constant byte address 0x4 - core index']
  #allocation1 [shape = 'u32[144,128]{1,0:T(1,128)}', space=vmem, size = 0x12000, scoped, tag = 'internal scratch']
  #allocation2 [shape = 'f32[2,128]{1,0:T(2,128)}', space=vmem, size = 0x400, scoped, tag = 'scratch operand']
  #allocation3 [shape = 'f32[2,128]{1,0:T(2,128)}', space=vmem, size = 0x400, scoped, tag = 'scratch operand']
  %s0 = inlined_call_operand.vmem [shape: f32[16,2,512], index: 0, kind: input, shape index: {}]
  %s1 = inlined_call_operand.vmem [shape: f32[128,512], index: 1, kind: input, shape index: {}]
  %s2 = inlined_call_operand.vmem [shape: f32[16,2,128], index: 2, kind: output, shape index: {}]
  %s3 = sld [smem:[#allocation0]]
  $region29: #{srnn_forward.8} parent=0
    _
  %s5 = ssub.s32 1, %s3
  %s6 = scalar_select 0, %s5, %s3
  // Predicated region
  $region2: #{srnn_forward.8} parent=0 // pred_check
    _
  $region3: #{srnn_forward.8} parent=0 // pred_check_branch
    %8 = sbr.rel (0) target = $region5
  $region4: #{srnn_forward.8} parent=0 // pred_region
    _
  $region5: #{srnn_forward.8} parent=0 // pred_fallthru
    _
  // Predicated region
  $region6: #{srnn_forward.8} parent=0 // pred_check
    _
  $region7: #{srnn_forward.8} parent=0 // pred_check_branch
    %10 = sbr.rel (0) target = $region9
  $region8: #{srnn_forward.8} parent=0 // pred_region
    _
  $region9: #{srnn_forward.8} parent=0 // pred_fallthru
    _
  %p11 = scmp.eq.s32.totalorder 0, 0
  // Predicated region
  $region10: #{srnn_forward.8} parent=0 // pred_check
    %p12 = pneg %p11
  $region11: #{srnn_forward.8} parent=0 // pred_check_branch
    %14 = sbr.rel (%p12) target = $region13
  $region12: #{srnn_forward.8} parent=0 // pred_region
    %15 = vst [vmem:[#allocation2] sm:$0x3] 0.0
    %16 = vst [vmem:[#allocation3] sm:$0x3] 0.0
  $region13: #{srnn_forward.8} parent=0 // pred_fallthru
    _
  loop: start=0, step=1, limit=16
  $region14: #{srnn_forward.8} parent=0 // loop_pre_header
    _
  $region15: #{srnn_forward.8} parent=0 // loop_header
    %s18 = sphi 0, %s22
    %p19 = scmp.ge.s32.totalorder %s18, 16
  $region16: #{srnn_forward.8} parent=0 // loop_header_branch
    %21 = sbr.rel (%p19) target = $region20
  $region17: #{srnn_forward.8} parent=0 // loop_body
    %s23 = smul.u32 %s18, 4
    %s24 = smul.addr %s23, 2
    %s25 = scalar_lea.vmem %s0, %s24
    %v26 = vld [vmem:[%s25] sm:$0xff]
    %v27 = vld [vmem:[#allocation2] sm:$0x3]
    %v28 = vld [vmem:[%s1] sm:$0xff]
    %v29 = vld [vmem:[%s1 + $0x8] sm:$0xff]
    %v30 = vld [vmem:[%s1 + $0x10] sm:$0xff]
    %v31 = vld [vmem:[%s1 + $0x18] sm:$0xff]
    %v32 = vld [vmem:[%s1 + $0x20] sm:$0xff]
    %v33 = vld [vmem:[%s1 + $0x28] sm:$0xff]
    %v34 = vld [vmem:[%s1 + $0x30] sm:$0xff]
    %v35 = vld [vmem:[%s1 + $0x38] sm:$0xff]
    %v36 = vld [vmem:[%s1 + $0x40] sm:$0xff]
    %v37 = vld [vmem:[%s1 + $0x48] sm:$0xff]
    %v38 = vld [vmem:[%s1 + $0x50] sm:$0xff]
    %v39 = vld [vmem:[%s1 + $0x58] sm:$0xff]
    %v40 = vld [vmem:[%s1 + $0x60] sm:$0xff]
    %v41 = vld [vmem:[%s1 + $0x68] sm:$0xff]
    %v42 = vld [vmem:[%s1 + $0x70] sm:$0xff]
    %v43 = vld [vmem:[%s1 + $0x78] sm:$0xff]
    %v44 = vld [vmem:[%s1 + $0x80] sm:$0xff]
    %v45 = vld [vmem:[%s1 + $0x88] sm:$0xff]
    %v46 = vld [vmem:[%s1 + $0x90] sm:$0xff]
    %v47 = vld [vmem:[%s1 + $0x98] sm:$0xff]
    %v48 = vld [vmem:[%s1 + $0xa0] sm:$0xff]
    %v49 = vld [vmem:[%s1 + $0xa8] sm:$0xff]
    %v50 = vld [vmem:[%s1 + $0xb0] sm:$0xff]
    %v51 = vld [vmem:[%s1 + $0xb8] sm:$0xff]
    %v52 = vld [vmem:[%s1 + $0xc0] sm:$0xff]
    %v53 = vld [vmem:[%s1 + $0xc8] sm:$0xff]
    %v54 = vld [vmem:[%s1 + $0xd0] sm:$0xff]
    %v55 = vld [vmem:[%s1 + $0xd8] sm:$0xff]
    %v56 = vld [vmem:[%s1 + $0xe0] sm:$0xff]
    %v57 = vld [vmem:[%s1 + $0xe8] sm:$0xff]
    %v58 = vld [vmem:[%s1 + $0xf0] sm:$0xff]
    %v59 = vld [vmem:[%s1 + $0xf8] sm:$0xff]
    %v60 = vld [vmem:[%s1 + $0x100] sm:$0xff]
    %v61 = vld [vmem:[%s1 + $0x108] sm:$0xff]
    %v62 = vld [vmem:[%s1 + $0x110] sm:$0xff]
    %v63 = vld [vmem:[%s1 + $0x118] sm:$0xff]
    %v64 = vld [vmem:[%s1 + $0x120] sm:$0xff]
    %v65 = vld [vmem:[%s1 + $0x128] sm:$0xff]
    %v66 = vld [vmem:[%s1 + $0x130] sm:$0xff]
    %v67 = vld [vmem:[%s1 + $0x138] sm:$0xff]
    %v68 = vld [vmem:[%s1 + $0x140] sm:$0xff]
    %v69 = vld [vmem:[%s1 + $0x148] sm:$0xff]
    %v70 = vld [vmem:[%s1 + $0x150] sm:$0xff]
    %v71 = vld [vmem:[%s1 + $0x158] sm:$0xff]
    %v72 = vld [vmem:[%s1 + $0x160] sm:$0xff]
    %v73 = vld [vmem:[%s1 + $0x168] sm:$0xff]
    %v74 = vld [vmem:[%s1 + $0x170] sm:$0xff]
    %v75 = vld [vmem:[%s1 + $0x178] sm:$0xff]
    %v76 = vld [vmem:[%s1 + $0x180] sm:$0xff]
    %v77 = vld [vmem:[%s1 + $0x188] sm:$0xff]
    %v78 = vld [vmem:[%s1 + $0x190] sm:$0xff]
    %v79 = vld [vmem:[%s1 + $0x198] sm:$0xff]
    %v80 = vld [vmem:[%s1 + $0x1a0] sm:$0xff]
    %v81 = vld [vmem:[%s1 + $0x1a8] sm:$0xff]
    %v82 = vld [vmem:[%s1 + $0x1b0] sm:$0xff]
    %v83 = vld [vmem:[%s1 + $0x1b8] sm:$0xff]
    %v84 = vld [vmem:[%s1 + $0x1c0] sm:$0xff]
    %v85 = vld [vmem:[%s1 + $0x1c8] sm:$0xff]
    %v86 = vld [vmem:[%s1 + $0x1d0] sm:$0xff]
    %v87 = vld [vmem:[%s1 + $0x1d8] sm:$0xff]
    %v88 = vld [vmem:[%s1 + $0x1e0] sm:$0xff]
    %v89 = vld [vmem:[%s1 + $0x1e8] sm:$0xff]
    %v90 = vld [vmem:[%s1 + $0x1f0] sm:$0xff]
    %v91 = vld [vmem:[%s1 + $0x1f8] sm:$0xff]
    %92 = vmatprep.subr.mxu0 %v29
    %93 = vmatpush1.msra.mxu0 %v28
    %94 = vmatprep.subr.mxu0 %v33
    %95 = vmatpush1.msra.mxu0 %v32
    %96 = vmatprep.subr.mxu0 %v37
    %97 = vmatpush1.msra.mxu0 %v36
    %98 = vmatprep.subr.mxu0 %v41
    %99 = vmatpush1.msra.mxu0 %v40
    %100 = vmatprep.subr.mxu0 %v45
    %101 = vmatpush1.msra.mxu0 %v44
    %102 = vmatprep.subr.mxu0 %v49
    %103 = vmatpush1.msra.mxu0 %v48
    %104 = vmatprep.subr.mxu0 %v53
    %105 = vmatpush1.msra.mxu0 %v52
    %106 = vmatprep.subr.mxu0 %v57
    %107 = vmatpush1.msra.mxu0 %v56
    %108 = vmatprep.subr.mxu0 %v61
    %109 = vmatpush1.msra.mxu0 %v60
    %110 = vmatprep.subr.mxu0 %v65
    %111 = vmatpush1.msra.mxu0 %v64
    %112 = vmatprep.subr.mxu0 %v69
    %113 = vmatpush1.msra.mxu0 %v68
    %114 = vmatprep.subr.mxu0 %v73
    %115 = vmatpush1.msra.mxu0 %v72
    %116 = vmatprep.subr.mxu0 %v77
    %117 = vmatpush1.msra.mxu0 %v76
    %118 = vmatprep.subr.mxu0 %v81
    %119 = vmatpush1.msra.mxu0 %v80
    %120 = vmatprep.subr.mxu0 %v85
    %121 = vmatpush1.msra.mxu0 %v84
    %122 = vmatprep.subr.mxu0 %v89
    %123 = vmatpush1.msra.mxu0 %v88
    %124 = vmatprep.subr.mxu0 0.0
    %125 = vmatpush1.msra.mxu0 0.0
    %126 = vmatprep.subr.mxu0 0.0
    %127 = vmatpush1.msra.mxu0 0.0
    %128 = vmatprep.subr.mxu0 0.0
    %129 = vmatpush1.msra.mxu0 0.0
    %130 = vmatprep.subr.mxu0 0.0
    %131 = vmatpush1.msra.mxu0 0.0
    %132 = vmatprep.subr.mxu0 0.0
    %133 = vmatpush1.msra.mxu0 0.0
    %134 = vmatprep.subr.mxu0 0.0
    %135 = vmatpush1.msra.mxu0 0.0
    %136 = vmatprep.subr.mxu0 0.0
    %137 = vmatpush1.msra.mxu0 0.0
    %138 = vmatprep.subr.mxu0 0.0
    %139 = vmatpush1.msra.mxu0 0.0
    %140 = vmatprep.subr.mxu0 0.0
    %141 = vmatpush1.msra.mxu0 0.0
    %142 = vmatprep.subr.mxu0 0.0
    %143 = vmatpush1.msra.mxu0 0.0
    %144 = vmatprep.subr.mxu0 0.0
    %145 = vmatpush1.msra.mxu0 0.0
    %146 = vmatprep.subr.mxu0 0.0
    %147 = vmatpush1.msra.mxu0 0.0
    %148 = vmatprep.subr.mxu0 0.0
    %149 = vmatpush1.msra.mxu0 0.0
    %150 = vmatprep.subr.mxu0 0.0
    %151 = vmatpush1.msra.mxu0 0.0
    %152 = vmatprep.subr.mxu0 0.0
    %153 = vmatpush1.msra.mxu0 0.0
    %154 = vmatprep.subr.mxu0 0.0
    %155 = vmatpush1.msra.mxu0 0.0
    %156 = vmatprep.mubr.f32.mxu0 0.0
    %157 = vmatmul.mubr.f32.gmra.mrb[0].mxu0 %v27
    %v158 = vpop.f32.mrb[0].mxu0
    %v159 = vadd.f32 0.0, %v158
    %v160 = vpop.f32.mrb[0].mxu0
    %v161 = vadd.f32 0.0, %v160
    %162 = vdwg.mxu0
    %163 = vmatprep.subr.mxu0 %v31
    %164 = vmatpush1.msra.mxu0 %v30
    %165 = vmatprep.subr.mxu0 %v35
    %166 = vmatpush1.msra.mxu0 %v34
    %167 = vmatprep.subr.mxu0 %v39
    %168 = vmatpush1.msra.mxu0 %v38
    %169 = vmatprep.subr.mxu0 %v43
    %170 = vmatpush1.msra.mxu0 %v42
    %171 = vmatprep.subr.mxu0 %v47
    %172 = vmatpush1.msra.mxu0 %v46
    %173 = vmatprep.subr.mxu0 %v51
    %174 = vmatpush1.msra.mxu0 %v50
    %175 = vmatprep.subr.mxu0 %v55
    %176 = vmatpush1.msra.mxu0 %v54
    %177 = vmatprep.subr.mxu0 %v59
    %178 = vmatpush1.msra.mxu0 %v58
    %179 = vmatprep.subr.mxu0 %v63
    %180 = vmatpush1.msra.mxu0 %v62
    %181 = vmatprep.subr.mxu0 %v67
    %182 = vmatpush1.msra.mxu0 %v66
    %183 = vmatprep.subr.mxu0 %v71
    %184 = vmatpush1.msra.mxu0 %v70
    %185 = vmatprep.subr.mxu0 %v75
    %186 = vmatpush1.msra.mxu0 %v74
    %187 = vmatprep.subr.mxu0 %v79
    %188 = vmatpush1.msra.mxu0 %v78
    %189 = vmatprep.subr.mxu0 %v83
    %190 = vmatpush1.msra.mxu0 %v82
    %191 = vmatprep.subr.mxu0 %v87
    %192 = vmatpush1.msra.mxu0 %v86
    %193 = vmatprep.subr.mxu0 %v91
    %194 = vmatpush1.msra.mxu0 %v90
    %195 = vmatprep.subr.mxu0 0.0
    %196 = vmatpush1.msra.mxu0 0.0
    %197 = vmatprep.subr.mxu0 0.0
    %198 = vmatpush1.msra.mxu0 0.0
    %199 = vmatprep.subr.mxu0 0.0
    %200 = vmatpush1.msra.mxu0 0.0
    %201 = vmatprep.subr.mxu0 0.0
    %202 = vmatpush1.msra.mxu0 0.0
    %203 = vmatprep.subr.mxu0 0.0
    %204 = vmatpush1.msra.mxu0 0.0
    %205 = vmatprep.subr.mxu0 0.0
    %206 = vmatpush1.msra.mxu0 0.0
    %207 = vmatprep.subr.mxu0 0.0
    %208 = vmatpush1.msra.mxu0 0.0
    %209 = vmatprep.subr.mxu0 0.0
    %210 = vmatpush1.msra.mxu0 0.0
    %211 = vmatprep.subr.mxu0 0.0
    %212 = vmatpush1.msra.mxu0 0.0
    %213 = vmatprep.subr.mxu0 0.0
    %214 = vmatpush1.msra.mxu0 0.0
    %215 = vmatprep.subr.mxu0 0.0
    %216 = vmatpush1.msra.mxu0 0.0
    %217 = vmatprep.subr.mxu0 0.0
    %218 = vmatpush1.msra.mxu0 0.0
    %219 = vmatprep.subr.mxu0 0.0
    %220 = vmatpush1.msra.mxu0 0.0
    %221 = vmatprep.subr.mxu0 0.0
    %222 = vmatpush1.msra.mxu0 0.0
    %223 = vmatprep.subr.mxu0 0.0
    %224 = vmatpush1.msra.mxu0 0.0
    %225 = vmatprep.subr.mxu0 0.0
    %226 = vmatpush1.msra.mxu0 0.0
    %227 = vmatprep.mubr.f32.mxu0 0.0
    %228 = vmatmul.mubr.f32.gmra.mrb[0].mxu0 %v27
    %v229 = vpop.f32.mrb[0].mxu0
    %v230 = vadd.f32 0.0, %v229
    %v231 = vpop.f32.mrb[0].mxu0
    %v232 = vadd.f32 0.0, %v231
    %233 = vdwg.mxu0
    %v238 = vcombine.low %v159, %v161
    %v239 = vcombine.low %v230, %v232
    %v241 = vunpack.c.l.s4 1983009808
    %v242 = vunpack.c.0.s8 %v241
    %v243 = vlaneseq
    %v244 = vshrl.u32 %v243, 7
    %v245 = vsub.s32 %v242, %v244
    %v246 = vrot.slane %v238, %v245
    %v248 = vunpack.c.l.s4 1983009808
    %v249 = vunpack.c.0.s8 %v248
    %v250 = vlaneseq
    %v251 = vshrl.u32 %v250, 7
    %v252 = vsub.s32 %v249, %v251
    %v253 = vrot.slane %v239, %v252
    %v254 = vcombine.low %v246, %v253
    %v256 = vadd.f32 %v26, %v254
    %v257 = vxor.u32 %v256, 2147483648
    %v258 = vmul.f32 %v257, 1.442695
    %v259 = vpow.pop %v258
    %v260 = vadd.f32 %v259, 1.0
    %v261 = vrcp.pop %v260
    %v262 = vmul.f32 1.0, %v261
    %v264 = vrot.slane %v256, 4
    %v266 = vtanh.pop %v264
    %v267 = vrot.slane %v256, 6
    %v269 = vxor.u32 %v267, 2147483648
    %v270 = vmul.f32 %v269, 1.442695
    %v271 = vpow.pop %v270
    %v272 = vadd.f32 %v271, 1.0
    %v273 = vrcp.pop %v272
    %v274 = vmul.f32 1.0, %v273
    %v275 = vld [vmem:[#allocation3] sm:$0x3]
    %v277 = vrot.slane %v262, 2
    %v279 = vmul.f32 %v277, %v275
    %v280 = vmul.f32 %v262, %v266
    %v281 = vadd.f32 %v279, %v280
    %v282 = vtanh.pop %v281
    %v283 = vmul.f32 %v274, %v282
    %284 = vst [vmem:[#allocation3] sm:$0x3] %v281
    %285 = vst [vmem:[#allocation2] sm:$0x3] %v283
    %v286 = vld [vmem:[#allocation2] sm:$0x3]
    %s287 = smul.u32 %s18, 2
    %s288 = scalar_lea.vmem %s2, %s287
    %289 = vst [vmem:[%s288] sm:$0x3] %v286
  $region18: #{srnn_forward.8} parent=0 // loop_footer
    %s22 = sadd.s32 1, %s18
  $region19: #{srnn_forward.8} parent=0 // loop_footer_branch
    %17 = sbr.rel target = $region15
  $region20: #{srnn_forward.8} parent=0 // loop_exit
    _
  // Predicated region
  $region21: #{srnn_forward.8} parent=0 // pred_check
    _
  $region22: #{srnn_forward.8} parent=0 // pred_check_branch
    %291 = sbr.rel (0) target = $region24
  $region23: #{srnn_forward.8} parent=0 // pred_region
    _
  $region24: #{srnn_forward.8} parent=0 // pred_fallthru
    _
  // Predicated region
  $region25: #{srnn_forward.8} parent=0 // pred_check
    _
  $region26: #{srnn_forward.8} parent=0 // pred_check_branch
    %293 = sbr.rel (0) target = $region28
  $region27: #{srnn_forward.8} parent=0 // pred_region
    _
  $region28: #{srnn_forward.8} parent=0 // pred_fallthru
    _

// kernel: srnn_forward.10
$region0: #{srnn_forward.10}
  #allocation0 [shape = 'u32[]', space=smem, size = 0x4, offset = 0x4, fixed_abs, tag = 'smem constant byte address 0x4 - core index']
  #allocation1 [shape = 'u32[144,128]{1,0:T(1,128)}', space=vmem, size = 0x12000, scoped, tag = 'internal scratch']
  #allocation2 [shape = 'f32[2,128]{1,0:T(2,128)}', space=vmem, size = 0x400, scoped, tag = 'scratch operand']
  #allocation3 [shape = 'f32[2,128]{1,0:T(2,128)}', space=vmem, size = 0x400, scoped, tag = 'scratch operand']
  %s0 = inlined_call_operand.vmem [shape: f32[16,2,512], index: 0, kind: input, shape index: {}]
  %s1 = inlined_call_operand.vmem [shape: f32[128,512], index: 1, kind: input, shape index: {}]
  %s2 = inlined_call_operand.vmem [shape: f32[16,2,128], index: 2, kind: output, shape index: {}]
  %s3 = sld [smem:[#allocation0]]
  $region29: #{srnn_forward.10} parent=0
    _
  %s5 = ssub.s32 1, %s3
  %s6 = scalar_select 0, %s5, %s3
  // Predicated region
  $region2: #{srnn_forward.10} parent=0 // pred_check
    _
  $region3: #{srnn_forward.10} parent=0 // pred_check_branch
    %8 = sbr.rel (0) target = $region5
  $region4: #{srnn_forward.10} parent=0 // pred_region
    %s9 = ssub.s32 0, 0
    %s10 = smul.u32 16, %s9
    %p11 = scmp.lt.s32.totalorder %s10, 15
    %s12 = scalar_select %p11, %s10, 15
    %s13 = smul.addr %s12, 4
    %s14 = smul.addr %s13, 2
    %s15 = scalar_lea.vmem %s0, %s14
    %s16 = ssub.s32 0, 0
    %s17 = smul.u32 16, %s16
  $region5: #{srnn_forward.10} parent=0 // pred_fallthru
    _
  // Predicated region
  $region6: #{srnn_forward.10} parent=0 // pred_check
    _
  $region7: #{srnn_forward.10} parent=0 // pred_check_branch
    %19 = sbr.rel (0) target = $region9
  $region8: #{srnn_forward.10} parent=0 // pred_region
    _
  $region9: #{srnn_forward.10} parent=0 // pred_fallthru
    _
  %s20 = ssub.s32 0, 0
  %s21 = smul.u32 16, %s20
  %p22 = scmp.lt.s32.totalorder %s21, 15
  %s23 = scalar_select %p22, %s21, 15
  %s24 = smul.addr %s23, 4
  %s25 = smul.addr %s24, 2
  %s26 = scalar_lea.vmem %s0, %s25
  %s27 = ssub.s32 0, 0
  %s28 = smul.u32 16, %s27
  %p29 = scmp.lt.s32.totalorder %s28, 15
  %s30 = scalar_select %p29, %s28, 15
  %s31 = smul.addr %s30, 2
  %s32 = scalar_lea.vmem %s2, %s31
  %s33 = ssub.s32 0, 0
  %s34 = smul.u32 16, %s33
  %p35 = scmp.lt.s32.totalorder %s34, 15
  %s36 = scalar_select %p35, %s34, 15
  %s37 = smul.addr %s36, 4
  %s38 = smul.addr %s37, 2
  %s39 = scalar_lea.vmem %s0, %s38
  %s40 = ssub.s32 0, 0
  %s41 = smul.u32 16, %s40
  %s42 = ssub.s32 0, 0
  %s43 = smul.u32 16, %s42
  %p44 = scmp.lt.s32.totalorder %s43, 15
  %s45 = scalar_select %p44, %s43, 15
  %s46 = smul.addr %s45, 2
  %s47 = scalar_lea.vmem %s2, %s46
  %s48 = ssub.s32 0, 0
  %s49 = smul.u32 16, %s48
  %p50 = scmp.eq.s32.totalorder 0, 0
  // Predicated region
  $region10: #{srnn_forward.10} parent=0 // pred_check
    %p51 = pneg %p50
  $region11: #{srnn_forward.10} parent=0 // pred_check_branch
    %53 = sbr.rel (%p51) target = $region13
  $region12: #{srnn_forward.10} parent=0 // pred_region
    %54 = vst [vmem:[#allocation2] sm:$0x3] 0.0
    %55 = vst [vmem:[#allocation3] sm:$0x3] 0.0
  $region13: #{srnn_forward.10} parent=0 // pred_fallthru
    _
  %s56 = ssub.s32 0, 0
  %s57 = smul.u32 %s56, 16
  loop: start=0, step=1, limit=16
  $region14: #{srnn_forward.10} parent=0 // loop_pre_header
    _
  $region15: #{srnn_forward.10} parent=0 // loop_header
    %s59 = sphi 0, %s63
    %p60 = scmp.ge.s32.totalorder %s59, 16
  $region16: #{srnn_forward.10} parent=0 // loop_header_branch
    %62 = sbr.rel (%p60) target = $region20
  $region17: #{srnn_forward.10} parent=0 // loop_body
    %s64 = ssub.s32 15, %s59
    %s65 = smul.u32 %s64, 4
    %s66 = smul.addr %s65, 2
    %s67 = scalar_lea.vmem %s39, %s66
    %v68 = vld [vmem:[%s67] sm:$0xff]
    %v69 = vld [vmem:[#allocation2] sm:$0x3]
    %v70 = vld [vmem:[%s1] sm:$0xff]
    %v71 = vld [vmem:[%s1 + $0x8] sm:$0xff]
    %v72 = vld [vmem:[%s1 + $0x10] sm:$0xff]
    %v73 = vld [vmem:[%s1 + $0x18] sm:$0xff]
    %v74 = vld [vmem:[%s1 + $0x20] sm:$0xff]
    %v75 = vld [vmem:[%s1 + $0x28] sm:$0xff]
    %v76 = vld [vmem:[%s1 + $0x30] sm:$0xff]
    %v77 = vld [vmem:[%s1 + $0x38] sm:$0xff]
    %v78 = vld [vmem:[%s1 + $0x40] sm:$0xff]
    %v79 = vld [vmem:[%s1 + $0x48] sm:$0xff]
    %v80 = vld [vmem:[%s1 + $0x50] sm:$0xff]
    %v81 = vld [vmem:[%s1 + $0x58] sm:$0xff]
    %v82 = vld [vmem:[%s1 + $0x60] sm:$0xff]
    %v83 = vld [vmem:[%s1 + $0x68] sm:$0xff]
    %v84 = vld [vmem:[%s1 + $0x70] sm:$0xff]
    %v85 = vld [vmem:[%s1 + $0x78] sm:$0xff]
    %v86 = vld [vmem:[%s1 + $0x80] sm:$0xff]
    %v87 = vld [vmem:[%s1 + $0x88] sm:$0xff]
    %v88 = vld [vmem:[%s1 + $0x90] sm:$0xff]
    %v89 = vld [vmem:[%s1 + $0x98] sm:$0xff]
    %v90 = vld [vmem:[%s1 + $0xa0] sm:$0xff]
    %v91 = vld [vmem:[%s1 + $0xa8] sm:$0xff]
    %v92 = vld [vmem:[%s1 + $0xb0] sm:$0xff]
    %v93 = vld [vmem:[%s1 + $0xb8] sm:$0xff]
    %v94 = vld [vmem:[%s1 + $0xc0] sm:$0xff]
    %v95 = vld [vmem:[%s1 + $0xc8] sm:$0xff]
    %v96 = vld [vmem:[%s1 + $0xd0] sm:$0xff]
    %v97 = vld [vmem:[%s1 + $0xd8] sm:$0xff]
    %v98 = vld [vmem:[%s1 + $0xe0] sm:$0xff]
    %v99 = vld [vmem:[%s1 + $0xe8] sm:$0xff]
    %v100 = vld [vmem:[%s1 + $0xf0] sm:$0xff]
    %v101 = vld [vmem:[%s1 + $0xf8] sm:$0xff]
    %v102 = vld [vmem:[%s1 + $0x100] sm:$0xff]
    %v103 = vld [vmem:[%s1 + $0x108] sm:$0xff]
    %v104 = vld [vmem:[%s1 + $0x110] sm:$0xff]
    %v105 = vld [vmem:[%s1 + $0x118] sm:$0xff]
    %v106 = vld [vmem:[%s1 + $0x120] sm:$0xff]
    %v107 = vld [vmem:[%s1 + $0x128] sm:$0xff]
    %v108 = vld [vmem:[%s1 + $0x130] sm:$0xff]
    %v109 = vld [vmem:[%s1 + $0x138] sm:$0xff]
    %v110 = vld [vmem:[%s1 + $0x140] sm:$0xff]
    %v111 = vld [vmem:[%s1 + $0x148] sm:$0xff]
    %v112 = vld [vmem:[%s1 + $0x150] sm:$0xff]
    %v113 = vld [vmem:[%s1 + $0x158] sm:$0xff]
    %v114 = vld [vmem:[%s1 + $0x160] sm:$0xff]
    %v115 = vld [vmem:[%s1 + $0x168] sm:$0xff]
    %v116 = vld [vmem:[%s1 + $0x170] sm:$0xff]
    %v117 = vld [vmem:[%s1 + $0x178] sm:$0xff]
    %v118 = vld [vmem:[%s1 + $0x180] sm:$0xff]
    %v119 = vld [vmem:[%s1 + $0x188] sm:$0xff]
    %v120 = vld [vmem:[%s1 + $0x190] sm:$0xff]
    %v121 = vld [vmem:[%s1 + $0x198] sm:$0xff]
    %v122 = vld [vmem:[%s1 + $0x1a0] sm:$0xff]
    %v123 = vld [vmem:[%s1 + $0x1a8] sm:$0xff]
    %v124 = vld [vmem:[%s1 + $0x1b0] sm:$0xff]
    %v125 = vld [vmem:[%s1 + $0x1b8] sm:$0xff]
    %v126 = vld [vmem:[%s1 + $0x1c0] sm:$0xff]
    %v127 = vld [vmem:[%s1 + $0x1c8] sm:$0xff]
    %v128 = vld [vmem:[%s1 + $0x1d0] sm:$0xff]
    %v129 = vld [vmem:[%s1 + $0x1d8] sm:$0xff]
    %v130 = vld [vmem:[%s1 + $0x1e0] sm:$0xff]
    %v131 = vld [vmem:[%s1 + $0x1e8] sm:$0xff]
    %v132 = vld [vmem:[%s1 + $0x1f0] sm:$0xff]
    %v133 = vld [vmem:[%s1 + $0x1f8] sm:$0xff]
    %134 = vmatprep.subr.mxu0 %v71
    %135 = vmatpush1.msra.mxu0 %v70
    %136 = vmatprep.subr.mxu0 %v75
    %137 = vmatpush1.msra.mxu0 %v74
    %138 = vmatprep.subr.mxu0 %v79
    %139 = vmatpush1.msra.mxu0 %v78
    %140 = vmatprep.subr.mxu0 %v83
    %141 = vmatpush1.msra.mxu0 %v82
    %142 = vmatprep.subr.mxu0 %v87
    %143 = vmatpush1.msra.mxu0 %v86
    %144 = vmatprep.subr.mxu0 %v91
    %145 = vmatpush1.msra.mxu0 %v90
    %146 = vmatprep.subr.mxu0 %v95
    %147 = vmatpush1.msra.mxu0 %v94
    %148 = vmatprep.subr.mxu0 %v99
    %149 = vmatpush1.msra.mxu0 %v98
    %150 = vmatprep.subr.mxu0 %v103
    %151 = vmatpush1.msra.mxu0 %v102
    %152 = vmatprep.subr.mxu0 %v107
    %153 = vmatpush1.msra.mxu0 %v106
    %154 = vmatprep.subr.mxu0 %v111
    %155 = vmatpush1.msra.mxu0 %v110
    %156 = vmatprep.subr.mxu0 %v115
    %157 = vmatpush1.msra.mxu0 %v114
    %158 = vmatprep.subr.mxu0 %v119
    %159 = vmatpush1.msra.mxu0 %v118
    %160 = vmatprep.subr.mxu0 %v123
    %161 = vmatpush1.msra.mxu0 %v122
    %162 = vmatprep.subr.mxu0 %v127
    %163 = vmatpush1.msra.mxu0 %v126
    %164 = vmatprep.subr.mxu0 %v131
    %165 = vmatpush1.msra.mxu0 %v130
    %166 = vmatprep.subr.mxu0 0.0
    %167 = vmatpush1.msra.mxu0 0.0
    %168 = vmatprep.subr.mxu0 0.0
    %169 = vmatpush1.msra.mxu0 0.0
    %170 = vmatprep.subr.mxu0 0.0
    %171 = vmatpush1.msra.mxu0 0.0
    %172 = vmatprep.subr.mxu0 0.0
    %173 = vmatpush1.msra.mxu0 0.0
    %174 = vmatprep.subr.mxu0 0.0
    %175 = vmatpush1.msra.mxu0 0.0
    %176 = vmatprep.subr.mxu0 0.0
    %177 = vmatpush1.msra.mxu0 0.0
    %178 = vmatprep.subr.mxu0 0.0
    %179 = vmatpush1.msra.mxu0 0.0
    %180 = vmatprep.subr.mxu0 0.0
    %181 = vmatpush1.msra.mxu0 0.0
    %182 = vmatprep.subr.mxu0 0.0
    %183 = vmatpush1.msra.mxu0 0.0
    %184 = vmatprep.subr.mxu0 0.0
    %185 = vmatpush1.msra.mxu0 0.0
    %186 = vmatprep.subr.mxu0 0.0
    %187 = vmatpush1.msra.mxu0 0.0
    %188 = vmatprep.subr.mxu0 0.0
    %189 = vmatpush1.msra.mxu0 0.0
    %190 = vmatprep.subr.mxu0 0.0
    %191 = vmatpush1.msra.mxu0 0.0
    %192 = vmatprep.subr.mxu0 0.0
    %193 = vmatpush1.msra.mxu0 0.0
    %194 = vmatprep.subr.mxu0 0.0
    %195 = vmatpush1.msra.mxu0 0.0
    %196 = vmatprep.subr.mxu0 0.0
    %197 = vmatpush1.msra.mxu0 0.0
    %198 = vmatprep.mubr.f32.mxu0 0.0
    %199 = vmatmul.mubr.f32.gmra.mrb[0].mxu0 %v69
    %v200 = vpop.f32.mrb[0].mxu0
    %v201 = vadd.f32 0.0, %v200
    %v202 = vpop.f32.mrb[0].mxu0
    %v203 = vadd.f32 0.0, %v202
    %204 = vdwg.mxu0
    %205 = vmatprep.subr.mxu0 %v73
    %206 = vmatpush1.msra.mxu0 %v72
    %207 = vmatprep.subr.mxu0 %v77
    %208 = vmatpush1.msra.mxu0 %v76
    %209 = vmatprep.subr.mxu0 %v81
    %210 = vmatpush1.msra.mxu0 %v80
    %211 = vmatprep.subr.mxu0 %v85
    %212 = vmatpush1.msra.mxu0 %v84
    %213 = vmatprep.subr.mxu0 %v89
    %214 = vmatpush1.msra.mxu0 %v88
    %215 = vmatprep.subr.mxu0 %v93
    %216 = vmatpush1.msra.mxu0 %v92
    %217 = vmatprep.subr.mxu0 %v97
    %218 = vmatpush1.msra.mxu0 %v96
    %219 = vmatprep.subr.mxu0 %v101
    %220 = vmatpush1.msra.mxu0 %v100
    %221 = vmatprep.subr.mxu0 %v105
    %222 = vmatpush1.msra.mxu0 %v104
    %223 = vmatprep.subr.mxu0 %v109
    %224 = vmatpush1.msra.mxu0 %v108
    %225 = vmatprep.subr.mxu0 %v113
    %226 = vmatpush1.msra.mxu0 %v112
    %227 = vmatprep.subr.mxu0 %v117
    %228 = vmatpush1.msra.mxu0 %v116
    %229 = vmatprep.subr.mxu0 %v121
    %230 = vmatpush1.msra.mxu0 %v120
    %231 = vmatprep.subr.mxu0 %v125
    %232 = vmatpush1.msra.mxu0 %v124
    %233 = vmatprep.subr.mxu0 %v129
    %234 = vmatpush1.msra.mxu0 %v128
    %235 = vmatprep.subr.mxu0 %v133
    %236 = vmatpush1.msra.mxu0 %v132
    %237 = vmatprep.subr.mxu0 0.0
    %238 = vmatpush1.msra.mxu0 0.0
    %239 = vmatprep.subr.mxu0 0.0
    %240 = vmatpush1.msra.mxu0 0.0
    %241 = vmatprep.subr.mxu0 0.0
    %242 = vmatpush1.msra.mxu0 0.0
    %243 = vmatprep.subr.mxu0 0.0
    %244 = vmatpush1.msra.mxu0 0.0
    %245 = vmatprep.subr.mxu0 0.0
    %246 = vmatpush1.msra.mxu0 0.0
    %247 = vmatprep.subr.mxu0 0.0
    %248 = vmatpush1.msra.mxu0 0.0
    %249 = vmatprep.subr.mxu0 0.0
    %250 = vmatpush1.msra.mxu0 0.0
    %251 = vmatprep.subr.mxu0 0.0
    %252 = vmatpush1.msra.mxu0 0.0
    %253 = vmatprep.subr.mxu0 0.0
    %254 = vmatpush1.msra.mxu0 0.0
    %255 = vmatprep.subr.mxu0 0.0
    %256 = vmatpush1.msra.mxu0 0.0
    %257 = vmatprep.subr.mxu0 0.0
    %258 = vmatpush1.msra.mxu0 0.0
    %259 = vmatprep.subr.mxu0 0.0
    %260 = vmatpush1.msra.mxu0 0.0
    %261 = vmatprep.subr.mxu0 0.0
    %262 = vmatpush1.msra.mxu0 0.0
    %263 = vmatprep.subr.mxu0 0.0
    %264 = vmatpush1.msra.mxu0 0.0
    %265 = vmatprep.subr.mxu0 0.0
    %266 = vmatpush1.msra.mxu0 0.0
    %267 = vmatprep.subr.mxu0 0.0
    %268 = vmatpush1.msra.mxu0 0.0
    %269 = vmatprep.mubr.f32.mxu0 0.0
    %270 = vmatmul.mubr.f32.gmra.mrb[0].mxu0 %v69
    %v271 = vpop.f32.mrb[0].mxu0
    %v272 = vadd.f32 0.0, %v271
    %v273 = vpop.f32.mrb[0].mxu0
    %v274 = vadd.f32 0.0, %v273
    %275 = vdwg.mxu0
    %v280 = vcombine.low %v201, %v203
    %v281 = vcombine.low %v272, %v274
    %v283 = vunpack.c.l.s4 1983009808
    %v284 = vunpack.c.0.s8 %v283
    %v285 = vlaneseq
    %v286 = vshrl.u32 %v285, 7
    %v287 = vsub.s32 %v284, %v286
    %v288 = vrot.slane %v280, %v287
    %v290 = vunpack.c.l.s4 1983009808
    %v291 = vunpack.c.0.s8 %v290
    %v292 = vlaneseq
    %v293 = vshrl.u32 %v292, 7
    %v294 = vsub.s32 %v291, %v293
    %v295 = vrot.slane %v281, %v294
    %v296 = vcombine.low %v288, %v295
    %v298 = vadd.f32 %v68, %v296
    %v299 = vxor.u32 %v298, 2147483648
    %v300 = vmul.f32 %v299, 1.442695
    %v301 = vpow.pop %v300
    %v302 = vadd.f32 %v301, 1.0
    %v303 = vrcp.pop %v302
    %v304 = vmul.f32 1.0, %v303
    %v306 = vrot.slane %v298, 4
    %v308 = vtanh.pop %v306
    %v309 = vrot.slane %v298, 6
    %v311 = vxor.u32 %v309, 2147483648
    %v312 = vmul.f32 %v311, 1.442695
    %v313 = vpow.pop %v312
    %v314 = vadd.f32 %v313, 1.0
    %v315 = vrcp.pop %v314
    %v316 = vmul.f32 1.0, %v315
    %v317 = vld [vmem:[#allocation3] sm:$0x3]
    %v319 = vrot.slane %v304, 2
    %v321 = vmul.f32 %v319, %v317
    %v322 = vmul.f32 %v304, %v308
    %v323 = vadd.f32 %v321, %v322
    %v324 = vtanh.pop %v323
    %v325 = vmul.f32 %v316, %v324
    %s326 = sadd.s32 %s57, %s64
    %p327 = scmp.lt.s32.totalorder %s326, 16
    %s328 = scalar_select %p327, 1, 0
    %s329 = scvt.s32.f32 %s328
    %v330 = vstv %s329
    %v331 = vmul.f32 %v330, %v323
    %s332 = ssub.f32 1.0, %s329
    %v333 = vstv %s332
    %v334 = vmul.f32 %v333, %v317
    %v335 = vadd.f32 %v331, %v334
    %336 = vst [vmem:[#allocation3] sm:$0x3] %v335
    %v337 = vmul.f32 %v330, %v325
    %v338 = vld [vmem:[#allocation2] sm:$0x3]
    %v339 = vmul.f32 %v333, %v338
    %v340 = vadd.f32 %v337, %v339
    %341 = vst [vmem:[#allocation2] sm:$0x3] %v340
    %v342 = vld [vmem:[#allocation2] sm:$0x3]
    %s343 = smul.u32 %s64, 2
    %s344 = scalar_lea.vmem %s47, %s343
    %345 = vst [vmem:[%s344] sm:$0x3] %v342
  $region18: #{srnn_forward.10} parent=0 // loop_footer
    %s63 = sadd.s32 1, %s59
  $region19: #{srnn_forward.10} parent=0 // loop_footer_branch
    %58 = sbr.rel target = $region15
  $region20: #{srnn_forward.10} parent=0 // loop_exit
    _
  %s346 = ssub.s32 0, 0
  %s347 = smul.u32 16, %s346
  %p348 = scmp.lt.s32.totalorder %s347, 15
  %s349 = scalar_select %p348, %s347, 15
  %s350 = smul.addr %s349, 2
  %s351 = scalar_lea.vmem %s2, %s350
  // Predicated region
  $region21: #{srnn_forward.10} parent=0 // pred_check
    _
  $region22: #{srnn_forward.10} parent=0 // pred_check_branch
    %353 = sbr.rel (0) target = $region24
  $region23: #{srnn_forward.10} parent=0 // pred_region
    %s354 = ssub.s32 0, 0
    %s355 = smul.u32 16, %s354
  $region24: #{srnn_forward.10} parent=0 // pred_fallthru
    _
  // Predicated region
  $region25: #{srnn_forward.10} parent=0 // pred_check
    _
  $region26: #{srnn_forward.10} parent=0 // pred_check_branch
    %357 = sbr.rel (0) target = $region28
  $region27: #{srnn_forward.10} parent=0 // pred_region
    %s358 = ssub.s32 0, 0
    %s359 = smul.u32 16, %s358
    %p360 = scmp.lt.s32.totalorder %s359, 15
    %s361 = scalar_select %p360, %s359, 15
    %s362 = smul.addr %s361, 2
    %s363 = scalar_lea.vmem %s2, %s362
  $region28: #{srnn_forward.10} parent=0 // pred_fallthru
    _

// kernel: srnn_forward.11
$region0: #{srnn_forward.11}
  #allocation0 [shape = 'u32[]', space=smem, size = 0x4, offset = 0x4, fixed_abs, tag = 'smem constant byte address 0x4 - core index']
  #allocation1 [shape = 'u32[144,128]{1,0:T(1,128)}', space=vmem, size = 0x12000, scoped, tag = 'internal scratch']
  %s0 = inlined_call_operand.vmem [shape: f32[32,128], index: 0, kind: input, shape index: {}]
  %s1 = inlined_call_operand.vmem [shape: f32[128,128], index: 1, kind: input, shape index: {}]
  %s2 = inlined_call_operand.vmem [shape: f32[1,128], index: 2, kind: input, shape index: {}]
  %s3 = inlined_call_operand.vmem [shape: f32[32,128], index: 3, kind: output, shape index: {}]
  %s4 = sld [smem:[#allocation0]]
  $region22: #{srnn_forward.11} parent=0
    _
  %s6 = ssub.s32 1, %s4
  %s7 = scalar_select 0, %s6, %s4
  // Predicated region
  $region2: #{srnn_forward.11} parent=0 // pred_check
    _
  $region3: #{srnn_forward.11} parent=0 // pred_check_branch
    %9 = sbr.rel (0) target = $region5
  $region4: #{srnn_forward.11} parent=0 // pred_region
    _
  $region5: #{srnn_forward.11} parent=0 // pred_fallthru
    _
  // Predicated region
  $region6: #{srnn_forward.11} parent=0 // pred_check
    _
  $region7: #{srnn_forward.11} parent=0 // pred_check_branch
    %11 = sbr.rel (0) target = $region9
  $region8: #{srnn_forward.11} parent=0 // pred_region
    _
  $region9: #{srnn_forward.11} parent=0 // pred_fallthru
    _
  // Predicated region
  $region10: #{srnn_forward.11} parent=0 // pred_check
    _
  $region11: #{srnn_forward.11} parent=0 // pred_check_branch
    %13 = sbr.rel (0) target = $region13
  $region12: #{srnn_forward.11} parent=0 // pred_region
    _
  $region13: #{srnn_forward.11} parent=0 // pred_fallthru
    _
  %v14 = vld [vmem:[%s0] sm:$0xff]
  %v15 = vld [vmem:[%s0 + $0x8] sm:$0xff]
  %v16 = vld [vmem:[%s0 + $0x10] sm:$0xff]
  %v17 = vld [vmem:[%s0 + $0x18] sm:$0xff]
  %v18 = vld [vmem:[%s1] sm:$0xff]
  %v19 = vld [vmem:[%s1 + $0x8] sm:$0xff]
  %v20 = vld [vmem:[%s1 + $0x10] sm:$0xff]
  %v21 = vld [vmem:[%s1 + $0x18] sm:$0xff]
  %v22 = vld [vmem:[%s1 + $0x20] sm:$0xff]
  %v23 = vld [vmem:[%s1 + $0x28] sm:$0xff]
  %v24 = vld [vmem:[%s1 + $0x30] sm:$0xff]
  %v25 = vld [vmem:[%s1 + $0x38] sm:$0xff]
  %v26 = vld [vmem:[%s1 + $0x40] sm:$0xff]
  %v27 = vld [vmem:[%s1 + $0x48] sm:$0xff]
  %v28 = vld [vmem:[%s1 + $0x50] sm:$0xff]
  %v29 = vld [vmem:[%s1 + $0x58] sm:$0xff]
  %v30 = vld [vmem:[%s1 + $0x60] sm:$0xff]
  %v31 = vld [vmem:[%s1 + $0x68] sm:$0xff]
  %v32 = vld [vmem:[%s1 + $0x70] sm:$0xff]
  %v33 = vld [vmem:[%s1 + $0x78] sm:$0xff]
  %v34 = vld [vmem:[%s2] sm:$0x1]
  %v36 = vlaneseq
  %v37 = vshrl.u32 %v36, 7
  %v38 = vsub.s32 0, %v37
  %v39 = vrot.slane %v34, %v38
  %41 = vmatprep.subr.mxu0 0.0
  %42 = vmatpush1.msra.mxu0 %v18
  %43 = vmatprep.subr.mxu0 0.0
  %44 = vmatpush1.msra.mxu0 %v19
  %45 = vmatprep.subr.mxu0 0.0
  %46 = vmatpush1.msra.mxu0 %v20
  %47 = vmatprep.subr.mxu0 0.0
  %48 = vmatpush1.msra.mxu0 %v21
  %49 = vmatprep.subr.mxu0 0.0
  %50 = vmatpush1.msra.mxu0 %v22
  %51 = vmatprep.subr.mxu0 0.0
  %52 = vmatpush1.msra.mxu0 %v23
  %53 = vmatprep.subr.mxu0 0.0
  %54 = vmatpush1.msra.mxu0 %v24
  %55 = vmatprep.subr.mxu0 0.0
  %56 = vmatpush1.msra.mxu0 %v25
  %57 = vmatprep.subr.mxu0 0.0
  %58 = vmatpush1.msra.mxu0 %v26
  %59 = vmatprep.subr.mxu0 0.0
  %60 = vmatpush1.msra.mxu0 %v27
  %61 = vmatprep.subr.mxu0 0.0
  %62 = vmatpush1.msra.mxu0 %v28
  %63 = vmatprep.subr.mxu0 0.0
  %64 = vmatpush1.msra.mxu0 %v29
  %65 = vmatprep.subr.mxu0 0.0
  %66 = vmatpush1.msra.mxu0 %v30
  %67 = vmatprep.subr.mxu0 0.0
  %68 = vmatpush1.msra.mxu0 %v31
  %69 = vmatprep.subr.mxu0 0.0
  %70 = vmatpush1.msra.mxu0 %v32
  %71 = vmatprep.subr.mxu0 0.0
  %72 = vmatpush1.msra.mxu0 %v33
  %73 = vmatprep.subr.mxu0 0.0
  %74 = vmatpush1.msra.mxu0 0.0
  %75 = vmatprep.subr.mxu0 0.0
  %76 = vmatpush1.msra.mxu0 0.0
  %77 = vmatprep.subr.mxu0 0.0
  %78 = vmatpush1.msra.mxu0 0.0
  %79 = vmatprep.subr.mxu0 0.0
  %80 = vmatpush1.msra.mxu0 0.0
  %81 = vmatprep.subr.mxu0 0.0
  %82 = vmatpush1.msra.mxu0 0.0
  %83 = vmatprep.subr.mxu0 0.0
  %84 = vmatpush1.msra.mxu0 0.0
  %85 = vmatprep.subr.mxu0 0.0
  %86 = vmatpush1.msra.mxu0 0.0
  %87 = vmatprep.subr.mxu0 0.0
  %88 = vmatpush1.msra.mxu0 0.0
  %89 = vmatprep.subr.mxu0 0.0
  %90 = vmatpush1.msra.mxu0 0.0
  %91 = vmatprep.subr.mxu0 0.0
  %92 = vmatpush1.msra.mxu0 0.0
  %93 = vmatprep.subr.mxu0 0.0
  %94 = vmatpush1.msra.mxu0 0.0
  %95 = vmatprep.subr.mxu0 0.0
  %96 = vmatpush1.msra.mxu0 0.0
  %97 = vmatprep.subr.mxu0 0.0
  %98 = vmatpush1.msra.mxu0 0.0
  %99 = vmatprep.subr.mxu0 0.0
  %100 = vmatpush1.msra.mxu0 0.0
  %101 = vmatprep.subr.mxu0 0.0
  %102 = vmatpush1.msra.mxu0 0.0
  %103 = vmatprep.subr.mxu0 0.0
  %104 = vmatpush1.msra.mxu0 0.0
  %105 = vmatprep.mubr.f32.mxu0 0.0
  %106 = vmatmul.mubr.f32.gmra.mrb[0].mxu0 %v14
  %v107 = vpop.f32.mrb[0].mxu0
  %v108 = vadd.f32 %v39, %v107
  %v109 = vpop.f32.mrb[0].mxu0
  %110 = vmatprep.mubr.f32.mxu0 0.0
  %111 = vmatmul.mubr.f32.gmra.mrb[0].mxu0 %v15
  %v112 = vpop.f32.mrb[0].mxu0
  %v113 = vadd.f32 %v39, %v112
  %v114 = vpop.f32.mrb[0].mxu0
  %115 = vmatprep.mubr.f32.mxu0 0.0
  %116 = vmatmul.mubr.f32.gmra.mrb[0].mxu0 %v16
  %v117 = vpop.f32.mrb[0].mxu0
  %v118 = vadd.f32 %v39, %v117
  %v119 = vpop.f32.mrb[0].mxu0
  %120 = vmatprep.mubr.f32.mxu0 0.0
  %121 = vmatmul.mubr.f32.gmra.mrb[0].mxu0 %v17
  %v122 = vpop.f32.mrb[0].mxu0
  %v123 = vadd.f32 %v39, %v122
  %v124 = vpop.f32.mrb[0].mxu0
  %125 = vdwg.mxu0
  %126 = vst [vmem:[%s3] sm:$0xff] %v108
  %127 = vst [vmem:[%s3 + $0x8] sm:$0xff] %v113
  %128 = vst [vmem:[%s3 + $0x10] sm:$0xff] %v118
  %129 = vst [vmem:[%s3 + $0x18] sm:$0xff] %v123
  // Predicated region
  $region14: #{srnn_forward.11} parent=0 // pred_check
    _
  $region15: #{srnn_forward.11} parent=0 // pred_check_branch
    %131 = sbr.rel (0) target = $region17
  $region16: #{srnn_forward.11} parent=0 // pred_region
    _
  $region17: #{srnn_forward.11} parent=0 // pred_fallthru
    _
  // Predicated region
  $region18: #{srnn_forward.11} parent=0 // pred_check
    _
  $region19: #{srnn_forward.11} parent=0 // pred_check_branch
    %133 = sbr.rel (0) target = $region21
  $region20: #{srnn_forward.11} parent=0 // pred_region
    _
  $region21: #{srnn_forward.11} parent=0 // pred_fallthru
    _

// kernel: srnn_forward.12
$region0: #{srnn_forward.12}
  #allocation0 [shape = 'u32[]', space=smem, size = 0x4, offset = 0x4, fixed_abs, tag = 'smem constant byte address 0x4 - core index']
  #allocation1 [shape = 'u32[144,128]{1,0:T(1,128)}', space=vmem, size = 0x12000, scoped, tag = 'internal scratch']
  #allocation2 [shape = 'f32[2,16]{1,0:T(2,128)}', space=vmem, size = 0x400, scoped, tag = 'scratch operand']
  %s0 = inlined_call_operand.vmem [shape: f32[16,2,128], index: 0, kind: input, shape index: {}]
  %s1 = inlined_call_operand.vmem [shape: f32[16,2,16], index: 1, kind: input, shape index: {}]
  %s2 = inlined_call_operand.vmem [shape: f32[16,128], index: 2, kind: input, shape index: {}]
  %s3 = inlined_call_operand.vmem [shape: f32[128,128], index: 3, kind: input, shape index: {}]
  %s4 = inlined_call_operand.vmem [shape: f32[1,128], index: 4, kind: input, shape index: {}]
  %s5 = inlined_call_operand.vmem [shape: f32[128,16], index: 5, kind: input, shape index: {}]
  %s6 = inlined_call_operand.vmem [shape: f32[1,16], index: 6, kind: input, shape index: {}]
  %s7 = inlined_call_operand.vmem [shape: f32[128,16], index: 7, kind: input, shape index: {}]
  %s8 = inlined_call_operand.vmem [shape: f32[1,16], index: 8, kind: input, shape index: {}]
  %s9 = inlined_call_operand.vmem [shape: f32[16,2,16], index: 9, kind: output, shape index: {0}]
  %s10 = inlined_call_operand.vmem [shape: f32[16,2,16], index: 10, kind: output, shape index: {1}]
  %s11 = inlined_call_operand.vmem [shape: f32[16,2,16], index: 11, kind: output, shape index: {2}]
  %12 = xla_tuple %s9, %s10, %s11
  %s13 = sld [smem:[#allocation0]]
  $region73: #{srnn_forward.12} parent=0
    _
  %s15 = ssub.s32 1, %s13
  %s16 = scalar_select 0, %s15, %s13
  // Predicated region
  $region2: #{srnn_forward.12} parent=0 // pred_check
    _
  $region3: #{srnn_forward.12} parent=0 // pred_check_branch
    %18 = sbr.rel (0) target = $region5
  $region4: #{srnn_forward.12} parent=0 // pred_region
    _
  $region5: #{srnn_forward.12} parent=0 // pred_fallthru
    _
  // Predicated region
  $region6: #{srnn_forward.12} parent=0 // pred_check
    _
  $region7: #{srnn_forward.12} parent=0 // pred_check_branch
    %20 = sbr.rel (0) target = $region9
  $region8: #{srnn_forward.12} parent=0 // pred_region
    _
  $region9: #{srnn_forward.12} parent=0 // pred_fallthru
    _
  // Predicated region
  $region10: #{srnn_forward.12} parent=0 // pred_check
    _
  $region11: #{srnn_forward.12} parent=0 // pred_check_branch
    %22 = sbr.rel (0) target = $region13
  $region12: #{srnn_forward.12} parent=0 // pred_region
    _
  $region13: #{srnn_forward.12} parent=0 // pred_fallthru
    _
  // Predicated region
  $region14: #{srnn_forward.12} parent=0 // pred_check
    _
  $region15: #{srnn_forward.12} parent=0 // pred_check_branch
    %24 = sbr.rel (0) target = $region17
  $region16: #{srnn_forward.12} parent=0 // pred_region
    _
  $region17: #{srnn_forward.12} parent=0 // pred_fallthru
    _
  // Predicated region
  $region18: #{srnn_forward.12} parent=0 // pred_check
    _
  $region19: #{srnn_forward.12} parent=0 // pred_check_branch
    %26 = sbr.rel (0) target = $region21
  $region20: #{srnn_forward.12} parent=0 // pred_region
    _
  $region21: #{srnn_forward.12} parent=0 // pred_fallthru
    _
  // Predicated region
  $region22: #{srnn_forward.12} parent=0 // pred_check
    _
  $region23: #{srnn_forward.12} parent=0 // pred_check_branch
    %28 = sbr.rel (0) target = $region25
  $region24: #{srnn_forward.12} parent=0 // pred_region
    _
  $region25: #{srnn_forward.12} parent=0 // pred_fallthru
    _
  // Predicated region
  $region26: #{srnn_forward.12} parent=0 // pred_check
    _
  $region27: #{srnn_forward.12} parent=0 // pred_check_branch
    %30 = sbr.rel (0) target = $region29
  $region28: #{srnn_forward.12} parent=0 // pred_region
    _
  $region29: #{srnn_forward.12} parent=0 // pred_fallthru
    _
  // Predicated region
  $region30: #{srnn_forward.12} parent=0 // pred_check
    _
  $region31: #{srnn_forward.12} parent=0 // pred_check_branch
    %32 = sbr.rel (0) target = $region33
  $region32: #{srnn_forward.12} parent=0 // pred_region
    _
  $region33: #{srnn_forward.12} parent=0 // pred_fallthru
    _
  // Predicated region
  $region34: #{srnn_forward.12} parent=0 // pred_check
    _
  $region35: #{srnn_forward.12} parent=0 // pred_check_branch
    %34 = sbr.rel (0) target = $region37
  $region36: #{srnn_forward.12} parent=0 // pred_region
    _
  $region37: #{srnn_forward.12} parent=0 // pred_fallthru
    _
  %p35 = scmp.eq.s32.totalorder 0, 0
  // Predicated region
  $region38: #{srnn_forward.12} parent=0 // pred_check
    %p36 = pneg %p35
  $region39: #{srnn_forward.12} parent=0 // pred_check_branch
    %38 = sbr.rel (%p36) target = $region41
  $region40: #{srnn_forward.12} parent=0 // pred_region
    %vm39 = vcmask 123904
    %40 = vst.msk [vmem:[#allocation2] sm:$0x3] %vm39, 0.0
  $region41: #{srnn_forward.12} parent=0 // pred_fallthru
    _
  loop: start=0, step=1, limit=16
  $region42: #{srnn_forward.12} parent=0 // loop_pre_header
    _
  $region43: #{srnn_forward.12} parent=0 // loop_header
    %s42 = sphi 0, %s46
    %p43 = scmp.ge.s32.totalorder %s42, 16
  $region44: #{srnn_forward.12} parent=0 // loop_header_branch
    %45 = sbr.rel (%p43) target = $region48
  $region45: #{srnn_forward.12} parent=0 // loop_body
    %s47 = smul.u32 %s42, 2
    %s48 = scalar_lea.vmem %s0, %s47
    %v49 = vld [vmem:[%s48] sm:$0x3]
    %v50 = vld [vmem:[#allocation2] sm:$0x3]
    %v51 = vld [vmem:[%s2] sm:$0xff]
    %v52 = vld [vmem:[%s2 + $0x8] sm:$0xff]
    %vm53 = vcmask 130048
    %v55 = vsel %vm53, %v50, 0
    %57 = vmatprep.subr.mxu0 0.0
    %58 = vmatpush1.msra.mxu0 %v51
    %59 = vmatprep.subr.mxu0 0.0
    %60 = vmatpush1.msra.mxu0 %v52
    %61 = vmatprep.subr.mxu0 0.0
    %62 = vmatpush1.msra.mxu0 0.0
    %63 = vmatprep.subr.mxu0 0.0
    %64 = vmatpush1.msra.mxu0 0.0
    %65 = vmatprep.subr.mxu0 0.0
    %66 = vmatpush1.msra.mxu0 0.0
    %67 = vmatprep.subr.mxu0 0.0
    %68 = vmatpush1.msra.mxu0 0.0
    %69 = vmatprep.subr.mxu0 0.0
    %70 = vmatpush1.msra.mxu0 0.0
    %71 = vmatprep.subr.mxu0 0.0
    %72 = vmatpush1.msra.mxu0 0.0
    %73 = vmatprep.subr.mxu0 0.0
    %74 = vmatpush1.msra.mxu0 0.0
    %75 = vmatprep.subr.mxu0 0.0
    %76 = vmatpush1.msra.mxu0 0.0
    %77 = vmatprep.subr.mxu0 0.0
    %78 = vmatpush1.msra.mxu0 0.0
    %79 = vmatprep.subr.mxu0 0.0
    %80 = vmatpush1.msra.mxu0 0.0
    %81 = vmatprep.subr.mxu0 0.0
    %82 = vmatpush1.msra.mxu0 0.0
    %83 = vmatprep.subr.mxu0 0.0
    %84 = vmatpush1.msra.mxu0 0.0
    %85 = vmatprep.subr.mxu0 0.0
    %86 = vmatpush1.msra.mxu0 0.0
    %87 = vmatprep.subr.mxu0 0.0
    %88 = vmatpush1.msra.mxu0 0.0
    %89 = vmatprep.subr.mxu0 0.0
    %90 = vmatpush1.msra.mxu0 0.0
    %91 = vmatprep.subr.mxu0 0.0
    %92 = vmatpush1.msra.mxu0 0.0
    %93 = vmatprep.subr.mxu0 0.0
    %94 = vmatpush1.msra.mxu0 0.0
    %95 = vmatprep.subr.mxu0 0.0
    %96 = vmatpush1.msra.mxu0 0.0
    %97 = vmatprep.subr.mxu0 0.0
    %98 = vmatpush1.msra.mxu0 0.0
    %99 = vmatprep.subr.mxu0 0.0
    %100 = vmatpush1.msra.mxu0 0.0
    %101 = vmatprep.subr.mxu0 0.0
    %102 = vmatpush1.msra.mxu0 0.0
    %103 = vmatprep.subr.mxu0 0.0
    %104 = vmatpush1.msra.mxu0 0.0
    %105 = vmatprep.subr.mxu0 0.0
    %106 = vmatpush1.msra.mxu0 0.0
    %107 = vmatprep.subr.mxu0 0.0
    %108 = vmatpush1.msra.mxu0 0.0
    %109 = vmatprep.subr.mxu0 0.0
    %110 = vmatpush1.msra.mxu0 0.0
    %111 = vmatprep.subr.mxu0 0.0
    %112 = vmatpush1.msra.mxu0 0.0
    %113 = vmatprep.subr.mxu0 0.0
    %114 = vmatpush1.msra.mxu0 0.0
    %115 = vmatprep.subr.mxu0 0.0
    %116 = vmatpush1.msra.mxu0 0.0
    %117 = vmatprep.subr.mxu0 0.0
    %118 = vmatpush1.msra.mxu0 0.0
    %119 = vmatprep.subr.mxu0 0.0
    %120 = vmatpush1.msra.mxu0 0.0
    %121 = vmatprep.mubr.f32.mxu0 0.0
    %122 = vmatmul.mubr.f32.gmra.mrb[0].mxu0 %v55
    %v123 = vpop.f32.mrb[0].mxu0
    %v124 = vadd.f32 0.0, %v123
    %v125 = vpop.f32.mrb[0].mxu0
    %126 = vdwg.mxu0
    %v127 = vadd.f32 %v49, %v124
    %v128 = vtanh.pop %v127
    %v129 = vld [vmem:[%s3] sm:$0xff]
    %v130 = vld [vmem:[%s3 + $0x8] sm:$0xff]
    %v131 = vld [vmem:[%s3 + $0x10] sm:$0xff]
    %v132 = vld [vmem:[%s3 + $0x18] sm:$0xff]
    %v133 = vld [vmem:[%s3 + $0x20] sm:$0xff]
    %v134 = vld [vmem:[%s3 + $0x28] sm:$0xff]
    %v135 = vld [vmem:[%s3 + $0x30] sm:$0xff]
    %v136 = vld [vmem:[%s3 + $0x38] sm:$0xff]
    %v137 = vld [vmem:[%s3 + $0x40] sm:$0xff]
    %v138 = vld [vmem:[%s3 + $0x48] sm:$0xff]
    %v139 = vld [vmem:[%s3 + $0x50] sm:$0xff]
    %v140 = vld [vmem:[%s3 + $0x58] sm:$0xff]
    %v141 = vld [vmem:[%s3 + $0x60] sm:$0xff]
    %v142 = vld [vmem:[%s3 + $0x68] sm:$0xff]
    %v143 = vld [vmem:[%s3 + $0x70] sm:$0xff]
    %v144 = vld [vmem:[%s3 + $0x78] sm:$0xff]
    %v145 = vld [vmem:[%s4] sm:$0x1]
    %v147 = vlaneseq
    %v148 = vshrl.u32 %v147, 7
    %v149 = vsub.s32 0, %v148
    %v150 = vrot.slane %v145, %v149
    %152 = vmatprep.subr.mxu0 0.0
    %153 = vmatpush1.msra.mxu0 %v129
    %154 = vmatprep.subr.mxu0 0.0
    %155 = vmatpush1.msra.mxu0 %v130
    %156 = vmatprep.subr.mxu0 0.0
    %157 = vmatpush1.msra.mxu0 %v131
    %158 = vmatprep.subr.mxu0 0.0
    %159 = vmatpush1.msra.mxu0 %v132
    %160 = vmatprep.subr.mxu0 0.0
    %161 = vmatpush1.msra.mxu0 %v133
    %162 = vmatprep.subr.mxu0 0.0
    %163 = vmatpush1.msra.mxu0 %v134
    %164 = vmatprep.subr.mxu0 0.0
    %165 = vmatpush1.msra.mxu0 %v135
    %166 = vmatprep.subr.mxu0 0.0
    %167 = vmatpush1.msra.mxu0 %v136
    %168 = vmatprep.subr.mxu0 0.0
    %169 = vmatpush1.msra.mxu0 %v137
    %170 = vmatprep.subr.mxu0 0.0
    %171 = vmatpush1.msra.mxu0 %v138
    %172 = vmatprep.subr.mxu0 0.0
    %173 = vmatpush1.msra.mxu0 %v139
    %174 = vmatprep.subr.mxu0 0.0
    %175 = vmatpush1.msra.mxu0 %v140
    %176 = vmatprep.subr.mxu0 0.0
    %177 = vmatpush1.msra.mxu0 %v141
    %178 = vmatprep.subr.mxu0 0.0
    %179 = vmatpush1.msra.mxu0 %v142
    %180 = vmatprep.subr.mxu0 0.0
    %181 = vmatpush1.msra.mxu0 %v143
    %182 = vmatprep.subr.mxu0 0.0
    %183 = vmatpush1.msra.mxu0 %v144
    %184 = vmatprep.subr.mxu0 0.0
    %185 = vmatpush1.msra.mxu0 0.0
    %186 = vmatprep.subr.mxu0 0.0
    %187 = vmatpush1.msra.mxu0 0.0
    %188 = vmatprep.subr.mxu0 0.0
    %189 = vmatpush1.msra.mxu0 0.0
    %190 = vmatprep.subr.mxu0 0.0
    %191 = vmatpush1.msra.mxu0 0.0
    %192 = vmatprep.subr.mxu0 0.0
    %193 = vmatpush1.msra.mxu0 0.0
    %194 = vmatprep.subr.mxu0 0.0
    %195 = vmatpush1.msra.mxu0 0.0
    %196 = vmatprep.subr.mxu0 0.0
    %197 = vmatpush1.msra.mxu0 0.0
    %198 = vmatprep.subr.mxu0 0.0
    %199 = vmatpush1.msra.mxu0 0.0
    %200 = vmatprep.subr.mxu0 0.0
    %201 = vmatpush1.msra.mxu0 0.0
    %202 = vmatprep.subr.mxu0 0.0
    %203 = vmatpush1.msra.mxu0 0.0
    %204 = vmatprep.subr.mxu0 0.0
    %205 = vmatpush1.msra.mxu0 0.0
    %206 = vmatprep.subr.mxu0 0.0
    %207 = vmatpush1.msra.mxu0 0.0
    %208 = vmatprep.subr.mxu0 0.0
    %209 = vmatpush1.msra.mxu0 0.0
    %210 = vmatprep.subr.mxu0 0.0
    %211 = vmatpush1.msra.mxu0 0.0
    %212 = vmatprep.subr.mxu0 0.0
    %213 = vmatpush1.msra.mxu0 0.0
    %214 = vmatprep.subr.mxu0 0.0
    %215 = vmatpush1.msra.mxu0 0.0
    %216 = vmatprep.mubr.f32.mxu0 0.0
    %217 = vmatmul.mubr.f32.gmra.mrb[0].mxu0 %v128
    %v218 = vpop.f32.mrb[0].mxu0
    %v219 = vadd.f32 %v150, %v218
    %v220 = vpop.f32.mrb[0].mxu0
    %221 = vdwg.mxu0
    %v222 = vtanh.pop %v219
    %v223 = vld [vmem:[%s5] sm:$0xff]
    %v224 = vld [vmem:[%s5 + $0x8] sm:$0xff]
    %v225 = vld [vmem:[%s5 + $0x10] sm:$0xff]
    %v226 = vld [vmem:[%s5 + $0x18] sm:$0xff]
    %v227 = vld [vmem:[%s5 + $0x20] sm:$0xff]
    %v228 = vld [vmem:[%s5 + $0x28] sm:$0xff]
    %v229 = vld [vmem:[%s5 + $0x30] sm:$0xff]
    %v230 = vld [vmem:[%s5 + $0x38] sm:$0xff]
    %v231 = vld [vmem:[%s5 + $0x40] sm:$0xff]
    %v232 = vld [vmem:[%s5 + $0x48] sm:$0xff]
    %v233 = vld [vmem:[%s5 + $0x50] sm:$0xff]
    %v234 = vld [vmem:[%s5 + $0x58] sm:$0xff]
    %v235 = vld [vmem:[%s5 + $0x60] sm:$0xff]
    %v236 = vld [vmem:[%s5 + $0x68] sm:$0xff]
    %v237 = vld [vmem:[%s5 + $0x70] sm:$0xff]
    %v238 = vld [vmem:[%s5 + $0x78] sm:$0xff]
    %v239 = vld [vmem:[%s6] sm:$0x1]
    %v241 = vlaneseq
    %v242 = vshrl.u32 %v241, 7
    %v243 = vsub.s32 0, %v242
    %v244 = vrot.slane %v239, %v243
    %246 = vmatprep.subr.mxu0 0.0
    %247 = vmatpush1.msra.mxu0 %v223
    %248 = vmatprep.subr.mxu0 0.0
    %249 = vmatpush1.msra.mxu0 %v224
    %250 = vmatprep.subr.mxu0 0.0
    %251 = vmatpush1.msra.mxu0 %v225
    %252 = vmatprep.subr.mxu0 0.0
    %253 = vmatpush1.msra.mxu0 %v226
    %254 = vmatprep.subr.mxu0 0.0
    %255 = vmatpush1.msra.mxu0 %v227
    %256 = vmatprep.subr.mxu0 0.0
    %257 = vmatpush1.msra.mxu0 %v228
    %258 = vmatprep.subr.mxu0 0.0
    %259 = vmatpush1.msra.mxu0 %v229
    %260 = vmatprep.subr.mxu0 0.0
    %261 = vmatpush1.msra.mxu0 %v230
    %262 = vmatprep.subr.mxu0 0.0
    %263 = vmatpush1.msra.mxu0 %v231
    %264 = vmatprep.subr.mxu0 0.0
    %265 = vmatpush1.msra.mxu0 %v232
    %266 = vmatprep.subr.mxu0 0.0
    %267 = vmatpush1.msra.mxu0 %v233
    %268 = vmatprep.subr.mxu0 0.0
    %269 = vmatpush1.msra.mxu0 %v234
    %270 = vmatprep.subr.mxu0 0.0
    %271 = vmatpush1.msra.mxu0 %v235
    %272 = vmatprep.subr.mxu0 0.0
    %273 = vmatpush1.msra.mxu0 %v236
    %274 = vmatprep.subr.mxu0 0.0
    %275 = vmatpush1.msra.mxu0 %v237
    %276 = vmatprep.subr.mxu0 0.0
    %277 = vmatpush1.msra.mxu0 %v238
    %278 = vmatprep.subr.mxu0 0.0
    %279 = vmatpush1.msra.mxu0 0.0
    %280 = vmatprep.subr.mxu0 0.0
    %281 = vmatpush1.msra.mxu0 0.0
    %282 = vmatprep.subr.mxu0 0.0
    %283 = vmatpush1.msra.mxu0 0.0
    %284 = vmatprep.subr.mxu0 0.0
    %285 = vmatpush1.msra.mxu0 0.0
    %286 = vmatprep.subr.mxu0 0.0
    %287 = vmatpush1.msra.mxu0 0.0
    %288 = vmatprep.subr.mxu0 0.0
    %289 = vmatpush1.msra.mxu0 0.0
    %290 = vmatprep.subr.mxu0 0.0
    %291 = vmatpush1.msra.mxu0 0.0
    %292 = vmatprep.subr.mxu0 0.0
    %293 = vmatpush1.msra.mxu0 0.0
    %294 = vmatprep.subr.mxu0 0.0
    %295 = vmatpush1.msra.mxu0 0.0
    %296 = vmatprep.subr.mxu0 0.0
    %297 = vmatpush1.msra.mxu0 0.0
    %298 = vmatprep.subr.mxu0 0.0
    %299 = vmatpush1.msra.mxu0 0.0
    %300 = vmatprep.subr.mxu0 0.0
    %301 = vmatpush1.msra.mxu0 0.0
    %302 = vmatprep.subr.mxu0 0.0
    %303 = vmatpush1.msra.mxu0 0.0
    %304 = vmatprep.subr.mxu0 0.0
    %305 = vmatpush1.msra.mxu0 0.0
    %306 = vmatprep.subr.mxu0 0.0
    %307 = vmatpush1.msra.mxu0 0.0
    %308 = vmatprep.subr.mxu0 0.0
    %309 = vmatpush1.msra.mxu0 0.0
    %310 = vmatprep.mubr.f32.mxu0 0.0
    %311 = vmatmul.mubr.f32.gmra.mrb[0].mxu0 %v222
    %v312 = vpop.f32.mrb[0].mxu0
    %v313 = vadd.f32 %v244, %v312
    %v314 = vpop.f32.mrb[0].mxu0
    %315 = vdwg.mxu0
    %v316 = vld [vmem:[%s7] sm:$0xff]
    %v317 = vld [vmem:[%s7 + $0x8] sm:$0xff]
    %v318 = vld [vmem:[%s7 + $0x10] sm:$0xff]
    %v319 = vld [vmem:[%s7 + $0x18] sm:$0xff]
    %v320 = vld [vmem:[%s7 + $0x20] sm:$0xff]
    %v321 = vld [vmem:[%s7 + $0x28] sm:$0xff]
    %v322 = vld [vmem:[%s7 + $0x30] sm:$0xff]
    %v323 = vld [vmem:[%s7 + $0x38] sm:$0xff]
    %v324 = vld [vmem:[%s7 + $0x40] sm:$0xff]
    %v325 = vld [vmem:[%s7 + $0x48] sm:$0xff]
    %v326 = vld [vmem:[%s7 + $0x50] sm:$0xff]
    %v327 = vld [vmem:[%s7 + $0x58] sm:$0xff]
    %v328 = vld [vmem:[%s7 + $0x60] sm:$0xff]
    %v329 = vld [vmem:[%s7 + $0x68] sm:$0xff]
    %v330 = vld [vmem:[%s7 + $0x70] sm:$0xff]
    %v331 = vld [vmem:[%s7 + $0x78] sm:$0xff]
    %v332 = vld [vmem:[%s8] sm:$0x1]
    %v334 = vlaneseq
    %v335 = vshrl.u32 %v334, 7
    %v336 = vsub.s32 0, %v335
    %v337 = vrot.slane %v332, %v336
    %339 = vmatprep.subr.mxu0 0.0
    %340 = vmatpush1.msra.mxu0 %v316
    %341 = vmatprep.subr.mxu0 0.0
    %342 = vmatpush1.msra.mxu0 %v317
    %343 = vmatprep.subr.mxu0 0.0
    %344 = vmatpush1.msra.mxu0 %v318
    %345 = vmatprep.subr.mxu0 0.0
    %346 = vmatpush1.msra.mxu0 %v319
    %347 = vmatprep.subr.mxu0 0.0
    %348 = vmatpush1.msra.mxu0 %v320
    %349 = vmatprep.subr.mxu0 0.0
    %350 = vmatpush1.msra.mxu0 %v321
    %351 = vmatprep.subr.mxu0 0.0
    %352 = vmatpush1.msra.mxu0 %v322
    %353 = vmatprep.subr.mxu0 0.0
    %354 = vmatpush1.msra.mxu0 %v323
    %355 = vmatprep.subr.mxu0 0.0
    %356 = vmatpush1.msra.mxu0 %v324
    %357 = vmatprep.subr.mxu0 0.0
    %358 = vmatpush1.msra.mxu0 %v325
    %359 = vmatprep.subr.mxu0 0.0
    %360 = vmatpush1.msra.mxu0 %v326
    %361 = vmatprep.subr.mxu0 0.0
    %362 = vmatpush1.msra.mxu0 %v327
    %363 = vmatprep.subr.mxu0 0.0
    %364 = vmatpush1.msra.mxu0 %v328
    %365 = vmatprep.subr.mxu0 0.0
    %366 = vmatpush1.msra.mxu0 %v329
    %367 = vmatprep.subr.mxu0 0.0
    %368 = vmatpush1.msra.mxu0 %v330
    %369 = vmatprep.subr.mxu0 0.0
    %370 = vmatpush1.msra.mxu0 %v331
    %371 = vmatprep.subr.mxu0 0.0
    %372 = vmatpush1.msra.mxu0 0.0
    %373 = vmatprep.subr.mxu0 0.0
    %374 = vmatpush1.msra.mxu0 0.0
    %375 = vmatprep.subr.mxu0 0.0
    %376 = vmatpush1.msra.mxu0 0.0
    %377 = vmatprep.subr.mxu0 0.0
    %378 = vmatpush1.msra.mxu0 0.0
    %379 = vmatprep.subr.mxu0 0.0
    %380 = vmatpush1.msra.mxu0 0.0
    %381 = vmatprep.subr.mxu0 0.0
    %382 = vmatpush1.msra.mxu0 0.0
    %383 = vmatprep.subr.mxu0 0.0
    %384 = vmatpush1.msra.mxu0 0.0
    %385 = vmatprep.subr.mxu0 0.0
    %386 = vmatpush1.msra.mxu0 0.0
    %387 = vmatprep.subr.mxu0 0.0
    %388 = vmatpush1.msra.mxu0 0.0
    %389 = vmatprep.subr.mxu0 0.0
    %390 = vmatpush1.msra.mxu0 0.0
    %391 = vmatprep.subr.mxu0 0.0
    %392 = vmatpush1.msra.mxu0 0.0
    %393 = vmatprep.subr.mxu0 0.0
    %394 = vmatpush1.msra.mxu0 0.0
    %395 = vmatprep.subr.mxu0 0.0
    %396 = vmatpush1.msra.mxu0 0.0
    %397 = vmatprep.subr.mxu0 0.0
    %398 = vmatpush1.msra.mxu0 0.0
    %399 = vmatprep.subr.mxu0 0.0
    %400 = vmatpush1.msra.mxu0 0.0
    %401 = vmatprep.subr.mxu0 0.0
    %402 = vmatpush1.msra.mxu0 0.0
    %403 = vmatprep.mubr.f32.mxu0 0.0
    %404 = vmatmul.mubr.f32.gmra.mrb[0].mxu0 %v222
    %v405 = vpop.f32.mrb[0].mxu0
    %v406 = vadd.f32 %v337, %v405
    %v407 = vpop.f32.mrb[0].mxu0
    %408 = vdwg.mxu0
    %s409 = scalar_lea.vmem %s1, %s47
    %v410 = vld [vmem:[%s409] sm:$0x3]
    %v411 = vmul.f32 %v406, 0.5
    %v412 = vmul.f32 %v411, 1.442695
    %v413 = vpow.pop %v412
    %v414 = vmul.f32 %v410, %v413
    %v415 = vadd.f32 %v313, %v414
    %vm416 = vcmask 123904
    %417 = vst.msk [vmem:[#allocation2] sm:$0x3] %vm416, %v415
    %s418 = scalar_lea.vmem %s10, %s47
    %419 = vst.msk [vmem:[%s418] sm:$0x3] %vm416, %v313
    %s420 = scalar_lea.vmem %s11, %s47
    %421 = vst.msk [vmem:[%s420] sm:$0x3] %vm416, %v406
    %s422 = scalar_lea.vmem %s9, %s47
    %423 = vst.msk [vmem:[%s422] sm:$0x3] %vm416, %v415
  $region46: #{srnn_forward.12} parent=0 // loop_footer
    %s46 = sadd.s32 1, %s42
  $region47: #{srnn_forward.12} parent=0 // loop_footer_branch
    %41 = sbr.rel target = $region43
  $region48: #{srnn_forward.12} parent=0 // loop_exit
    _
  // Predicated region
  $region49: #{srnn_forward.12} parent=0 // pred_check
    _
  $region50: #{srnn_forward.12} parent=0 // pred_check_branch
    %425 = sbr.rel (0) target = $region52
  $region51: #{srnn_forward.12} parent=0 // pred_region
    _
  $region52: #{srnn_forward.12} parent=0 // pred_fallthru
    _
  // Predicated region
  $region53: #{srnn_forward.12} parent=0 // pred_check
    _
  $region54: #{srnn_forward.12} parent=0 // pred_check_branch
    %427 = sbr.rel (0) target = $region56
  $region55: #{srnn_forward.12} parent=0 // pred_region
    _
  $region56: #{srnn_forward.12} parent=0 // pred_fallthru
    _
  // Predicated region
  $region57: #{srnn_forward.12} parent=0 // pred_check
    _
  $region58: #{srnn_forward.12} parent=0 // pred_check_branch
    %429 = sbr.rel (0) target = $region60
  $region59: #{srnn_forward.12} parent=0 // pred_region
    _
  $region60: #{srnn_forward.12} parent=0 // pred_fallthru
    _
  // Predicated region
  $region61: #{srnn_forward.12} parent=0 // pred_check
    _
  $region62: #{srnn_forward.12} parent=0 // pred_check_branch
    %431 = sbr.rel (0) target = $region64
  $region63: #{srnn_forward.12} parent=0 // pred_region
    _
  $region64: #{srnn_forward.12} parent=0 // pred_fallthru
    _
  // Predicated region
  $region65: #{srnn_forward.12} parent=0 // pred_check
    _
  $region66: #{srnn_forward.12} parent=0 // pred_check_branch
    %433 = sbr.rel (0) target = $region68
  $region67: #{srnn_forward.12} parent=0 // pred_region
    _
  $region68: #{srnn_forward.12} parent=0 // pred_fallthru
    _
  // Predicated region
  $region69: #{srnn_forward.12} parent=0 // pred_check
    _
  $region70: #{srnn_forward.12} parent=0 // pred_check_branch
    %435 = sbr.rel (0) target = $region72
  $region71: #{srnn_forward.12} parent=0 // pred_region
    _
  $region72: #{srnn_forward.12} parent=0 // pred_fallthru
    _

// kernel: srnn_forward.13
$region0: #{srnn_forward.13}
  #allocation0 [shape = 'u32[]', space=smem, size = 0x4, offset = 0x4, fixed_abs, tag = 'smem constant byte address 0x4 - core index']
  #allocation1 [shape = 'u32[144,128]{1,0:T(1,128)}', space=vmem, size = 0x12000, scoped, tag = 'internal scratch']
  %s0 = inlined_call_operand.vmem [shape: f32[32,128], index: 0, kind: input, shape index: {}]
  %s1 = inlined_call_operand.vmem [shape: f32[32,16], index: 1, kind: input, shape index: {}]
  %s2 = inlined_call_operand.vmem [shape: f32[32,16], index: 2, kind: input, shape index: {}]
  %s3 = inlined_call_operand.vmem [shape: f32[32,1], index: 3, kind: input, shape index: {}]
  %s4 = inlined_call_operand.vmem [shape: f32[128,128], index: 4, kind: input, shape index: {}]
  %s5 = inlined_call_operand.vmem [shape: f32[16,128], index: 5, kind: input, shape index: {}]
  %s6 = inlined_call_operand.vmem [shape: f32[1,128], index: 6, kind: input, shape index: {}]
  %s7 = inlined_call_operand.vmem [shape: f32[128,128], index: 7, kind: input, shape index: {}]
  %s8 = inlined_call_operand.vmem [shape: f32[1,128], index: 8, kind: input, shape index: {}]
  %s9 = inlined_call_operand.vmem [shape: f32[128,16], index: 9, kind: input, shape index: {}]
  %s10 = inlined_call_operand.vmem [shape: f32[1,16], index: 10, kind: input, shape index: {}]
  %s11 = inlined_call_operand.vmem [shape: f32[128,16], index: 11, kind: input, shape index: {}]
  %s12 = inlined_call_operand.vmem [shape: f32[1,16], index: 12, kind: input, shape index: {}]
  %s13 = inlined_call_operand.vmem [shape: f32[128,128], index: 13, kind: input, shape index: {}]
  %s14 = inlined_call_operand.vmem [shape: f32[16,128], index: 14, kind: input, shape index: {}]
  %s15 = inlined_call_operand.vmem [shape: f32[1,128], index: 15, kind: input, shape index: {}]
  %s16 = inlined_call_operand.vmem [shape: f32[1,128], index: 16, kind: input, shape index: {}]
  %s17 = inlined_call_operand.vmem [shape: f32[128,128], index: 17, kind: input, shape index: {}]
  %s18 = inlined_call_operand.vmem [shape: f32[1,128], index: 18, kind: input, shape index: {}]
  %s19 = inlined_call_operand.vmem [shape: f32[128,4], index: 19, kind: input, shape index: {}]
  %s20 = inlined_call_operand.vmem [shape: f32[1,4], index: 20, kind: input, shape index: {}]
  %s21 = inlined_call_operand.vmem [shape: f32[32,16], index: 21, kind: output, shape index: {0}]
  %s22 = inlined_call_operand.vmem [shape: f32[32,16], index: 22, kind: output, shape index: {1}]
  %s23 = inlined_call_operand.vmem [shape: f32[32,4], index: 23, kind: output, shape index: {2}]
  %24 = xla_tuple %s21, %s22, %s23
  %s25 = sld [smem:[#allocation0]]
  $region110: #{srnn_forward.13} parent=0
    _
  %s27 = ssub.s32 1, %s25
  %s28 = scalar_select 0, %s27, %s25
  // Predicated region
  $region2: #{srnn_forward.13} parent=0 // pred_check
    _
  $region3: #{srnn_forward.13} parent=0 // pred_check_branch
    %30 = sbr.rel (0) target = $region5
  $region4: #{srnn_forward.13} parent=0 // pred_region
    _
  $region5: #{srnn_forward.13} parent=0 // pred_fallthru
    _
  // Predicated region
  $region6: #{srnn_forward.13} parent=0 // pred_check
    _
  $region7: #{srnn_forward.13} parent=0 // pred_check_branch
    %32 = sbr.rel (0) target = $region9
  $region8: #{srnn_forward.13} parent=0 // pred_region
    _
  $region9: #{srnn_forward.13} parent=0 // pred_fallthru
    _
  // Predicated region
  $region10: #{srnn_forward.13} parent=0 // pred_check
    _
  $region11: #{srnn_forward.13} parent=0 // pred_check_branch
    %34 = sbr.rel (0) target = $region13
  $region12: #{srnn_forward.13} parent=0 // pred_region
    _
  $region13: #{srnn_forward.13} parent=0 // pred_fallthru
    _
  // Predicated region
  $region14: #{srnn_forward.13} parent=0 // pred_check
    _
  $region15: #{srnn_forward.13} parent=0 // pred_check_branch
    %36 = sbr.rel (0) target = $region17
  $region16: #{srnn_forward.13} parent=0 // pred_region
    _
  $region17: #{srnn_forward.13} parent=0 // pred_fallthru
    _
  // Predicated region
  $region18: #{srnn_forward.13} parent=0 // pred_check
    _
  $region19: #{srnn_forward.13} parent=0 // pred_check_branch
    %38 = sbr.rel (0) target = $region21
  $region20: #{srnn_forward.13} parent=0 // pred_region
    _
  $region21: #{srnn_forward.13} parent=0 // pred_fallthru
    _
  // Predicated region
  $region22: #{srnn_forward.13} parent=0 // pred_check
    _
  $region23: #{srnn_forward.13} parent=0 // pred_check_branch
    %40 = sbr.rel (0) target = $region25
  $region24: #{srnn_forward.13} parent=0 // pred_region
    _
  $region25: #{srnn_forward.13} parent=0 // pred_fallthru
    _
  // Predicated region
  $region26: #{srnn_forward.13} parent=0 // pred_check
    _
  $region27: #{srnn_forward.13} parent=0 // pred_check_branch
    %42 = sbr.rel (0) target = $region29
  $region28: #{srnn_forward.13} parent=0 // pred_region
    _
  $region29: #{srnn_forward.13} parent=0 // pred_fallthru
    _
  // Predicated region
  $region30: #{srnn_forward.13} parent=0 // pred_check
    _
  $region31: #{srnn_forward.13} parent=0 // pred_check_branch
    %44 = sbr.rel (0) target = $region33
  $region32: #{srnn_forward.13} parent=0 // pred_region
    _
  $region33: #{srnn_forward.13} parent=0 // pred_fallthru
    _
  // Predicated region
  $region34: #{srnn_forward.13} parent=0 // pred_check
    _
  $region35: #{srnn_forward.13} parent=0 // pred_check_branch
    %46 = sbr.rel (0) target = $region37
  $region36: #{srnn_forward.13} parent=0 // pred_region
    _
  $region37: #{srnn_forward.13} parent=0 // pred_fallthru
    _
  // Predicated region
  $region38: #{srnn_forward.13} parent=0 // pred_check
    _
  $region39: #{srnn_forward.13} parent=0 // pred_check_branch
    %48 = sbr.rel (0) target = $region41
  $region40: #{srnn_forward.13} parent=0 // pred_region
    _
  $region41: #{srnn_forward.13} parent=0 // pred_fallthru
    _
  // Predicated region
  $region42: #{srnn_forward.13} parent=0 // pred_check
    _
  $region43: #{srnn_forward.13} parent=0 // pred_check_branch
    %50 = sbr.rel (0) target = $region45
  $region44: #{srnn_forward.13} parent=0 // pred_region
    _
  $region45: #{srnn_forward.13} parent=0 // pred_fallthru
    _
  // Predicated region
  $region46: #{srnn_forward.13} parent=0 // pred_check
    _
  $region47: #{srnn_forward.13} parent=0 // pred_check_branch
    %52 = sbr.rel (0) target = $region49
  $region48: #{srnn_forward.13} parent=0 // pred_region
    _
  $region49: #{srnn_forward.13} parent=0 // pred_fallthru
    _
  // Predicated region
  $region50: #{srnn_forward.13} parent=0 // pred_check
    _
  $region51: #{srnn_forward.13} parent=0 // pred_check_branch
    %54 = sbr.rel (0) target = $region53
  $region52: #{srnn_forward.13} parent=0 // pred_region
    _
  $region53: #{srnn_forward.13} parent=0 // pred_fallthru
    _
  // Predicated region
  $region54: #{srnn_forward.13} parent=0 // pred_check
    _
  $region55: #{srnn_forward.13} parent=0 // pred_check_branch
    %56 = sbr.rel (0) target = $region57
  $region56: #{srnn_forward.13} parent=0 // pred_region
    _
  $region57: #{srnn_forward.13} parent=0 // pred_fallthru
    _
  // Predicated region
  $region58: #{srnn_forward.13} parent=0 // pred_check
    _
  $region59: #{srnn_forward.13} parent=0 // pred_check_branch
    %58 = sbr.rel (0) target = $region61
  $region60: #{srnn_forward.13} parent=0 // pred_region
    _
  $region61: #{srnn_forward.13} parent=0 // pred_fallthru
    _
  // Predicated region
  $region62: #{srnn_forward.13} parent=0 // pred_check
    _
  $region63: #{srnn_forward.13} parent=0 // pred_check_branch
    %60 = sbr.rel (0) target = $region65
  $region64: #{srnn_forward.13} parent=0 // pred_region
    _
  $region65: #{srnn_forward.13} parent=0 // pred_fallthru
    _
  // Predicated region
  $region66: #{srnn_forward.13} parent=0 // pred_check
    _
  $region67: #{srnn_forward.13} parent=0 // pred_check_branch
    %62 = sbr.rel (0) target = $region69
  $region68: #{srnn_forward.13} parent=0 // pred_region
    _
  $region69: #{srnn_forward.13} parent=0 // pred_fallthru
    _
  // Predicated region
  $region70: #{srnn_forward.13} parent=0 // pred_check
    _
  $region71: #{srnn_forward.13} parent=0 // pred_check_branch
    %64 = sbr.rel (0) target = $region73
  $region72: #{srnn_forward.13} parent=0 // pred_region
    _
  $region73: #{srnn_forward.13} parent=0 // pred_fallthru
    _
  // Predicated region
  $region74: #{srnn_forward.13} parent=0 // pred_check
    _
  $region75: #{srnn_forward.13} parent=0 // pred_check_branch
    %66 = sbr.rel (0) target = $region77
  $region76: #{srnn_forward.13} parent=0 // pred_region
    _
  $region77: #{srnn_forward.13} parent=0 // pred_fallthru
    _
  // Predicated region
  $region78: #{srnn_forward.13} parent=0 // pred_check
    _
  $region79: #{srnn_forward.13} parent=0 // pred_check_branch
    %68 = sbr.rel (0) target = $region81
  $region80: #{srnn_forward.13} parent=0 // pred_region
    _
  $region81: #{srnn_forward.13} parent=0 // pred_fallthru
    _
  // Predicated region
  $region82: #{srnn_forward.13} parent=0 // pred_check
    _
  $region83: #{srnn_forward.13} parent=0 // pred_check_branch
    %70 = sbr.rel (0) target = $region85
  $region84: #{srnn_forward.13} parent=0 // pred_region
    _
  $region85: #{srnn_forward.13} parent=0 // pred_fallthru
    _
  %v71 = vld [vmem:[%s0] sm:$0xff]
  %v72 = vld [vmem:[%s0 + $0x8] sm:$0xff]
  %v73 = vld [vmem:[%s0 + $0x10] sm:$0xff]
  %v74 = vld [vmem:[%s0 + $0x18] sm:$0xff]
  %v75 = vld [vmem:[%s4] sm:$0xff]
  %v76 = vld [vmem:[%s4 + $0x8] sm:$0xff]
  %v77 = vld [vmem:[%s4 + $0x10] sm:$0xff]
  %v78 = vld [vmem:[%s4 + $0x18] sm:$0xff]
  %v79 = vld [vmem:[%s4 + $0x20] sm:$0xff]
  %v80 = vld [vmem:[%s4 + $0x28] sm:$0xff]
  %v81 = vld [vmem:[%s4 + $0x30] sm:$0xff]
  %v82 = vld [vmem:[%s4 + $0x38] sm:$0xff]
  %v83 = vld [vmem:[%s4 + $0x40] sm:$0xff]
  %v84 = vld [vmem:[%s4 + $0x48] sm:$0xff]
  %v85 = vld [vmem:[%s4 + $0x50] sm:$0xff]
  %v86 = vld [vmem:[%s4 + $0x58] sm:$0xff]
  %v87 = vld [vmem:[%s4 + $0x60] sm:$0xff]
  %v88 = vld [vmem:[%s4 + $0x68] sm:$0xff]
  %v89 = vld [vmem:[%s4 + $0x70] sm:$0xff]
  %v90 = vld [vmem:[%s4 + $0x78] sm:$0xff]
  %v91 = vld [vmem:[%s1] sm:$0xff]
  %v92 = vld [vmem:[%s1 + $0x8] sm:$0xff]
  %v93 = vld [vmem:[%s1 + $0x10] sm:$0xff]
  %v94 = vld [vmem:[%s1 + $0x18] sm:$0xff]
  %v95 = vld [vmem:[%s5] sm:$0xff]
  %v96 = vld [vmem:[%s5 + $0x8] sm:$0xff]
  %vm97 = vcmask 130048
  %v99 = vsel %vm97, %v91, 0
  %v102 = vsel %vm97, %v92, 0
  %v105 = vsel %vm97, %v93, 0
  %v108 = vsel %vm97, %v94, 0
  %110 = vmatprep.subr.mxu0 0.0
  %111 = vmatpush1.msra.mxu0 %v95
  %112 = vmatprep.subr.mxu0 0.0
  %113 = vmatpush1.msra.mxu0 %v96
  %114 = vmatprep.subr.mxu0 0.0
  %115 = vmatpush1.msra.mxu0 0.0
  %116 = vmatprep.subr.mxu0 0.0
  %117 = vmatpush1.msra.mxu0 0.0
  %118 = vmatprep.subr.mxu0 0.0
  %119 = vmatpush1.msra.mxu0 0.0
  %120 = vmatprep.subr.mxu0 0.0
  %121 = vmatpush1.msra.mxu0 0.0
  %122 = vmatprep.subr.mxu0 0.0
  %123 = vmatpush1.msra.mxu0 0.0
  %124 = vmatprep.subr.mxu0 0.0
  %125 = vmatpush1.msra.mxu0 0.0
  %126 = vmatprep.subr.mxu0 0.0
  %127 = vmatpush1.msra.mxu0 0.0
  %128 = vmatprep.subr.mxu0 0.0
  %129 = vmatpush1.msra.mxu0 0.0
  %130 = vmatprep.subr.mxu0 0.0
  %131 = vmatpush1.msra.mxu0 0.0
  %132 = vmatprep.subr.mxu0 0.0
  %133 = vmatpush1.msra.mxu0 0.0
  %134 = vmatprep.subr.mxu0 0.0
  %135 = vmatpush1.msra.mxu0 0.0
  %136 = vmatprep.subr.mxu0 0.0
  %137 = vmatpush1.msra.mxu0 0.0
  %138 = vmatprep.subr.mxu0 0.0
  %139 = vmatpush1.msra.mxu0 0.0
  %140 = vmatprep.subr.mxu0 0.0
  %141 = vmatpush1.msra.mxu0 0.0
  %142 = vmatprep.subr.mxu0 0.0
  %143 = vmatpush1.msra.mxu0 0.0
  %144 = vmatprep.subr.mxu0 0.0
  %145 = vmatpush1.msra.mxu0 0.0
  %146 = vmatprep.subr.mxu0 0.0
  %147 = vmatpush1.msra.mxu0 0.0
  %148 = vmatprep.subr.mxu0 0.0
  %149 = vmatpush1.msra.mxu0 0.0
  %150 = vmatprep.subr.mxu0 0.0
  %151 = vmatpush1.msra.mxu0 0.0
  %152 = vmatprep.subr.mxu0 0.0
  %153 = vmatpush1.msra.mxu0 0.0
  %154 = vmatprep.subr.mxu0 0.0
  %155 = vmatpush1.msra.mxu0 0.0
  %156 = vmatprep.subr.mxu0 0.0
  %157 = vmatpush1.msra.mxu0 0.0
  %158 = vmatprep.subr.mxu0 0.0
  %159 = vmatpush1.msra.mxu0 0.0
  %160 = vmatprep.subr.mxu0 0.0
  %161 = vmatpush1.msra.mxu0 0.0
  %162 = vmatprep.subr.mxu0 0.0
  %163 = vmatpush1.msra.mxu0 0.0
  %164 = vmatprep.subr.mxu0 0.0
  %165 = vmatpush1.msra.mxu0 0.0
  %166 = vmatprep.subr.mxu0 0.0
  %167 = vmatpush1.msra.mxu0 0.0
  %168 = vmatprep.subr.mxu0 0.0
  %169 = vmatpush1.msra.mxu0 0.0
  %170 = vmatprep.subr.mxu0 0.0
  %171 = vmatpush1.msra.mxu0 0.0
  %172 = vmatprep.subr.mxu0 0.0
  %173 = vmatpush1.msra.mxu0 0.0
  %174 = vmatprep.mubr.f32.mxu0 0.0
  %175 = vmatmul.mubr.f32.gmra.mrb[0].mxu0 %v99
  %v176 = vpop.f32.mrb[0].mxu0
  %v177 = vadd.f32 0.0, %v176
  %v178 = vpop.f32.mrb[0].mxu0
  %179 = vmatprep.mubr.f32.mxu0 0.0
  %180 = vmatmul.mubr.f32.gmra.mrb[0].mxu0 %v102
  %v181 = vpop.f32.mrb[0].mxu0
  %v182 = vadd.f32 0.0, %v181
  %v183 = vpop.f32.mrb[0].mxu0
  %184 = vmatprep.mubr.f32.mxu0 0.0
  %185 = vmatmul.mubr.f32.gmra.mrb[0].mxu0 %v105
  %v186 = vpop.f32.mrb[0].mxu0
  %v187 = vadd.f32 0.0, %v186
  %v188 = vpop.f32.mrb[0].mxu0
  %189 = vmatprep.mubr.f32.mxu0 0.0
  %190 = vmatmul.mubr.f32.gmra.mrb[0].mxu0 %v108
  %v191 = vpop.f32.mrb[0].mxu0
  %v192 = vadd.f32 0.0, %v191
  %v193 = vpop.f32.mrb[0].mxu0
  %194 = vdwg.mxu0
  %195 = vmatprep.subr.mxu0 0.0
  %196 = vmatpush1.msra.mxu0 %v75
  %197 = vmatprep.subr.mxu0 0.0
  %198 = vmatpush1.msra.mxu0 %v76
  %199 = vmatprep.subr.mxu0 0.0
  %200 = vmatpush1.msra.mxu0 %v77
  %201 = vmatprep.subr.mxu0 0.0
  %202 = vmatpush1.msra.mxu0 %v78
  %203 = vmatprep.subr.mxu0 0.0
  %204 = vmatpush1.msra.mxu0 %v79
  %205 = vmatprep.subr.mxu0 0.0
  %206 = vmatpush1.msra.mxu0 %v80
  %207 = vmatprep.subr.mxu0 0.0
  %208 = vmatpush1.msra.mxu0 %v81
  %209 = vmatprep.subr.mxu0 0.0
  %210 = vmatpush1.msra.mxu0 %v82
  %211 = vmatprep.subr.mxu0 0.0
  %212 = vmatpush1.msra.mxu0 %v83
  %213 = vmatprep.subr.mxu0 0.0
  %214 = vmatpush1.msra.mxu0 %v84
  %215 = vmatprep.subr.mxu0 0.0
  %216 = vmatpush1.msra.mxu0 %v85
  %217 = vmatprep.subr.mxu0 0.0
  %218 = vmatpush1.msra.mxu0 %v86
  %219 = vmatprep.subr.mxu0 0.0
  %220 = vmatpush1.msra.mxu0 %v87
  %221 = vmatprep.subr.mxu0 0.0
  %222 = vmatpush1.msra.mxu0 %v88
  %223 = vmatprep.subr.mxu0 0.0
  %224 = vmatpush1.msra.mxu0 %v89
  %225 = vmatprep.subr.mxu0 0.0
  %226 = vmatpush1.msra.mxu0 %v90
  %227 = vmatprep.subr.mxu0 0.0
  %228 = vmatpush1.msra.mxu0 0.0
  %229 = vmatprep.subr.mxu0 0.0
  %230 = vmatpush1.msra.mxu0 0.0
  %231 = vmatprep.subr.mxu0 0.0
  %232 = vmatpush1.msra.mxu0 0.0
  %233 = vmatprep.subr.mxu0 0.0
  %234 = vmatpush1.msra.mxu0 0.0
  %235 = vmatprep.subr.mxu0 0.0
  %236 = vmatpush1.msra.mxu0 0.0
  %237 = vmatprep.subr.mxu0 0.0
  %238 = vmatpush1.msra.mxu0 0.0
  %239 = vmatprep.subr.mxu0 0.0
  %240 = vmatpush1.msra.mxu0 0.0
  %241 = vmatprep.subr.mxu0 0.0
  %242 = vmatpush1.msra.mxu0 0.0
  %243 = vmatprep.subr.mxu0 0.0
  %244 = vmatpush1.msra.mxu0 0.0
  %245 = vmatprep.subr.mxu0 0.0
  %246 = vmatpush1.msra.mxu0 0.0
  %247 = vmatprep.subr.mxu0 0.0
  %248 = vmatpush1.msra.mxu0 0.0
  %249 = vmatprep.subr.mxu0 0.0
  %250 = vmatpush1.msra.mxu0 0.0
  %251 = vmatprep.subr.mxu0 0.0
  %252 = vmatpush1.msra.mxu0 0.0
  %253 = vmatprep.subr.mxu0 0.0
  %254 = vmatpush1.msra.mxu0 0.0
  %255 = vmatprep.subr.mxu0 0.0
  %256 = vmatpush1.msra.mxu0 0.0
  %257 = vmatprep.subr.mxu0 0.0
  %258 = vmatpush1.msra.mxu0 0.0
  %259 = vmatprep.mubr.f32.mxu0 0.0
  %260 = vmatmul.mubr.f32.gmra.mrb[0].mxu0 %v71
  %v261 = vpop.f32.mrb[0].mxu0
  %v262 = vadd.f32 %v177, %v261
  %v263 = vpop.f32.mrb[0].mxu0
  %264 = vmatprep.mubr.f32.mxu0 0.0
  %265 = vmatmul.mubr.f32.gmra.mrb[0].mxu0 %v72
  %v266 = vpop.f32.mrb[0].mxu0
  %v267 = vadd.f32 %v182, %v266
  %v268 = vpop.f32.mrb[0].mxu0
  %269 = vmatprep.mubr.f32.mxu0 0.0
  %270 = vmatmul.mubr.f32.gmra.mrb[0].mxu0 %v73
  %v271 = vpop.f32.mrb[0].mxu0
  %v272 = vadd.f32 %v187, %v271
  %v273 = vpop.f32.mrb[0].mxu0
  %274 = vmatprep.mubr.f32.mxu0 0.0
  %275 = vmatmul.mubr.f32.gmra.mrb[0].mxu0 %v74
  %v276 = vpop.f32.mrb[0].mxu0
  %v277 = vadd.f32 %v192, %v276
  %v278 = vpop.f32.mrb[0].mxu0
  %279 = vdwg.mxu0
  %v280 = vld [vmem:[%s6] sm:$0x1]
  %v282 = vlaneseq
  %v283 = vshrl.u32 %v282, 7
  %v284 = vsub.s32 0, %v283
  %v285 = vrot.slane %v280, %v284
  %v287 = vadd.f32 %v262, %v285
  %v288 = vadd.f32 %v267, %v285
  %v289 = vadd.f32 %v272, %v285
  %v290 = vadd.f32 %v277, %v285
  %v291 = vtanh.pop %v287
  %v292 = vtanh.pop %v288
  %v293 = vtanh.pop %v289
  %v294 = vtanh.pop %v290
  %v295 = vld [vmem:[%s7] sm:$0xff]
  %v296 = vld [vmem:[%s7 + $0x8] sm:$0xff]
  %v297 = vld [vmem:[%s7 + $0x10] sm:$0xff]
  %v298 = vld [vmem:[%s7 + $0x18] sm:$0xff]
  %v299 = vld [vmem:[%s7 + $0x20] sm:$0xff]
  %v300 = vld [vmem:[%s7 + $0x28] sm:$0xff]
  %v301 = vld [vmem:[%s7 + $0x30] sm:$0xff]
  %v302 = vld [vmem:[%s7 + $0x38] sm:$0xff]
  %v303 = vld [vmem:[%s7 + $0x40] sm:$0xff]
  %v304 = vld [vmem:[%s7 + $0x48] sm:$0xff]
  %v305 = vld [vmem:[%s7 + $0x50] sm:$0xff]
  %v306 = vld [vmem:[%s7 + $0x58] sm:$0xff]
  %v307 = vld [vmem:[%s7 + $0x60] sm:$0xff]
  %v308 = vld [vmem:[%s7 + $0x68] sm:$0xff]
  %v309 = vld [vmem:[%s7 + $0x70] sm:$0xff]
  %v310 = vld [vmem:[%s7 + $0x78] sm:$0xff]
  %v311 = vld [vmem:[%s8] sm:$0x1]
  %v313 = vlaneseq
  %v314 = vshrl.u32 %v313, 7
  %v315 = vsub.s32 0, %v314
  %v316 = vrot.slane %v311, %v315
  %318 = vmatprep.subr.mxu0 0.0
  %319 = vmatpush1.msra.mxu0 %v295
  %320 = vmatprep.subr.mxu0 0.0
  %321 = vmatpush1.msra.mxu0 %v296
  %322 = vmatprep.subr.mxu0 0.0
  %323 = vmatpush1.msra.mxu0 %v297
  %324 = vmatprep.subr.mxu0 0.0
  %325 = vmatpush1.msra.mxu0 %v298
  %326 = vmatprep.subr.mxu0 0.0
  %327 = vmatpush1.msra.mxu0 %v299
  %328 = vmatprep.subr.mxu0 0.0
  %329 = vmatpush1.msra.mxu0 %v300
  %330 = vmatprep.subr.mxu0 0.0
  %331 = vmatpush1.msra.mxu0 %v301
  %332 = vmatprep.subr.mxu0 0.0
  %333 = vmatpush1.msra.mxu0 %v302
  %334 = vmatprep.subr.mxu0 0.0
  %335 = vmatpush1.msra.mxu0 %v303
  %336 = vmatprep.subr.mxu0 0.0
  %337 = vmatpush1.msra.mxu0 %v304
  %338 = vmatprep.subr.mxu0 0.0
  %339 = vmatpush1.msra.mxu0 %v305
  %340 = vmatprep.subr.mxu0 0.0
  %341 = vmatpush1.msra.mxu0 %v306
  %342 = vmatprep.subr.mxu0 0.0
  %343 = vmatpush1.msra.mxu0 %v307
  %344 = vmatprep.subr.mxu0 0.0
  %345 = vmatpush1.msra.mxu0 %v308
  %346 = vmatprep.subr.mxu0 0.0
  %347 = vmatpush1.msra.mxu0 %v309
  %348 = vmatprep.subr.mxu0 0.0
  %349 = vmatpush1.msra.mxu0 %v310
  %350 = vmatprep.subr.mxu0 0.0
  %351 = vmatpush1.msra.mxu0 0.0
  %352 = vmatprep.subr.mxu0 0.0
  %353 = vmatpush1.msra.mxu0 0.0
  %354 = vmatprep.subr.mxu0 0.0
  %355 = vmatpush1.msra.mxu0 0.0
  %356 = vmatprep.subr.mxu0 0.0
  %357 = vmatpush1.msra.mxu0 0.0
  %358 = vmatprep.subr.mxu0 0.0
  %359 = vmatpush1.msra.mxu0 0.0
  %360 = vmatprep.subr.mxu0 0.0
  %361 = vmatpush1.msra.mxu0 0.0
  %362 = vmatprep.subr.mxu0 0.0
  %363 = vmatpush1.msra.mxu0 0.0
  %364 = vmatprep.subr.mxu0 0.0
  %365 = vmatpush1.msra.mxu0 0.0
  %366 = vmatprep.subr.mxu0 0.0
  %367 = vmatpush1.msra.mxu0 0.0
  %368 = vmatprep.subr.mxu0 0.0
  %369 = vmatpush1.msra.mxu0 0.0
  %370 = vmatprep.subr.mxu0 0.0
  %371 = vmatpush1.msra.mxu0 0.0
  %372 = vmatprep.subr.mxu0 0.0
  %373 = vmatpush1.msra.mxu0 0.0
  %374 = vmatprep.subr.mxu0 0.0
  %375 = vmatpush1.msra.mxu0 0.0
  %376 = vmatprep.subr.mxu0 0.0
  %377 = vmatpush1.msra.mxu0 0.0
  %378 = vmatprep.subr.mxu0 0.0
  %379 = vmatpush1.msra.mxu0 0.0
  %380 = vmatprep.subr.mxu0 0.0
  %381 = vmatpush1.msra.mxu0 0.0
  %382 = vmatprep.mubr.f32.mxu0 0.0
  %383 = vmatmul.mubr.f32.gmra.mrb[0].mxu0 %v291
  %v384 = vpop.f32.mrb[0].mxu0
  %v385 = vadd.f32 %v316, %v384
  %v386 = vpop.f32.mrb[0].mxu0
  %387 = vmatprep.mubr.f32.mxu0 0.0
  %388 = vmatmul.mubr.f32.gmra.mrb[0].mxu0 %v292
  %v389 = vpop.f32.mrb[0].mxu0
  %v390 = vadd.f32 %v316, %v389
  %v391 = vpop.f32.mrb[0].mxu0
  %392 = vmatprep.mubr.f32.mxu0 0.0
  %393 = vmatmul.mubr.f32.gmra.mrb[0].mxu0 %v293
  %v394 = vpop.f32.mrb[0].mxu0
  %v395 = vadd.f32 %v316, %v394
  %v396 = vpop.f32.mrb[0].mxu0
  %397 = vmatprep.mubr.f32.mxu0 0.0
  %398 = vmatmul.mubr.f32.gmra.mrb[0].mxu0 %v294
  %v399 = vpop.f32.mrb[0].mxu0
  %v400 = vadd.f32 %v316, %v399
  %v401 = vpop.f32.mrb[0].mxu0
  %402 = vdwg.mxu0
  %v403 = vtanh.pop %v385
  %v404 = vtanh.pop %v390
  %v405 = vtanh.pop %v395
  %v406 = vtanh.pop %v400
  %v407 = vld [vmem:[%s9] sm:$0xff]
  %v408 = vld [vmem:[%s9 + $0x8] sm:$0xff]
  %v409 = vld [vmem:[%s9 + $0x10] sm:$0xff]
  %v410 = vld [vmem:[%s9 + $0x18] sm:$0xff]
  %v411 = vld [vmem:[%s9 + $0x20] sm:$0xff]
  %v412 = vld [vmem:[%s9 + $0x28] sm:$0xff]
  %v413 = vld [vmem:[%s9 + $0x30] sm:$0xff]
  %v414 = vld [vmem:[%s9 + $0x38] sm:$0xff]
  %v415 = vld [vmem:[%s9 + $0x40] sm:$0xff]
  %v416 = vld [vmem:[%s9 + $0x48] sm:$0xff]
  %v417 = vld [vmem:[%s9 + $0x50] sm:$0xff]
  %v418 = vld [vmem:[%s9 + $0x58] sm:$0xff]
  %v419 = vld [vmem:[%s9 + $0x60] sm:$0xff]
  %v420 = vld [vmem:[%s9 + $0x68] sm:$0xff]
  %v421 = vld [vmem:[%s9 + $0x70] sm:$0xff]
  %v422 = vld [vmem:[%s9 + $0x78] sm:$0xff]
  %v423 = vld [vmem:[%s10] sm:$0x1]
  %v425 = vlaneseq
  %v426 = vshrl.u32 %v425, 7
  %v427 = vsub.s32 0, %v426
  %v428 = vrot.slane %v423, %v427
  %430 = vmatprep.subr.mxu0 0.0
  %431 = vmatpush1.msra.mxu0 %v407
  %432 = vmatprep.subr.mxu0 0.0
  %433 = vmatpush1.msra.mxu0 %v408
  %434 = vmatprep.subr.mxu0 0.0
  %435 = vmatpush1.msra.mxu0 %v409
  %436 = vmatprep.subr.mxu0 0.0
  %437 = vmatpush1.msra.mxu0 %v410
  %438 = vmatprep.subr.mxu0 0.0
  %439 = vmatpush1.msra.mxu0 %v411
  %440 = vmatprep.subr.mxu0 0.0
  %441 = vmatpush1.msra.mxu0 %v412
  %442 = vmatprep.subr.mxu0 0.0
  %443 = vmatpush1.msra.mxu0 %v413
  %444 = vmatprep.subr.mxu0 0.0
  %445 = vmatpush1.msra.mxu0 %v414
  %446 = vmatprep.subr.mxu0 0.0
  %447 = vmatpush1.msra.mxu0 %v415
  %448 = vmatprep.subr.mxu0 0.0
  %449 = vmatpush1.msra.mxu0 %v416
  %450 = vmatprep.subr.mxu0 0.0
  %451 = vmatpush1.msra.mxu0 %v417
  %452 = vmatprep.subr.mxu0 0.0
  %453 = vmatpush1.msra.mxu0 %v418
  %454 = vmatprep.subr.mxu0 0.0
  %455 = vmatpush1.msra.mxu0 %v419
  %456 = vmatprep.subr.mxu0 0.0
  %457 = vmatpush1.msra.mxu0 %v420
  %458 = vmatprep.subr.mxu0 0.0
  %459 = vmatpush1.msra.mxu0 %v421
  %460 = vmatprep.subr.mxu0 0.0
  %461 = vmatpush1.msra.mxu0 %v422
  %462 = vmatprep.subr.mxu0 0.0
  %463 = vmatpush1.msra.mxu0 0.0
  %464 = vmatprep.subr.mxu0 0.0
  %465 = vmatpush1.msra.mxu0 0.0
  %466 = vmatprep.subr.mxu0 0.0
  %467 = vmatpush1.msra.mxu0 0.0
  %468 = vmatprep.subr.mxu0 0.0
  %469 = vmatpush1.msra.mxu0 0.0
  %470 = vmatprep.subr.mxu0 0.0
  %471 = vmatpush1.msra.mxu0 0.0
  %472 = vmatprep.subr.mxu0 0.0
  %473 = vmatpush1.msra.mxu0 0.0
  %474 = vmatprep.subr.mxu0 0.0
  %475 = vmatpush1.msra.mxu0 0.0
  %476 = vmatprep.subr.mxu0 0.0
  %477 = vmatpush1.msra.mxu0 0.0
  %478 = vmatprep.subr.mxu0 0.0
  %479 = vmatpush1.msra.mxu0 0.0
  %480 = vmatprep.subr.mxu0 0.0
  %481 = vmatpush1.msra.mxu0 0.0
  %482 = vmatprep.subr.mxu0 0.0
  %483 = vmatpush1.msra.mxu0 0.0
  %484 = vmatprep.subr.mxu0 0.0
  %485 = vmatpush1.msra.mxu0 0.0
  %486 = vmatprep.subr.mxu0 0.0
  %487 = vmatpush1.msra.mxu0 0.0
  %488 = vmatprep.subr.mxu0 0.0
  %489 = vmatpush1.msra.mxu0 0.0
  %490 = vmatprep.subr.mxu0 0.0
  %491 = vmatpush1.msra.mxu0 0.0
  %492 = vmatprep.subr.mxu0 0.0
  %493 = vmatpush1.msra.mxu0 0.0
  %494 = vmatprep.mubr.f32.mxu0 0.0
  %495 = vmatmul.mubr.f32.gmra.mrb[0].mxu0 %v403
  %v496 = vpop.f32.mrb[0].mxu0
  %v497 = vadd.f32 %v428, %v496
  %v498 = vpop.f32.mrb[0].mxu0
  %499 = vmatprep.mubr.f32.mxu0 0.0
  %500 = vmatmul.mubr.f32.gmra.mrb[0].mxu0 %v404
  %v501 = vpop.f32.mrb[0].mxu0
  %v502 = vadd.f32 %v428, %v501
  %v503 = vpop.f32.mrb[0].mxu0
  %504 = vmatprep.mubr.f32.mxu0 0.0
  %505 = vmatmul.mubr.f32.gmra.mrb[0].mxu0 %v405
  %v506 = vpop.f32.mrb[0].mxu0
  %v507 = vadd.f32 %v428, %v506
  %v508 = vpop.f32.mrb[0].mxu0
  %509 = vmatprep.mubr.f32.mxu0 0.0
  %510 = vmatmul.mubr.f32.gmra.mrb[0].mxu0 %v406
  %v511 = vpop.f32.mrb[0].mxu0
  %v512 = vadd.f32 %v428, %v511
  %v513 = vpop.f32.mrb[0].mxu0
  %514 = vdwg.mxu0
  %515 = vst.msk [vmem:[%s21] sm:$0xff] %vm97, %v497
  %516 = vst.msk [vmem:[%s21 + $0x8] sm:$0xff] %vm97, %v502
  %517 = vst.msk [vmem:[%s21 + $0x10] sm:$0xff] %vm97, %v507
  %518 = vst.msk [vmem:[%s21 + $0x18] sm:$0xff] %vm97, %v512
  %v519 = vld [vmem:[%s11] sm:$0xff]
  %v520 = vld [vmem:[%s11 + $0x8] sm:$0xff]
  %v521 = vld [vmem:[%s11 + $0x10] sm:$0xff]
  %v522 = vld [vmem:[%s11 + $0x18] sm:$0xff]
  %v523 = vld [vmem:[%s11 + $0x20] sm:$0xff]
  %v524 = vld [vmem:[%s11 + $0x28] sm:$0xff]
  %v525 = vld [vmem:[%s11 + $0x30] sm:$0xff]
  %v526 = vld [vmem:[%s11 + $0x38] sm:$0xff]
  %v527 = vld [vmem:[%s11 + $0x40] sm:$0xff]
  %v528 = vld [vmem:[%s11 + $0x48] sm:$0xff]
  %v529 = vld [vmem:[%s11 + $0x50] sm:$0xff]
  %v530 = vld [vmem:[%s11 + $0x58] sm:$0xff]
  %v531 = vld [vmem:[%s11 + $0x60] sm:$0xff]
  %v532 = vld [vmem:[%s11 + $0x68] sm:$0xff]
  %v533 = vld [vmem:[%s11 + $0x70] sm:$0xff]
  %v534 = vld [vmem:[%s11 + $0x78] sm:$0xff]
  %v535 = vld [vmem:[%s12] sm:$0x1]
  %v537 = vlaneseq
  %v538 = vshrl.u32 %v537, 7
  %v539 = vsub.s32 0, %v538
  %v540 = vrot.slane %v535, %v539
  %542 = vmatprep.subr.mxu0 0.0
  %543 = vmatpush1.msra.mxu0 %v519
  %544 = vmatprep.subr.mxu0 0.0
  %545 = vmatpush1.msra.mxu0 %v520
  %546 = vmatprep.subr.mxu0 0.0
  %547 = vmatpush1.msra.mxu0 %v521
  %548 = vmatprep.subr.mxu0 0.0
  %549 = vmatpush1.msra.mxu0 %v522
  %550 = vmatprep.subr.mxu0 0.0
  %551 = vmatpush1.msra.mxu0 %v523
  %552 = vmatprep.subr.mxu0 0.0
  %553 = vmatpush1.msra.mxu0 %v524
  %554 = vmatprep.subr.mxu0 0.0
  %555 = vmatpush1.msra.mxu0 %v525
  %556 = vmatprep.subr.mxu0 0.0
  %557 = vmatpush1.msra.mxu0 %v526
  %558 = vmatprep.subr.mxu0 0.0
  %559 = vmatpush1.msra.mxu0 %v527
  %560 = vmatprep.subr.mxu0 0.0
  %561 = vmatpush1.msra.mxu0 %v528
  %562 = vmatprep.subr.mxu0 0.0
  %563 = vmatpush1.msra.mxu0 %v529
  %564 = vmatprep.subr.mxu0 0.0
  %565 = vmatpush1.msra.mxu0 %v530
  %566 = vmatprep.subr.mxu0 0.0
  %567 = vmatpush1.msra.mxu0 %v531
  %568 = vmatprep.subr.mxu0 0.0
  %569 = vmatpush1.msra.mxu0 %v532
  %570 = vmatprep.subr.mxu0 0.0
  %571 = vmatpush1.msra.mxu0 %v533
  %572 = vmatprep.subr.mxu0 0.0
  %573 = vmatpush1.msra.mxu0 %v534
  %574 = vmatprep.subr.mxu0 0.0
  %575 = vmatpush1.msra.mxu0 0.0
  %576 = vmatprep.subr.mxu0 0.0
  %577 = vmatpush1.msra.mxu0 0.0
  %578 = vmatprep.subr.mxu0 0.0
  %579 = vmatpush1.msra.mxu0 0.0
  %580 = vmatprep.subr.mxu0 0.0
  %581 = vmatpush1.msra.mxu0 0.0
  %582 = vmatprep.subr.mxu0 0.0
  %583 = vmatpush1.msra.mxu0 0.0
  %584 = vmatprep.subr.mxu0 0.0
  %585 = vmatpush1.msra.mxu0 0.0
  %586 = vmatprep.subr.mxu0 0.0
  %587 = vmatpush1.msra.mxu0 0.0
  %588 = vmatprep.subr.mxu0 0.0
  %589 = vmatpush1.msra.mxu0 0.0
  %590 = vmatprep.subr.mxu0 0.0
  %591 = vmatpush1.msra.mxu0 0.0
  %592 = vmatprep.subr.mxu0 0.0
  %593 = vmatpush1.msra.mxu0 0.0
  %594 = vmatprep.subr.mxu0 0.0
  %595 = vmatpush1.msra.mxu0 0.0
  %596 = vmatprep.subr.mxu0 0.0
  %597 = vmatpush1.msra.mxu0 0.0
  %598 = vmatprep.subr.mxu0 0.0
  %599 = vmatpush1.msra.mxu0 0.0
  %600 = vmatprep.subr.mxu0 0.0
  %601 = vmatpush1.msra.mxu0 0.0
  %602 = vmatprep.subr.mxu0 0.0
  %603 = vmatpush1.msra.mxu0 0.0
  %604 = vmatprep.subr.mxu0 0.0
  %605 = vmatpush1.msra.mxu0 0.0
  %606 = vmatprep.mubr.f32.mxu0 0.0
  %607 = vmatmul.mubr.f32.gmra.mrb[0].mxu0 %v403
  %v608 = vpop.f32.mrb[0].mxu0
  %v609 = vadd.f32 %v540, %v608
  %v610 = vpop.f32.mrb[0].mxu0
  %611 = vmatprep.mubr.f32.mxu0 0.0
  %612 = vmatmul.mubr.f32.gmra.mrb[0].mxu0 %v404
  %v613 = vpop.f32.mrb[0].mxu0
  %v614 = vadd.f32 %v540, %v613
  %v615 = vpop.f32.mrb[0].mxu0
  %616 = vmatprep.mubr.f32.mxu0 0.0
  %617 = vmatmul.mubr.f32.gmra.mrb[0].mxu0 %v405
  %v618 = vpop.f32.mrb[0].mxu0
  %v619 = vadd.f32 %v540, %v618
  %v620 = vpop.f32.mrb[0].mxu0
  %621 = vmatprep.mubr.f32.mxu0 0.0
  %622 = vmatmul.mubr.f32.gmra.mrb[0].mxu0 %v406
  %v623 = vpop.f32.mrb[0].mxu0
  %v624 = vadd.f32 %v540, %v623
  %v625 = vpop.f32.mrb[0].mxu0
  %626 = vdwg.mxu0
  %627 = vst.msk [vmem:[%s22] sm:$0xff] %vm97, %v609
  %628 = vst.msk [vmem:[%s22 + $0x8] sm:$0xff] %vm97, %v614
  %629 = vst.msk [vmem:[%s22 + $0x10] sm:$0xff] %vm97, %v619
  %630 = vst.msk [vmem:[%s22 + $0x18] sm:$0xff] %vm97, %v624
  %v631 = vld [vmem:[%s13] sm:$0xff]
  %v632 = vld [vmem:[%s13 + $0x8] sm:$0xff]
  %v633 = vld [vmem:[%s13 + $0x10] sm:$0xff]
  %v634 = vld [vmem:[%s13 + $0x18] sm:$0xff]
  %v635 = vld [vmem:[%s13 + $0x20] sm:$0xff]
  %v636 = vld [vmem:[%s13 + $0x28] sm:$0xff]
  %v637 = vld [vmem:[%s13 + $0x30] sm:$0xff]
  %v638 = vld [vmem:[%s13 + $0x38] sm:$0xff]
  %v639 = vld [vmem:[%s13 + $0x40] sm:$0xff]
  %v640 = vld [vmem:[%s13 + $0x48] sm:$0xff]
  %v641 = vld [vmem:[%s13 + $0x50] sm:$0xff]
  %v642 = vld [vmem:[%s13 + $0x58] sm:$0xff]
  %v643 = vld [vmem:[%s13 + $0x60] sm:$0xff]
  %v644 = vld [vmem:[%s13 + $0x68] sm:$0xff]
  %v645 = vld [vmem:[%s13 + $0x70] sm:$0xff]
  %v646 = vld [vmem:[%s13 + $0x78] sm:$0xff]
  %v647 = vld [vmem:[%s2] sm:$0xff]
  %v648 = vld [vmem:[%s2 + $0x8] sm:$0xff]
  %v649 = vld [vmem:[%s2 + $0x10] sm:$0xff]
  %v650 = vld [vmem:[%s2 + $0x18] sm:$0xff]
  %v651 = vld [vmem:[%s14] sm:$0xff]
  %v652 = vld [vmem:[%s14 + $0x8] sm:$0xff]
  %v654 = vsel %vm97, %v647, 0
  %v657 = vsel %vm97, %v648, 0
  %v660 = vsel %vm97, %v649, 0
  %v663 = vsel %vm97, %v650, 0
  %665 = vmatprep.subr.mxu0 0.0
  %666 = vmatpush1.msra.mxu0 %v651
  %667 = vmatprep.subr.mxu0 0.0
  %668 = vmatpush1.msra.mxu0 %v652
  %669 = vmatprep.subr.mxu0 0.0
  %670 = vmatpush1.msra.mxu0 0.0
  %671 = vmatprep.subr.mxu0 0.0
  %672 = vmatpush1.msra.mxu0 0.0
  %673 = vmatprep.subr.mxu0 0.0
  %674 = vmatpush1.msra.mxu0 0.0
  %675 = vmatprep.subr.mxu0 0.0
  %676 = vmatpush1.msra.mxu0 0.0
  %677 = vmatprep.subr.mxu0 0.0
  %678 = vmatpush1.msra.mxu0 0.0
  %679 = vmatprep.subr.mxu0 0.0
  %680 = vmatpush1.msra.mxu0 0.0
  %681 = vmatprep.subr.mxu0 0.0
  %682 = vmatpush1.msra.mxu0 0.0
  %683 = vmatprep.subr.mxu0 0.0
  %684 = vmatpush1.msra.mxu0 0.0
  %685 = vmatprep.subr.mxu0 0.0
  %686 = vmatpush1.msra.mxu0 0.0
  %687 = vmatprep.subr.mxu0 0.0
  %688 = vmatpush1.msra.mxu0 0.0
  %689 = vmatprep.subr.mxu0 0.0
  %690 = vmatpush1.msra.mxu0 0.0
  %691 = vmatprep.subr.mxu0 0.0
  %692 = vmatpush1.msra.mxu0 0.0
  %693 = vmatprep.subr.mxu0 0.0
  %694 = vmatpush1.msra.mxu0 0.0
  %695 = vmatprep.subr.mxu0 0.0
  %696 = vmatpush1.msra.mxu0 0.0
  %697 = vmatprep.subr.mxu0 0.0
  %698 = vmatpush1.msra.mxu0 0.0
  %699 = vmatprep.subr.mxu0 0.0
  %700 = vmatpush1.msra.mxu0 0.0
  %701 = vmatprep.subr.mxu0 0.0
  %702 = vmatpush1.msra.mxu0 0.0
  %703 = vmatprep.subr.mxu0 0.0
  %704 = vmatpush1.msra.mxu0 0.0
  %705 = vmatprep.subr.mxu0 0.0
  %706 = vmatpush1.msra.mxu0 0.0
  %707 = vmatprep.subr.mxu0 0.0
  %708 = vmatpush1.msra.mxu0 0.0
  %709 = vmatprep.subr.mxu0 0.0
  %710 = vmatpush1.msra.mxu0 0.0
  %711 = vmatprep.subr.mxu0 0.0
  %712 = vmatpush1.msra.mxu0 0.0
  %713 = vmatprep.subr.mxu0 0.0
  %714 = vmatpush1.msra.mxu0 0.0
  %715 = vmatprep.subr.mxu0 0.0
  %716 = vmatpush1.msra.mxu0 0.0
  %717 = vmatprep.subr.mxu0 0.0
  %718 = vmatpush1.msra.mxu0 0.0
  %719 = vmatprep.subr.mxu0 0.0
  %720 = vmatpush1.msra.mxu0 0.0
  %721 = vmatprep.subr.mxu0 0.0
  %722 = vmatpush1.msra.mxu0 0.0
  %723 = vmatprep.subr.mxu0 0.0
  %724 = vmatpush1.msra.mxu0 0.0
  %725 = vmatprep.subr.mxu0 0.0
  %726 = vmatpush1.msra.mxu0 0.0
  %727 = vmatprep.subr.mxu0 0.0
  %728 = vmatpush1.msra.mxu0 0.0
  %729 = vmatprep.mubr.f32.mxu0 0.0
  %730 = vmatmul.mubr.f32.gmra.mrb[0].mxu0 %v654
  %v731 = vpop.f32.mrb[0].mxu0
  %v732 = vadd.f32 0.0, %v731
  %v733 = vpop.f32.mrb[0].mxu0
  %734 = vmatprep.mubr.f32.mxu0 0.0
  %735 = vmatmul.mubr.f32.gmra.mrb[0].mxu0 %v657
  %v736 = vpop.f32.mrb[0].mxu0
  %v737 = vadd.f32 0.0, %v736
  %v738 = vpop.f32.mrb[0].mxu0
  %739 = vmatprep.mubr.f32.mxu0 0.0
  %740 = vmatmul.mubr.f32.gmra.mrb[0].mxu0 %v660
  %v741 = vpop.f32.mrb[0].mxu0
  %v742 = vadd.f32 0.0, %v741
  %v743 = vpop.f32.mrb[0].mxu0
  %744 = vmatprep.mubr.f32.mxu0 0.0
  %745 = vmatmul.mubr.f32.gmra.mrb[0].mxu0 %v663
  %v746 = vpop.f32.mrb[0].mxu0
  %v747 = vadd.f32 0.0, %v746
  %v748 = vpop.f32.mrb[0].mxu0
  %749 = vdwg.mxu0
  %750 = vmatprep.subr.mxu0 0.0
  %751 = vmatpush1.msra.mxu0 %v631
  %752 = vmatprep.subr.mxu0 0.0
  %753 = vmatpush1.msra.mxu0 %v632
  %754 = vmatprep.subr.mxu0 0.0
  %755 = vmatpush1.msra.mxu0 %v633
  %756 = vmatprep.subr.mxu0 0.0
  %757 = vmatpush1.msra.mxu0 %v634
  %758 = vmatprep.subr.mxu0 0.0
  %759 = vmatpush1.msra.mxu0 %v635
  %760 = vmatprep.subr.mxu0 0.0
  %761 = vmatpush1.msra.mxu0 %v636
  %762 = vmatprep.subr.mxu0 0.0
  %763 = vmatpush1.msra.mxu0 %v637
  %764 = vmatprep.subr.mxu0 0.0
  %765 = vmatpush1.msra.mxu0 %v638
  %766 = vmatprep.subr.mxu0 0.0
  %767 = vmatpush1.msra.mxu0 %v639
  %768 = vmatprep.subr.mxu0 0.0
  %769 = vmatpush1.msra.mxu0 %v640
  %770 = vmatprep.subr.mxu0 0.0
  %771 = vmatpush1.msra.mxu0 %v641
  %772 = vmatprep.subr.mxu0 0.0
  %773 = vmatpush1.msra.mxu0 %v642
  %774 = vmatprep.subr.mxu0 0.0
  %775 = vmatpush1.msra.mxu0 %v643
  %776 = vmatprep.subr.mxu0 0.0
  %777 = vmatpush1.msra.mxu0 %v644
  %778 = vmatprep.subr.mxu0 0.0
  %779 = vmatpush1.msra.mxu0 %v645
  %780 = vmatprep.subr.mxu0 0.0
  %781 = vmatpush1.msra.mxu0 %v646
  %782 = vmatprep.subr.mxu0 0.0
  %783 = vmatpush1.msra.mxu0 0.0
  %784 = vmatprep.subr.mxu0 0.0
  %785 = vmatpush1.msra.mxu0 0.0
  %786 = vmatprep.subr.mxu0 0.0
  %787 = vmatpush1.msra.mxu0 0.0
  %788 = vmatprep.subr.mxu0 0.0
  %789 = vmatpush1.msra.mxu0 0.0
  %790 = vmatprep.subr.mxu0 0.0
  %791 = vmatpush1.msra.mxu0 0.0
  %792 = vmatprep.subr.mxu0 0.0
  %793 = vmatpush1.msra.mxu0 0.0
  %794 = vmatprep.subr.mxu0 0.0
  %795 = vmatpush1.msra.mxu0 0.0
  %796 = vmatprep.subr.mxu0 0.0
  %797 = vmatpush1.msra.mxu0 0.0
  %798 = vmatprep.subr.mxu0 0.0
  %799 = vmatpush1.msra.mxu0 0.0
  %800 = vmatprep.subr.mxu0 0.0
  %801 = vmatpush1.msra.mxu0 0.0
  %802 = vmatprep.subr.mxu0 0.0
  %803 = vmatpush1.msra.mxu0 0.0
  %804 = vmatprep.subr.mxu0 0.0
  %805 = vmatpush1.msra.mxu0 0.0
  %806 = vmatprep.subr.mxu0 0.0
  %807 = vmatpush1.msra.mxu0 0.0
  %808 = vmatprep.subr.mxu0 0.0
  %809 = vmatpush1.msra.mxu0 0.0
  %810 = vmatprep.subr.mxu0 0.0
  %811 = vmatpush1.msra.mxu0 0.0
  %812 = vmatprep.subr.mxu0 0.0
  %813 = vmatpush1.msra.mxu0 0.0
  %814 = vmatprep.mubr.f32.mxu0 0.0
  %815 = vmatmul.mubr.f32.gmra.mrb[0].mxu0 %v71
  %v816 = vpop.f32.mrb[0].mxu0
  %v817 = vadd.f32 %v732, %v816
  %v818 = vpop.f32.mrb[0].mxu0
  %819 = vmatprep.mubr.f32.mxu0 0.0
  %820 = vmatmul.mubr.f32.gmra.mrb[0].mxu0 %v72
  %v821 = vpop.f32.mrb[0].mxu0
  %v822 = vadd.f32 %v737, %v821
  %v823 = vpop.f32.mrb[0].mxu0
  %824 = vmatprep.mubr.f32.mxu0 0.0
  %825 = vmatmul.mubr.f32.gmra.mrb[0].mxu0 %v73
  %v826 = vpop.f32.mrb[0].mxu0
  %v827 = vadd.f32 %v742, %v826
  %v828 = vpop.f32.mrb[0].mxu0
  %829 = vmatprep.mubr.f32.mxu0 0.0
  %830 = vmatmul.mubr.f32.gmra.mrb[0].mxu0 %v74
  %v831 = vpop.f32.mrb[0].mxu0
  %v832 = vadd.f32 %v747, %v831
  %v833 = vpop.f32.mrb[0].mxu0
  %834 = vdwg.mxu0
  %v835 = vld [vmem:[%s3] sm:$0xff]
  %v836 = vld [vmem:[%s3 + $0x8] sm:$0xff]
  %v837 = vld [vmem:[%s3 + $0x10] sm:$0xff]
  %v838 = vld [vmem:[%s3 + $0x18] sm:$0xff]
  %v839 = vld [vmem:[%s15] sm:$0x1]
  %841 = vset.pattern.permute.xlu0 0
  %842 = vperm.xlu0 %841, %v835
  %v843 = vpop.permute.xlu0 %842
  %846 = vset.pattern.permute.xlu0 0
  %847 = vperm.xlu0 %846, %v836
  %v848 = vpop.permute.xlu0 %847
  %851 = vset.pattern.permute.xlu0 0
  %852 = vperm.xlu0 %851, %v837
  %v853 = vpop.permute.xlu0 %852
  %856 = vset.pattern.permute.xlu0 0
  %857 = vperm.xlu0 %856, %v838
  %v858 = vpop.permute.xlu0 %857
  %v861 = vlaneseq
  %v862 = vshrl.u32 %v861, 7
  %v863 = vsub.s32 0, %v862
  %v864 = vrot.slane %v839, %v863
  %v866 = vmul.f32 %v843, %v864
  %v867 = vmul.f32 %v848, %v864
  %v868 = vmul.f32 %v853, %v864
  %v869 = vmul.f32 %v858, %v864
  %v870 = vadd.f32 %v817, %v866
  %v871 = vadd.f32 %v822, %v867
  %v872 = vadd.f32 %v827, %v868
  %v873 = vadd.f32 %v832, %v869
  %v874 = vld [vmem:[%s16] sm:$0x1]
  %v876 = vlaneseq
  %v877 = vshrl.u32 %v876, 7
  %v878 = vsub.s32 0, %v877
  %v879 = vrot.slane %v874, %v878
  %v881 = vadd.f32 %v870, %v879
  %v882 = vadd.f32 %v871, %v879
  %v883 = vadd.f32 %v872, %v879
  %v884 = vadd.f32 %v873, %v879
  %v885 = vtanh.pop %v881
  %v886 = vtanh.pop %v882
  %v887 = vtanh.pop %v883
  %v888 = vtanh.pop %v884
  %v889 = vld [vmem:[%s17] sm:$0xff]
  %v890 = vld [vmem:[%s17 + $0x8] sm:$0xff]
  %v891 = vld [vmem:[%s17 + $0x10] sm:$0xff]
  %v892 = vld [vmem:[%s17 + $0x18] sm:$0xff]
  %v893 = vld [vmem:[%s17 + $0x20] sm:$0xff]
  %v894 = vld [vmem:[%s17 + $0x28] sm:$0xff]
  %v895 = vld [vmem:[%s17 + $0x30] sm:$0xff]
  %v896 = vld [vmem:[%s17 + $0x38] sm:$0xff]
  %v897 = vld [vmem:[%s17 + $0x40] sm:$0xff]
  %v898 = vld [vmem:[%s17 + $0x48] sm:$0xff]
  %v899 = vld [vmem:[%s17 + $0x50] sm:$0xff]
  %v900 = vld [vmem:[%s17 + $0x58] sm:$0xff]
  %v901 = vld [vmem:[%s17 + $0x60] sm:$0xff]
  %v902 = vld [vmem:[%s17 + $0x68] sm:$0xff]
  %v903 = vld [vmem:[%s17 + $0x70] sm:$0xff]
  %v904 = vld [vmem:[%s17 + $0x78] sm:$0xff]
  %v905 = vld [vmem:[%s18] sm:$0x1]
  %v907 = vlaneseq
  %v908 = vshrl.u32 %v907, 7
  %v909 = vsub.s32 0, %v908
  %v910 = vrot.slane %v905, %v909
  %912 = vmatprep.subr.mxu0 0.0
  %913 = vmatpush1.msra.mxu0 %v889
  %914 = vmatprep.subr.mxu0 0.0
  %915 = vmatpush1.msra.mxu0 %v890
  %916 = vmatprep.subr.mxu0 0.0
  %917 = vmatpush1.msra.mxu0 %v891
  %918 = vmatprep.subr.mxu0 0.0
  %919 = vmatpush1.msra.mxu0 %v892
  %920 = vmatprep.subr.mxu0 0.0
  %921 = vmatpush1.msra.mxu0 %v893
  %922 = vmatprep.subr.mxu0 0.0
  %923 = vmatpush1.msra.mxu0 %v894
  %924 = vmatprep.subr.mxu0 0.0
  %925 = vmatpush1.msra.mxu0 %v895
  %926 = vmatprep.subr.mxu0 0.0
  %927 = vmatpush1.msra.mxu0 %v896
  %928 = vmatprep.subr.mxu0 0.0
  %929 = vmatpush1.msra.mxu0 %v897
  %930 = vmatprep.subr.mxu0 0.0
  %931 = vmatpush1.msra.mxu0 %v898
  %932 = vmatprep.subr.mxu0 0.0
  %933 = vmatpush1.msra.mxu0 %v899
  %934 = vmatprep.subr.mxu0 0.0
  %935 = vmatpush1.msra.mxu0 %v900
  %936 = vmatprep.subr.mxu0 0.0
  %937 = vmatpush1.msra.mxu0 %v901
  %938 = vmatprep.subr.mxu0 0.0
  %939 = vmatpush1.msra.mxu0 %v902
  %940 = vmatprep.subr.mxu0 0.0
  %941 = vmatpush1.msra.mxu0 %v903
  %942 = vmatprep.subr.mxu0 0.0
  %943 = vmatpush1.msra.mxu0 %v904
  %944 = vmatprep.subr.mxu0 0.0
  %945 = vmatpush1.msra.mxu0 0.0
  %946 = vmatprep.subr.mxu0 0.0
  %947 = vmatpush1.msra.mxu0 0.0
  %948 = vmatprep.subr.mxu0 0.0
  %949 = vmatpush1.msra.mxu0 0.0
  %950 = vmatprep.subr.mxu0 0.0
  %951 = vmatpush1.msra.mxu0 0.0
  %952 = vmatprep.subr.mxu0 0.0
  %953 = vmatpush1.msra.mxu0 0.0
  %954 = vmatprep.subr.mxu0 0.0
  %955 = vmatpush1.msra.mxu0 0.0
  %956 = vmatprep.subr.mxu0 0.0
  %957 = vmatpush1.msra.mxu0 0.0
  %958 = vmatprep.subr.mxu0 0.0
  %959 = vmatpush1.msra.mxu0 0.0
  %960 = vmatprep.subr.mxu0 0.0
  %961 = vmatpush1.msra.mxu0 0.0
  %962 = vmatprep.subr.mxu0 0.0
  %963 = vmatpush1.msra.mxu0 0.0
  %964 = vmatprep.subr.mxu0 0.0
  %965 = vmatpush1.msra.mxu0 0.0
  %966 = vmatprep.subr.mxu0 0.0
  %967 = vmatpush1.msra.mxu0 0.0
  %968 = vmatprep.subr.mxu0 0.0
  %969 = vmatpush1.msra.mxu0 0.0
  %970 = vmatprep.subr.mxu0 0.0
  %971 = vmatpush1.msra.mxu0 0.0
  %972 = vmatprep.subr.mxu0 0.0
  %973 = vmatpush1.msra.mxu0 0.0
  %974 = vmatprep.subr.mxu0 0.0
  %975 = vmatpush1.msra.mxu0 0.0
  %976 = vmatprep.mubr.f32.mxu0 0.0
  %977 = vmatmul.mubr.f32.gmra.mrb[0].mxu0 %v885
  %v978 = vpop.f32.mrb[0].mxu0
  %v979 = vadd.f32 %v910, %v978
  %v980 = vpop.f32.mrb[0].mxu0
  %981 = vmatprep.mubr.f32.mxu0 0.0
  %982 = vmatmul.mubr.f32.gmra.mrb[0].mxu0 %v886
  %v983 = vpop.f32.mrb[0].mxu0
  %v984 = vadd.f32 %v910, %v983
  %v985 = vpop.f32.mrb[0].mxu0
  %986 = vmatprep.mubr.f32.mxu0 0.0
  %987 = vmatmul.mubr.f32.gmra.mrb[0].mxu0 %v887
  %v988 = vpop.f32.mrb[0].mxu0
  %v989 = vadd.f32 %v910, %v988
  %v990 = vpop.f32.mrb[0].mxu0
  %991 = vmatprep.mubr.f32.mxu0 0.0
  %992 = vmatmul.mubr.f32.gmra.mrb[0].mxu0 %v888
  %v993 = vpop.f32.mrb[0].mxu0
  %v994 = vadd.f32 %v910, %v993
  %v995 = vpop.f32.mrb[0].mxu0
  %996 = vdwg.mxu0
  %v997 = vtanh.pop %v979
  %v998 = vtanh.pop %v984
  %v999 = vtanh.pop %v989
  %v1000 = vtanh.pop %v994
  %v1001 = vld [vmem:[%s19] sm:$0xff]
  %v1002 = vld [vmem:[%s19 + $0x8] sm:$0xff]
  %v1003 = vld [vmem:[%s19 + $0x10] sm:$0xff]
  %v1004 = vld [vmem:[%s19 + $0x18] sm:$0xff]
  %v1005 = vld [vmem:[%s19 + $0x20] sm:$0xff]
  %v1006 = vld [vmem:[%s19 + $0x28] sm:$0xff]
  %v1007 = vld [vmem:[%s19 + $0x30] sm:$0xff]
  %v1008 = vld [vmem:[%s19 + $0x38] sm:$0xff]
  %v1009 = vld [vmem:[%s19 + $0x40] sm:$0xff]
  %v1010 = vld [vmem:[%s19 + $0x48] sm:$0xff]
  %v1011 = vld [vmem:[%s19 + $0x50] sm:$0xff]
  %v1012 = vld [vmem:[%s19 + $0x58] sm:$0xff]
  %v1013 = vld [vmem:[%s19 + $0x60] sm:$0xff]
  %v1014 = vld [vmem:[%s19 + $0x68] sm:$0xff]
  %v1015 = vld [vmem:[%s19 + $0x70] sm:$0xff]
  %v1016 = vld [vmem:[%s19 + $0x78] sm:$0xff]
  %v1017 = vld [vmem:[%s20] sm:$0x1]
  %v1019 = vlaneseq
  %v1020 = vshrl.u32 %v1019, 7
  %v1021 = vsub.s32 0, %v1020
  %v1022 = vrot.slane %v1017, %v1021
  %1024 = vmatprep.subr.mxu0 0.0
  %1025 = vmatpush1.msra.mxu0 %v1001
  %1026 = vmatprep.subr.mxu0 0.0
  %1027 = vmatpush1.msra.mxu0 %v1002
  %1028 = vmatprep.subr.mxu0 0.0
  %1029 = vmatpush1.msra.mxu0 %v1003
  %1030 = vmatprep.subr.mxu0 0.0
  %1031 = vmatpush1.msra.mxu0 %v1004
  %1032 = vmatprep.subr.mxu0 0.0
  %1033 = vmatpush1.msra.mxu0 %v1005
  %1034 = vmatprep.subr.mxu0 0.0
  %1035 = vmatpush1.msra.mxu0 %v1006
  %1036 = vmatprep.subr.mxu0 0.0
  %1037 = vmatpush1.msra.mxu0 %v1007
  %1038 = vmatprep.subr.mxu0 0.0
  %1039 = vmatpush1.msra.mxu0 %v1008
  %1040 = vmatprep.subr.mxu0 0.0
  %1041 = vmatpush1.msra.mxu0 %v1009
  %1042 = vmatprep.subr.mxu0 0.0
  %1043 = vmatpush1.msra.mxu0 %v1010
  %1044 = vmatprep.subr.mxu0 0.0
  %1045 = vmatpush1.msra.mxu0 %v1011
  %1046 = vmatprep.subr.mxu0 0.0
  %1047 = vmatpush1.msra.mxu0 %v1012
  %1048 = vmatprep.subr.mxu0 0.0
  %1049 = vmatpush1.msra.mxu0 %v1013
  %1050 = vmatprep.subr.mxu0 0.0
  %1051 = vmatpush1.msra.mxu0 %v1014
  %1052 = vmatprep.subr.mxu0 0.0
  %1053 = vmatpush1.msra.mxu0 %v1015
  %1054 = vmatprep.subr.mxu0 0.0
  %1055 = vmatpush1.msra.mxu0 %v1016
  %1056 = vmatprep.subr.mxu0 0.0
  %1057 = vmatpush1.msra.mxu0 0.0
  %1058 = vmatprep.subr.mxu0 0.0
  %1059 = vmatpush1.msra.mxu0 0.0
  %1060 = vmatprep.subr.mxu0 0.0
  %1061 = vmatpush1.msra.mxu0 0.0
  %1062 = vmatprep.subr.mxu0 0.0
  %1063 = vmatpush1.msra.mxu0 0.0
  %1064 = vmatprep.subr.mxu0 0.0
  %1065 = vmatpush1.msra.mxu0 0.0
  %1066 = vmatprep.subr.mxu0 0.0
  %1067 = vmatpush1.msra.mxu0 0.0
  %1068 = vmatprep.subr.mxu0 0.0
  %1069 = vmatpush1.msra.mxu0 0.0
  %1070 = vmatprep.subr.mxu0 0.0
  %1071 = vmatpush1.msra.mxu0 0.0
  %1072 = vmatprep.subr.mxu0 0.0
  %1073 = vmatpush1.msra.mxu0 0.0
  %1074 = vmatprep.subr.mxu0 0.0
  %1075 = vmatpush1.msra.mxu0 0.0
  %1076 = vmatprep.subr.mxu0 0.0
  %1077 = vmatpush1.msra.mxu0 0.0
  %1078 = vmatprep.subr.mxu0 0.0
  %1079 = vmatpush1.msra.mxu0 0.0
  %1080 = vmatprep.subr.mxu0 0.0
  %1081 = vmatpush1.msra.mxu0 0.0
  %1082 = vmatprep.subr.mxu0 0.0
  %1083 = vmatpush1.msra.mxu0 0.0
  %1084 = vmatprep.subr.mxu0 0.0
  %1085 = vmatpush1.msra.mxu0 0.0
  %1086 = vmatprep.subr.mxu0 0.0
  %1087 = vmatpush1.msra.mxu0 0.0
  %1088 = vmatprep.mubr.f32.mxu0 0.0
  %1089 = vmatmul.mubr.f32.gmra.mrb[0].mxu0 %v997
  %v1090 = vpop.f32.mrb[0].mxu0
  %v1091 = vadd.f32 %v1022, %v1090
  %v1092 = vpop.f32.mrb[0].mxu0
  %1093 = vmatprep.mubr.f32.mxu0 0.0
  %1094 = vmatmul.mubr.f32.gmra.mrb[0].mxu0 %v998
  %v1095 = vpop.f32.mrb[0].mxu0
  %v1096 = vadd.f32 %v1022, %v1095
  %v1097 = vpop.f32.mrb[0].mxu0
  %1098 = vmatprep.mubr.f32.mxu0 0.0
  %1099 = vmatmul.mubr.f32.gmra.mrb[0].mxu0 %v999
  %v1100 = vpop.f32.mrb[0].mxu0
  %v1101 = vadd.f32 %v1022, %v1100
  %v1102 = vpop.f32.mrb[0].mxu0
  %1103 = vmatprep.mubr.f32.mxu0 0.0
  %1104 = vmatmul.mubr.f32.gmra.mrb[0].mxu0 %v1000
  %v1105 = vpop.f32.mrb[0].mxu0
  %v1106 = vadd.f32 %v1022, %v1105
  %v1107 = vpop.f32.mrb[0].mxu0
  %1108 = vdwg.mxu0
  %vm1109 = vcmask 31744
  %1110 = vst.msk [vmem:[%s23] sm:$0xff] %vm1109, %v1091
  %1111 = vst.msk [vmem:[%s23 + $0x8] sm:$0xff] %vm1109, %v1096
  %1112 = vst.msk [vmem:[%s23 + $0x10] sm:$0xff] %vm1109, %v1101
  %1113 = vst.msk [vmem:[%s23 + $0x18] sm:$0xff] %vm1109, %v1106
  // Predicated region
  $region86: #{srnn_forward.13} parent=0 // pred_check
    _
  $region87: #{srnn_forward.13} parent=0 // pred_check_branch
    %1115 = sbr.rel (0) target = $region89
  $region88: #{srnn_forward.13} parent=0 // pred_region
    _
  $region89: #{srnn_forward.13} parent=0 // pred_fallthru
    _
  // Predicated region
  $region90: #{srnn_forward.13} parent=0 // pred_check
    _
  $region91: #{srnn_forward.13} parent=0 // pred_check_branch
    %1117 = sbr.rel (0) target = $region93
  $region92: #{srnn_forward.13} parent=0 // pred_region
    _
  $region93: #{srnn_forward.13} parent=0 // pred_fallthru
    _
  // Predicated region
  $region94: #{srnn_forward.13} parent=0 // pred_check
    _
  $region95: #{srnn_forward.13} parent=0 // pred_check_branch
    %1119 = sbr.rel (0) target = $region97
  $region96: #{srnn_forward.13} parent=0 // pred_region
    _
  $region97: #{srnn_forward.13} parent=0 // pred_fallthru
    _
  // Predicated region
  $region98: #{srnn_forward.13} parent=0 // pred_check
    _
  $region99: #{srnn_forward.13} parent=0 // pred_check_branch
    %1121 = sbr.rel (0) target = $region101
  $region100: #{srnn_forward.13} parent=0 // pred_region
    _
  $region101: #{srnn_forward.13} parent=0 // pred_fallthru
    _
  // Predicated region
  $region102: #{srnn_forward.13} parent=0 // pred_check
    _
  $region103: #{srnn_forward.13} parent=0 // pred_check_branch
    %1123 = sbr.rel (0) target = $region105
  $region104: #{srnn_forward.13} parent=0 // pred_region
    _
  $region105: #{srnn_forward.13} parent=0 // pred_fallthru
    _
  // Predicated region
  $region106: #{srnn_forward.13} parent=0 // pred_check
    _
  $region107: #{srnn_forward.13} parent=0 // pred_check_branch
    %1125 = sbr.rel (0) target = $region109
  $region108: #{srnn_forward.13} parent=0 // pred_region
    _
  $region109: #{srnn_forward.13} parent=0 // pred_fallthru
    _

</llo_original>
